<compile_context>
chip_gen: v5e
topology: v5e:2x2
jax: 0.10.0
libtpu: 0.0.40
codegen_flags: <defaults>
</compile_context>

<pallas_src>
import jax
import jax.numpy as jnp
from jax import lax
from jax.experimental import pallas as pl
from jax.experimental.pallas import tpu as pltpu


def _round_up(x, m):
    return (x + m - 1) // m * m


def _vmem_capacity_bytes():
    """Per-core VMEM capacity; conservative v7x fallback if unqueryable."""
    try:
        return int(pltpu.get_tpu_info().vmem_capacity_bytes)
    except Exception:
        return 64 * 1024 * 1024


def wic_mlp_kernel(tok1_sm, tok2_sm, len1_sm, len2_sm,        # scalar prefetch (SMEM)
                   emb_hbm,                                    # (V, E) table, HBM
                   len1_ref, len2_ref,                         # (TB, 1) int32, VMEM
                   w1a_ref, w1b_ref, b1_ref, w2_ref, b2_ref,   # resident weights
                   out_ref,                                    # (TB, 1) f32
                   stage1, stage2, sems):                      # scratch
    TB, S, E = stage1.shape
    base = pl.program_id(0) * TB

    # ---- fused embedding gather: per-token row DMA  HBM -> VMEM staging ----
    def issue_gather(tok_sm, len_sm, stage, sem):
        def per_row(b, carry):
            L = len_sm[base + b]
            off = (base + b) * S
            for s in range(S):                     # static unroll over sequence
                @pl.when(s < L)                    # skip padded positions
                def _():
                    tok = tok_sm[off + s]
                    pltpu.make_async_copy(
                        emb_hbm.at[pl.ds(tok, 1), :],      # (1, E) source row
                        stage.at[b, pl.ds(s, 1), :],       # (1, E) staging slot
                        sem,
                    ).start()
            return carry
        lax.fori_loop(0, TB, per_row, 0)

    def wait_gather(len_sm, stage, sem):
        def per_row(b, carry):
            L = len_sm[base + b]
            for s in range(S):
                @pl.when(s < L)                    # wait count == issue count
                def _():
                    pltpu.make_async_copy(
                        emb_hbm.at[pl.ds(0, 1), :],        # size-matched descriptor
                        stage.at[b, pl.ds(s, 1), :],
                        sem,
                    ).wait()
            return carry
        lax.fori_loop(0, TB, per_row, 0)

    # Issue both streams first so their DMAs overlap, then drain both.
    issue_gather(tok1_sm, len1_sm, stage1, sems.at[0])
    issue_gather(tok2_sm, len2_sm, stage2, sems.at[1])
    wait_gather(len1_sm, stage1, sems.at[0])
    wait_gather(len2_sm, stage2, sems.at[1])

    # ---- masked mean pooling (select, never multiply: skipped DMA slots may
    #      hold arbitrary stale bits, jnp.where is NaN-safe) ------------------
    l1 = len1_ref[...]                                    # (TB, 1) int32
    l2 = len2_ref[...]
    pos = lax.broadcasted_iota(jnp.int32, (TB, S, E), 1)  # full-rank: no relayout
    m1 = pos < l1[:, :, None]
    m2 = pos < l2[:, :, None]

    # Widen to f32 before VPU math (v5e has no bf16 VPU); the tile-size
    # budget in the wrapper accounts for these f32 temps.
    x1 = stage1[...].astype(jnp.float32)
    x2 = stage2[...].astype(jnp.float32)

    inv1 = 1.0 / l1.astype(jnp.float32)
    inv2 = 1.0 / l2.astype(jnp.float32)
    mean1 = jnp.sum(jnp.where(m1, x1, 0.0), axis=1) * inv1   # (TB, E)
    mean2 = jnp.sum(jnp.where(m2, x2, 0.0), axis=1) * inv2

    # fc1: pre-split weight -> two accumulating MXU matmuls (no lane concat).
    wdt = w1a_ref.dtype
    h = (jnp.dot(mean1.astype(wdt), w1a_ref[...], preferred_element_type=jnp.float32)
         + jnp.dot(mean2.astype(wdt), w1b_ref[...], preferred_element_type=jnp.float32)
         + b1_ref[...])
    h = jnp.maximum(h, 0.0)                                  # (TB, H)

    # fc2 (out_features=1): VPU multiply + lane reduction instead of N=1 matmul.
    logits = jnp.sum(h * w2_ref[...], axis=-1, keepdims=True) + b2_ref[...]
    out_ref[...] = jax.nn.sigmoid(logits)


def wic_mlp_forward(x1_tok, x2_tok, len1, len2, params, *,
                    stream_dtype=jnp.bfloat16,
                    batch_tile=None):
    """x1_tok/x2_tok: int (B, S) token ids; len1/len2: int (B,)."""
    stream_dtype = jnp.dtype(stream_dtype)
    is_bf16 = stream_dtype == jnp.dtype(jnp.bfloat16)
    # bf16 fc1 weights when streaming bf16 (MXU-native, f32 accumulate);
    # f32 everywhere on the exact-checking path.
    param_dtype = jnp.bfloat16 if is_bf16 else jnp.float32

    emb = params["embedding"].astype(stream_dtype)   # (V, E), row 0 zeroed
    w1 = params["w1"].astype(param_dtype)            # (2E, H)  (pre-transposed)
    b1 = params["b1"].astype(jnp.float32)            # (H,)
    w2 = params["w2"].astype(jnp.float32)            # (H, 1)
    b2 = params["b2"].astype(jnp.float32)            # (1,)

    V, E = emb.shape
    H = w1.shape[1]
    assert w1.shape[0] == 2 * E
    B, S = x1_tok.shape

    w1a = w1[:E]                                     # (E, H) acts on mean1
    w1b = w1[E:]                                     # (E, H) acts on mean2
    b1_2d = b1.reshape(1, H)
    w2_row = w2.reshape(1, H)
    b2_2d = b2.reshape(1, 1)

    # ---- per-generation VMEM budgeting for the batch tile -------------------
    vmem_cap = _vmem_capacity_bytes()                         # 128MiB v5e/v6e, 64MiB v7x
    vmem_limit = int(min(vmem_cap * 0.85, 100 * 1024 * 1024))
    ds = stream_dtype.itemsize
    weight_bytes = 2 * 2 * E * H * jnp.dtype(param_dtype).itemsize  # w1a/w1b, 2x buffered
    # Per padded batch row: 2 staging rows (stream dtype) + f32 widen/select
    # temps for both streams + int32 iota slack  ->  S*E*(2*ds + 20) bytes.
    per_row = S * E * (2 * ds + 20)
    if batch_tile is None:
        avail = max(vmem_limit - weight_bytes - (4 << 20), per_row * 8)
        batch_tile = max(8, min(1024, (avail // per_row) // 8 * 8))
        if B >= 16:
            # v7x megacore: guarantee >= 2 grid blocks so both TCs get work.
            half = _round_up((_round_up(B, 8) + 1) // 2, 8)
            batch_tile = min(batch_tile, half)
    tb = min(int(batch_tile), _round_up(B, 8))
    tb = max(8, tb - tb % 8)
    B_pad = _round_up(B, tb)
    grid = (B_pad // tb,)

    tok1 = jnp.asarray(x1_tok, jnp.int32)
    tok2 = jnp.asarray(x2_tok, jnp.int32)
    # Clamp lengths >= 1 (torch would produce NaN for an empty sequence).
    len1_p = jnp.maximum(jnp.asarray(len1, jnp.int32), 1)
    len2_p = jnp.maximum(jnp.asarray(len2, jnp.int32), 1)
    if B_pad != B:
        pad = B_pad - B
        tok1 = jnp.pad(tok1, ((0, pad), (0, 0)))              # token 0 -> pad row
        tok2 = jnp.pad(tok2, ((0, pad), (0, 0)))
        len1_p = jnp.pad(len1_p, (0, pad), constant_values=1)  # avoid 1/0
        len2_p = jnp.pad(len2_p, (0, pad), constant_values=1)

    tok1_flat = tok1.reshape(-1)     # 1-D in SMEM (avoids 2-D SMEM lane padding)
    tok2_flat = tok2.reshape(-1)
    len1_2d = len1_p.reshape(B_pad, 1)
    len2_2d = len2_p.reshape(B_pad, 1)

    # index_maps receive the 4 scalar-prefetch refs as trailing args.
    def tile_rows(i, t1, t2, l1, l2):
        return (i, 0)

    def const_block(i, t1, t2, l1, l2):
        return (0, 0)

    grid_spec = pltpu.PrefetchScalarGridSpec(
        num_scalar_prefetch=4,                     # tok1, tok2, len1, len2 -> SMEM
        grid=grid,
        in_specs=[
            pl.BlockSpec(memory_space=pl.ANY),     # embedding table stays in HBM
            pl.BlockSpec((tb, 1), tile_rows),      # len1 (vector form for the mask)
            pl.BlockSpec((tb, 1), tile_rows),      # len2
            pl.BlockSpec((E, H), const_block),     # w1 top half    (VMEM-resident)
            pl.BlockSpec((E, H), const_block),     # w1 bottom half (VMEM-resident)
            pl.BlockSpec((1, H), const_block),     # b1
            pl.BlockSpec((1, H), const_block),     # w2 as a row
            pl.BlockSpec((1, 1), const_block),     # b2
        ],
        out_specs=pl.BlockSpec((tb, 1), tile_rows),
        scratch_shapes=[
            pltpu.VMEM((tb, S, E), stream_dtype),  # gathered rows, stream 1
            pltpu.VMEM((tb, S, E), stream_dtype),  # gathered rows, stream 2
            pltpu.SemaphoreType.DMA((2,)),         # one DMA sem per stream
        ],
    )

    out = pl.pallas_call(
        wic_mlp_kernel,
        out_shape=jax.ShapeDtypeStruct((B_pad, 1), jnp.float32),
        grid_spec=grid_spec,
        compiler_params=pltpu.CompilerParams(
            dimension_semantics=("parallel",),     # megacore sharding on v7x
            vmem_limit_bytes=vmem_limit,
        ),
    )(tok1_flat, tok2_flat, len1_p, len2_p,        # scalar prefetch
      emb, len1_2d, len2_2d, w1a, w1b, b1_2d, w2_row, b2_2d)

    return out[:B, 0]                              # squeeze(1) -> (B,)


def reference_forward(x1_tok, x2_tok, len1, len2, params):
    emb, w1, b1, w2, b2 = (params["embedding"], params["w1"], params["b1"],
                           params["w2"], params["b2"])
    x1 = jnp.take(emb, x1_tok, axis=0)
    x2 = jnp.take(emb, x2_tok, axis=0)
    B, S, E = x1.shape
    pos = jnp.arange(S)[None, :]
    m1 = (pos < len1[:, None]).astype(jnp.float32)[:, :, None]
    m2 = (pos < len2[:, None]).astype(jnp.float32)[:, :, None]
    mean1 = (x1 * m1).sum(1) / len1[:, None].astype(jnp.float32)
    mean2 = (x2 * m2).sum(1) / len2[:, None].astype(jnp.float32)
    x = jnp.concatenate([mean1, mean2], axis=-1)
    h = jnp.maximum(x @ w1 + b1[None, :], 0.0)
    return jax.nn.sigmoid(h @ w2 + b2[None, :])[:, 0]


def make_params(key, vocab_size, embedding_size, hidden_size):
    k_emb, k_w1, k_b1, k_w2, k_b2 = jax.random.split(key, 5)
    emb = jax.random.normal(k_emb, (vocab_size, embedding_size), jnp.float32)
    emb = emb.at[0].set(0.0)   # padding_idx=0 -> zero row
    lim1 = 1.0 / jnp.sqrt(2.0 * embedding_size)
    w1 = jax.random.uniform(k_w1, (2 * embedding_size, hidden_size),
                            jnp.float32, -lim1, lim1)
    b1 = jax.random.uniform(k_b1, (hidden_size,), jnp.float32, -lim1, lim1)
    lim2 = 1.0 / jnp.sqrt(float(hidden_size))
    w2 = jax.random.uniform(k_w2, (hidden_size, 1), jnp.float32, -lim2, lim2)
    b2 = jax.random.uniform(k_b2, (1,), jnp.float32, -lim2, lim2)
    return {"embedding": emb, "w1": w1, "b1": b1, "w2": w2, "b2": b2}


def _make_inputs(key, B, S, V):
    k_x1, k_x2, k_l1, k_l2 = jax.random.split(key, 4)
    x1_tok = jax.random.randint(k_x1, (B, S), 0, V, dtype=jnp.int32)
    x2_tok = jax.random.randint(k_x2, (B, S), 0, V, dtype=jnp.int32)
    len1 = jax.random.randint(k_l1, (B,), 1, S + 1, dtype=jnp.int32)
    len2 = jax.random.randint(k_l2, (B,), 1, S + 1, dtype=jnp.int32)
    return x1_tok, x2_tok, len1, len2


if __name__ == "__main__":
    key = jax.random.PRNGKey(0)
    k_small, k_big = jax.random.split(key, 2)

    # --- small config (tiny shapes consistent with the module) -------------
    B, S, V, E, H = 2, 8, 16, 128, 32
    k_p, k_in = jax.random.split(k_small, 2)
    params = make_params(k_p, V, E, H)
    x1_tok, x2_tok, len1, len2 = _make_inputs(k_in, B, S, V)
    ref = reference_forward(x1_tok, x2_tok, len1, len2, params)

    # bit-tight f32 path: checks the fused DMA gather + pooling + MLP exactly
    out_f32 = wic_mlp_forward(x1_tok, x2_tok, len1, len2, params,
                              stream_dtype=jnp.float32)
    jax.block_until_ready(out_f32)
    assert out_f32.shape == (B,)
    assert jnp.allclose(out_f32, ref, atol=1e-5, rtol=1e-5), (out_f32, ref)

    # default path: bf16 table/stream + bf16 fc1 weights (f32 accumulation)
    out_bf16 = wic_mlp_forward(x1_tok, x2_tok, len1, len2, params)
    jax.block_until_ready(out_bf16)
    assert jnp.allclose(out_bf16, ref, atol=3e-2), (out_bf16, ref)

    # --- multi-block config: batch padding, grid > 1, resident weights -----
    B2, S2, V2, E2, H2 = 20, 16, 64, 256, 64
    k_p2, k_in2 = jax.random.split(k_big, 2)
    params2 = make_params(k_p2, V2, E2, H2)
    x1b, x2b, l1b, l2b = _make_inputs(k_in2, B2, S2, V2)
    ref2 = reference_forward(x1b, x2b, l1b, l2b, params2)

    # explicit small tile -> 3 grid steps, exercises per-tile gather offsets
    out2 = wic_mlp_forward(x1b, x2b, l1b, l2b, params2,
                           stream_dtype=jnp.float32, batch_tile=8)
    jax.block_until_ready(out2)
    assert out2.shape == (B2,)
    assert jnp.allclose(out2, ref2, atol=1e-4, rtol=1e-4), (out2, ref2)

    # auto-tiled default (bf16) path: exercises the >=2-grid-block guarantee
    # and batch padding on the same data
    out3 = wic_mlp_forward(x1b, x2b, l1b, l2b, params2)
    jax.block_until_ready(out3)
    assert jnp.allclose(out3, ref2, atol=3e-2), (out3, ref2)

    print("KERNEL_OK")
</pallas_src>

<mosaic_0001>
module attributes {stable_mosaic.version = 11 : i64} {
  func.func @wic_mlp_kernel(%arg0: i32, %arg1: memref<64xi32, #tpu.memory_space<smem>>, %arg2: memref<64xi32, #tpu.memory_space<smem>>, %arg3: memref<8xi32, #tpu.memory_space<smem>>, %arg4: memref<8xi32, #tpu.memory_space<smem>>, %arg5: memref<16x128xf32, #tpu.memory_space<any>>, %arg6: memref<8x1xi32, #tpu.memory_space<vmem>>, %arg7: memref<8x1xi32, #tpu.memory_space<vmem>>, %arg8: memref<128x32xf32, #tpu.memory_space<vmem>>, %arg9: memref<128x32xf32, #tpu.memory_space<vmem>>, %arg10: memref<1x32xf32, #tpu.memory_space<vmem>>, %arg11: memref<1x32xf32, #tpu.memory_space<vmem>>, %arg12: memref<1x1xf32, #tpu.memory_space<vmem>>, %arg13: memref<8x1xf32, #tpu.memory_space<vmem>>, %arg14: memref<8x8x128xf32, #tpu.memory_space<vmem>>, %arg15: memref<8x8x128xf32, #tpu.memory_space<vmem>>, %arg16: memref<2x!tpu.dma_semaphore, #tpu.memory_space<semaphore_mem>>) attributes {dimension_semantics = [#tpu.dimension_semantics<parallel>], iteration_bounds = array<i64: 1>, scalar_prefetch = 4 : i64, scratch_operands = 3 : i64, tpu.core_type = #tpu.core_type<tc>, window_params = [{}, {transform_indices = @transform_1, window_bounds = array<i64: 8, 1>}, {transform_indices = @transform_2, window_bounds = array<i64: 8, 1>}, {pipeline_mode = #tpu.pipeline_mode<synchronous>, transform_indices = @transform_3, window_bounds = array<i64: 128, 32>}, {pipeline_mode = #tpu.pipeline_mode<synchronous>, transform_indices = @transform_4, window_bounds = array<i64: 128, 32>}, {pipeline_mode = #tpu.pipeline_mode<synchronous>, transform_indices = @transform_5, window_bounds = array<i64: 1, 32>}, {pipeline_mode = #tpu.pipeline_mode<synchronous>, transform_indices = @transform_6, window_bounds = array<i64: 1, 32>}, {pipeline_mode = #tpu.pipeline_mode<synchronous>, transform_indices = @transform_7, window_bounds = array<i64: 1, 1>}, {transform_indices = @transform_8, window_bounds = array<i64: 8, 1>}]} {
    %c8_i32 = arith.constant 8 : i32
    %0 = arith.muli %arg0, %c8_i32 : i32
    %c0_i32 = arith.constant 0 : i32
    %c0_i32_0 = arith.constant 0 : i32
    %c8_i32_1 = arith.constant 8 : i32
    %1 = arith.addi %c0_i32_0, %c8_i32_1 : i32
    %c1_i32 = arith.constant 1 : i32
    scf.for %arg17 = %c0_i32_0 to %1 step %c1_i32  : i32 {
      %56 = arith.addi %0, %arg17 : i32
      %57 = arith.index_cast %56 : i32 to index
      %58 = memref.load %arg3[%57] : memref<8xi32, #tpu.memory_space<smem>>
      %59 = arith.addi %0, %arg17 : i32
      %c8_i32_49 = arith.constant 8 : i32
      %60 = arith.muli %59, %c8_i32_49 : i32
      %c0_i32_50 = arith.constant 0 : i32
      %61 = arith.cmpi sgt, %58, %c0_i32_50 : i32
      %62 = arith.extui %61 : i1 to i32
      %c0_i32_51 = arith.constant 0 : i32
      %63 = arith.cmpi ne, %62, %c0_i32_51 : i32
      scf.if %63 {
        %c0_i32_60 = arith.constant 0 : i32
        %85 = arith.addi %60, %c0_i32_60 : i32
        %86 = arith.index_cast %85 : i32 to index
        %87 = memref.load %arg1[%86] : memref<64xi32, #tpu.memory_space<smem>>
        %c0_i32_61 = arith.constant 0 : i32
        %88 = tpu.memref_slice %arg5[%87, %c0_i32_61] : memref<16x128xf32, #tpu.memory_space<any>> -> memref<1x128xf32, #tpu.memory_space<any>>
        %c0_i32_62 = arith.constant 0 : i32
        %c0_i32_63 = arith.constant 0 : i32
        %89 = tpu.memref_slice %arg14[%arg17, %c0_i32_62, %c0_i32_63] : memref<8x8x128xf32, #tpu.memory_space<vmem>> -> memref<1x1x128xf32, #tpu.memory_space<vmem>>
        %90 = tpu.memref_squeeze %89 : memref<1x1x128xf32, #tpu.memory_space<vmem>> -> memref<1x128xf32, #tpu.memory_space<vmem>>
        %91 = tpu.memref_slice %arg16[%c0_i32] : memref<2x!tpu.dma_semaphore, #tpu.memory_space<semaphore_mem>> -> memref<1x!tpu.dma_semaphore, #tpu.memory_space<semaphore_mem>>
        %92 = tpu.memref_squeeze %91 : memref<1x!tpu.dma_semaphore, #tpu.memory_space<semaphore_mem>> -> memref<!tpu.dma_semaphore, #tpu.memory_space<semaphore_mem>>
        tpu.enqueue_dma source(%88 : memref<1x128xf32, #tpu.memory_space<any>>) target(%90 : memref<1x128xf32, #tpu.memory_space<vmem>>) target_semaphore(%92 : memref<!tpu.dma_semaphore, #tpu.memory_space<semaphore_mem>>)
      } else {
      }
      %c1_i32_52 = arith.constant 1 : i32
      %64 = arith.cmpi sgt, %58, %c1_i32_52 : i32
      %65 = arith.extui %64 : i1 to i32
      %c0_i32_53 = arith.constant 0 : i32
      %66 = arith.cmpi ne, %65, %c0_i32_53 : i32
      scf.if %66 {
        %c1_i32_60 = arith.constant 1 : i32
        %85 = arith.addi %60, %c1_i32_60 : i32
        %86 = arith.index_cast %85 : i32 to index
        %87 = memref.load %arg1[%86] : memref<64xi32, #tpu.memory_space<smem>>
        %c0_i32_61 = arith.constant 0 : i32
        %88 = tpu.memref_slice %arg5[%87, %c0_i32_61] : memref<16x128xf32, #tpu.memory_space<any>> -> memref<1x128xf32, #tpu.memory_space<any>>
        %c1_i32_62 = arith.constant 1 : i32
        %c0_i32_63 = arith.constant 0 : i32
        %89 = tpu.memref_slice %arg14[%arg17, %c1_i32_62, %c0_i32_63] : memref<8x8x128xf32, #tpu.memory_space<vmem>> -> memref<1x1x128xf32, #tpu.memory_space<vmem>>
        %90 = tpu.memref_squeeze %89 : memref<1x1x128xf32, #tpu.memory_space<vmem>> -> memref<1x128xf32, #tpu.memory_space<vmem>>
        %91 = tpu.memref_slice %arg16[%c0_i32] : memref<2x!tpu.dma_semaphore, #tpu.memory_space<semaphore_mem>> -> memref<1x!tpu.dma_semaphore, #tpu.memory_space<semaphore_mem>>
        %92 = tpu.memref_squeeze %91 : memref<1x!tpu.dma_semaphore, #tpu.memory_space<semaphore_mem>> -> memref<!tpu.dma_semaphore, #tpu.memory_space<semaphore_mem>>
        tpu.enqueue_dma source(%88 : memref<1x128xf32, #tpu.memory_space<any>>) target(%90 : memref<1x128xf32, #tpu.memory_space<vmem>>) target_semaphore(%92 : memref<!tpu.dma_semaphore, #tpu.memory_space<semaphore_mem>>)
      } else {
      }
      %c2_i32 = arith.constant 2 : i32
      %67 = arith.cmpi sgt, %58, %c2_i32 : i32
      %68 = arith.extui %67 : i1 to i32
      %c0_i32_54 = arith.constant 0 : i32
      %69 = arith.cmpi ne, %68, %c0_i32_54 : i32
      scf.if %69 {
        %c2_i32_60 = arith.constant 2 : i32
        %85 = arith.addi %60, %c2_i32_60 : i32
        %86 = arith.index_cast %85 : i32 to index
        %87 = memref.load %arg1[%86] : memref<64xi32, #tpu.memory_space<smem>>
        %c0_i32_61 = arith.constant 0 : i32
        %88 = tpu.memref_slice %arg5[%87, %c0_i32_61] : memref<16x128xf32, #tpu.memory_space<any>> -> memref<1x128xf32, #tpu.memory_space<any>>
        %c2_i32_62 = arith.constant 2 : i32
        %c0_i32_63 = arith.constant 0 : i32
        %89 = tpu.memref_slice %arg14[%arg17, %c2_i32_62, %c0_i32_63] : memref<8x8x128xf32, #tpu.memory_space<vmem>> -> memref<1x1x128xf32, #tpu.memory_space<vmem>>
        %90 = tpu.memref_squeeze %89 : memref<1x1x128xf32, #tpu.memory_space<vmem>> -> memref<1x128xf32, #tpu.memory_space<vmem>>
        %91 = tpu.memref_slice %arg16[%c0_i32] : memref<2x!tpu.dma_semaphore, #tpu.memory_space<semaphore_mem>> -> memref<1x!tpu.dma_semaphore, #tpu.memory_space<semaphore_mem>>
        %92 = tpu.memref_squeeze %91 : memref<1x!tpu.dma_semaphore, #tpu.memory_space<semaphore_mem>> -> memref<!tpu.dma_semaphore, #tpu.memory_space<semaphore_mem>>
        tpu.enqueue_dma source(%88 : memref<1x128xf32, #tpu.memory_space<any>>) target(%90 : memref<1x128xf32, #tpu.memory_space<vmem>>) target_semaphore(%92 : memref<!tpu.dma_semaphore, #tpu.memory_space<semaphore_mem>>)
      } else {
      }
      %c3_i32 = arith.constant 3 : i32
      %70 = arith.cmpi sgt, %58, %c3_i32 : i32
      %71 = arith.extui %70 : i1 to i32
      %c0_i32_55 = arith.constant 0 : i32
      %72 = arith.cmpi ne, %71, %c0_i32_55 : i32
      scf.if %72 {
        %c3_i32_60 = arith.constant 3 : i32
        %85 = arith.addi %60, %c3_i32_60 : i32
        %86 = arith.index_cast %85 : i32 to index
        %87 = memref.load %arg1[%86] : memref<64xi32, #tpu.memory_space<smem>>
        %c0_i32_61 = arith.constant 0 : i32
        %88 = tpu.memref_slice %arg5[%87, %c0_i32_61] : memref<16x128xf32, #tpu.memory_space<any>> -> memref<1x128xf32, #tpu.memory_space<any>>
        %c3_i32_62 = arith.constant 3 : i32
        %c0_i32_63 = arith.constant 0 : i32
        %89 = tpu.memref_slice %arg14[%arg17, %c3_i32_62, %c0_i32_63] : memref<8x8x128xf32, #tpu.memory_space<vmem>> -> memref<1x1x128xf32, #tpu.memory_space<vmem>>
        %90 = tpu.memref_squeeze %89 : memref<1x1x128xf32, #tpu.memory_space<vmem>> -> memref<1x128xf32, #tpu.memory_space<vmem>>
        %91 = tpu.memref_slice %arg16[%c0_i32] : memref<2x!tpu.dma_semaphore, #tpu.memory_space<semaphore_mem>> -> memref<1x!tpu.dma_semaphore, #tpu.memory_space<semaphore_mem>>
        %92 = tpu.memref_squeeze %91 : memref<1x!tpu.dma_semaphore, #tpu.memory_space<semaphore_mem>> -> memref<!tpu.dma_semaphore, #tpu.memory_space<semaphore_mem>>
        tpu.enqueue_dma source(%88 : memref<1x128xf32, #tpu.memory_space<any>>) target(%90 : memref<1x128xf32, #tpu.memory_space<vmem>>) target_semaphore(%92 : memref<!tpu.dma_semaphore, #tpu.memory_space<semaphore_mem>>)
      } else {
      }
      %c4_i32 = arith.constant 4 : i32
      %73 = arith.cmpi sgt, %58, %c4_i32 : i32
      %74 = arith.extui %73 : i1 to i32
      %c0_i32_56 = arith.constant 0 : i32
      %75 = arith.cmpi ne, %74, %c0_i32_56 : i32
      scf.if %75 {
        %c4_i32_60 = arith.constant 4 : i32
        %85 = arith.addi %60, %c4_i32_60 : i32
        %86 = arith.index_cast %85 : i32 to index
        %87 = memref.load %arg1[%86] : memref<64xi32, #tpu.memory_space<smem>>
        %c0_i32_61 = arith.constant 0 : i32
        %88 = tpu.memref_slice %arg5[%87, %c0_i32_61] : memref<16x128xf32, #tpu.memory_space<any>> -> memref<1x128xf32, #tpu.memory_space<any>>
        %c4_i32_62 = arith.constant 4 : i32
        %c0_i32_63 = arith.constant 0 : i32
        %89 = tpu.memref_slice %arg14[%arg17, %c4_i32_62, %c0_i32_63] : memref<8x8x128xf32, #tpu.memory_space<vmem>> -> memref<1x1x128xf32, #tpu.memory_space<vmem>>
        %90 = tpu.memref_squeeze %89 : memref<1x1x128xf32, #tpu.memory_space<vmem>> -> memref<1x128xf32, #tpu.memory_space<vmem>>
        %91 = tpu.memref_slice %arg16[%c0_i32] : memref<2x!tpu.dma_semaphore, #tpu.memory_space<semaphore_mem>> -> memref<1x!tpu.dma_semaphore, #tpu.memory_space<semaphore_mem>>
        %92 = tpu.memref_squeeze %91 : memref<1x!tpu.dma_semaphore, #tpu.memory_space<semaphore_mem>> -> memref<!tpu.dma_semaphore, #tpu.memory_space<semaphore_mem>>
        tpu.enqueue_dma source(%88 : memref<1x128xf32, #tpu.memory_space<any>>) target(%90 : memref<1x128xf32, #tpu.memory_space<vmem>>) target_semaphore(%92 : memref<!tpu.dma_semaphore, #tpu.memory_space<semaphore_mem>>)
      } else {
      }
      %c5_i32 = arith.constant 5 : i32
      %76 = arith.cmpi sgt, %58, %c5_i32 : i32
      %77 = arith.extui %76 : i1 to i32
      %c0_i32_57 = arith.constant 0 : i32
      %78 = arith.cmpi ne, %77, %c0_i32_57 : i32
      scf.if %78 {
        %c5_i32_60 = arith.constant 5 : i32
        %85 = arith.addi %60, %c5_i32_60 : i32
        %86 = arith.index_cast %85 : i32 to index
        %87 = memref.load %arg1[%86] : memref<64xi32, #tpu.memory_space<smem>>
        %c0_i32_61 = arith.constant 0 : i32
        %88 = tpu.memref_slice %arg5[%87, %c0_i32_61] : memref<16x128xf32, #tpu.memory_space<any>> -> memref<1x128xf32, #tpu.memory_space<any>>
        %c5_i32_62 = arith.constant 5 : i32
        %c0_i32_63 = arith.constant 0 : i32
        %89 = tpu.memref_slice %arg14[%arg17, %c5_i32_62, %c0_i32_63] : memref<8x8x128xf32, #tpu.memory_space<vmem>> -> memref<1x1x128xf32, #tpu.memory_space<vmem>>
        %90 = tpu.memref_squeeze %89 : memref<1x1x128xf32, #tpu.memory_space<vmem>> -> memref<1x128xf32, #tpu.memory_space<vmem>>
        %91 = tpu.memref_slice %arg16[%c0_i32] : memref<2x!tpu.dma_semaphore, #tpu.memory_space<semaphore_mem>> -> memref<1x!tpu.dma_semaphore, #tpu.memory_space<semaphore_mem>>
        %92 = tpu.memref_squeeze %91 : memref<1x!tpu.dma_semaphore, #tpu.memory_space<semaphore_mem>> -> memref<!tpu.dma_semaphore, #tpu.memory_space<semaphore_mem>>
        tpu.enqueue_dma source(%88 : memref<1x128xf32, #tpu.memory_space<any>>) target(%90 : memref<1x128xf32, #tpu.memory_space<vmem>>) target_semaphore(%92 : memref<!tpu.dma_semaphore, #tpu.memory_space<semaphore_mem>>)
      } else {
      }
      %c6_i32 = arith.constant 6 : i32
      %79 = arith.cmpi sgt, %58, %c6_i32 : i32
      %80 = arith.extui %79 : i1 to i32
      %c0_i32_58 = arith.constant 0 : i32
      %81 = arith.cmpi ne, %80, %c0_i32_58 : i32
      scf.if %81 {
        %c6_i32_60 = arith.constant 6 : i32
        %85 = arith.addi %60, %c6_i32_60 : i32
        %86 = arith.index_cast %85 : i32 to index
        %87 = memref.load %arg1[%86] : memref<64xi32, #tpu.memory_space<smem>>
        %c0_i32_61 = arith.constant 0 : i32
        %88 = tpu.memref_slice %arg5[%87, %c0_i32_61] : memref<16x128xf32, #tpu.memory_space<any>> -> memref<1x128xf32, #tpu.memory_space<any>>
        %c6_i32_62 = arith.constant 6 : i32
        %c0_i32_63 = arith.constant 0 : i32
        %89 = tpu.memref_slice %arg14[%arg17, %c6_i32_62, %c0_i32_63] : memref<8x8x128xf32, #tpu.memory_space<vmem>> -> memref<1x1x128xf32, #tpu.memory_space<vmem>>
        %90 = tpu.memref_squeeze %89 : memref<1x1x128xf32, #tpu.memory_space<vmem>> -> memref<1x128xf32, #tpu.memory_space<vmem>>
        %91 = tpu.memref_slice %arg16[%c0_i32] : memref<2x!tpu.dma_semaphore, #tpu.memory_space<semaphore_mem>> -> memref<1x!tpu.dma_semaphore, #tpu.memory_space<semaphore_mem>>
        %92 = tpu.memref_squeeze %91 : memref<1x!tpu.dma_semaphore, #tpu.memory_space<semaphore_mem>> -> memref<!tpu.dma_semaphore, #tpu.memory_space<semaphore_mem>>
        tpu.enqueue_dma source(%88 : memref<1x128xf32, #tpu.memory_space<any>>) target(%90 : memref<1x128xf32, #tpu.memory_space<vmem>>) target_semaphore(%92 : memref<!tpu.dma_semaphore, #tpu.memory_space<semaphore_mem>>)
      } else {
      }
      %c7_i32 = arith.constant 7 : i32
      %82 = arith.cmpi sgt, %58, %c7_i32 : i32
      %83 = arith.extui %82 : i1 to i32
      %c0_i32_59 = arith.constant 0 : i32
      %84 = arith.cmpi ne, %83, %c0_i32_59 : i32
      scf.if %84 {
        %c7_i32_60 = arith.constant 7 : i32
        %85 = arith.addi %60, %c7_i32_60 : i32
        %86 = arith.index_cast %85 : i32 to index
        %87 = memref.load %arg1[%86] : memref<64xi32, #tpu.memory_space<smem>>
        %c0_i32_61 = arith.constant 0 : i32
        %88 = tpu.memref_slice %arg5[%87, %c0_i32_61] : memref<16x128xf32, #tpu.memory_space<any>> -> memref<1x128xf32, #tpu.memory_space<any>>
        %c7_i32_62 = arith.constant 7 : i32
        %c0_i32_63 = arith.constant 0 : i32
        %89 = tpu.memref_slice %arg14[%arg17, %c7_i32_62, %c0_i32_63] : memref<8x8x128xf32, #tpu.memory_space<vmem>> -> memref<1x1x128xf32, #tpu.memory_space<vmem>>
        %90 = tpu.memref_squeeze %89 : memref<1x1x128xf32, #tpu.memory_space<vmem>> -> memref<1x128xf32, #tpu.memory_space<vmem>>
        %91 = tpu.memref_slice %arg16[%c0_i32] : memref<2x!tpu.dma_semaphore, #tpu.memory_space<semaphore_mem>> -> memref<1x!tpu.dma_semaphore, #tpu.memory_space<semaphore_mem>>
        %92 = tpu.memref_squeeze %91 : memref<1x!tpu.dma_semaphore, #tpu.memory_space<semaphore_mem>> -> memref<!tpu.dma_semaphore, #tpu.memory_space<semaphore_mem>>
        tpu.enqueue_dma source(%88 : memref<1x128xf32, #tpu.memory_space<any>>) target(%90 : memref<1x128xf32, #tpu.memory_space<vmem>>) target_semaphore(%92 : memref<!tpu.dma_semaphore, #tpu.memory_space<semaphore_mem>>)
      } else {
      }
    }
    %c8_i32_2 = arith.constant 8 : i32
    %c1_i32_3 = arith.constant 1 : i32
    %c0_i32_4 = arith.constant 0 : i32
    %c8_i32_5 = arith.constant 8 : i32
    %2 = arith.addi %c0_i32_4, %c8_i32_5 : i32
    %c1_i32_6 = arith.constant 1 : i32
    scf.for %arg17 = %c0_i32_4 to %2 step %c1_i32_6  : i32 {
      %56 = arith.addi %0, %arg17 : i32
      %57 = arith.index_cast %56 : i32 to index
      %58 = memref.load %arg4[%57] : memref<8xi32, #tpu.memory_space<smem>>
      %59 = arith.addi %0, %arg17 : i32
      %c8_i32_49 = arith.constant 8 : i32
      %60 = arith.muli %59, %c8_i32_49 : i32
      %c0_i32_50 = arith.constant 0 : i32
      %61 = arith.cmpi sgt, %58, %c0_i32_50 : i32
      %62 = arith.extui %61 : i1 to i32
      %c0_i32_51 = arith.constant 0 : i32
      %63 = arith.cmpi ne, %62, %c0_i32_51 : i32
      scf.if %63 {
        %c0_i32_60 = arith.constant 0 : i32
        %85 = arith.addi %60, %c0_i32_60 : i32
        %86 = arith.index_cast %85 : i32 to index
        %87 = memref.load %arg2[%86] : memref<64xi32, #tpu.memory_space<smem>>
        %c0_i32_61 = arith.constant 0 : i32
        %88 = tpu.memref_slice %arg5[%87, %c0_i32_61] : memref<16x128xf32, #tpu.memory_space<any>> -> memref<1x128xf32, #tpu.memory_space<any>>
        %c0_i32_62 = arith.constant 0 : i32
        %c0_i32_63 = arith.constant 0 : i32
        %89 = tpu.memref_slice %arg15[%arg17, %c0_i32_62, %c0_i32_63] : memref<8x8x128xf32, #tpu.memory_space<vmem>> -> memref<1x1x128xf32, #tpu.memory_space<vmem>>
        %90 = tpu.memref_squeeze %89 : memref<1x1x128xf32, #tpu.memory_space<vmem>> -> memref<1x128xf32, #tpu.memory_space<vmem>>
        %91 = tpu.memref_slice %arg16[%c1_i32_3] : memref<2x!tpu.dma_semaphore, #tpu.memory_space<semaphore_mem>> -> memref<1x!tpu.dma_semaphore, #tpu.memory_space<semaphore_mem>>
        %92 = tpu.memref_squeeze %91 : memref<1x!tpu.dma_semaphore, #tpu.memory_space<semaphore_mem>> -> memref<!tpu.dma_semaphore, #tpu.memory_space<semaphore_mem>>
        tpu.enqueue_dma source(%88 : memref<1x128xf32, #tpu.memory_space<any>>) target(%90 : memref<1x128xf32, #tpu.memory_space<vmem>>) target_semaphore(%92 : memref<!tpu.dma_semaphore, #tpu.memory_space<semaphore_mem>>)
      } else {
      }
      %c1_i32_52 = arith.constant 1 : i32
      %64 = arith.cmpi sgt, %58, %c1_i32_52 : i32
      %65 = arith.extui %64 : i1 to i32
      %c0_i32_53 = arith.constant 0 : i32
      %66 = arith.cmpi ne, %65, %c0_i32_53 : i32
      scf.if %66 {
        %c1_i32_60 = arith.constant 1 : i32
        %85 = arith.addi %60, %c1_i32_60 : i32
        %86 = arith.index_cast %85 : i32 to index
        %87 = memref.load %arg2[%86] : memref<64xi32, #tpu.memory_space<smem>>
        %c0_i32_61 = arith.constant 0 : i32
        %88 = tpu.memref_slice %arg5[%87, %c0_i32_61] : memref<16x128xf32, #tpu.memory_space<any>> -> memref<1x128xf32, #tpu.memory_space<any>>
        %c1_i32_62 = arith.constant 1 : i32
        %c0_i32_63 = arith.constant 0 : i32
        %89 = tpu.memref_slice %arg15[%arg17, %c1_i32_62, %c0_i32_63] : memref<8x8x128xf32, #tpu.memory_space<vmem>> -> memref<1x1x128xf32, #tpu.memory_space<vmem>>
        %90 = tpu.memref_squeeze %89 : memref<1x1x128xf32, #tpu.memory_space<vmem>> -> memref<1x128xf32, #tpu.memory_space<vmem>>
        %91 = tpu.memref_slice %arg16[%c1_i32_3] : memref<2x!tpu.dma_semaphore, #tpu.memory_space<semaphore_mem>> -> memref<1x!tpu.dma_semaphore, #tpu.memory_space<semaphore_mem>>
        %92 = tpu.memref_squeeze %91 : memref<1x!tpu.dma_semaphore, #tpu.memory_space<semaphore_mem>> -> memref<!tpu.dma_semaphore, #tpu.memory_space<semaphore_mem>>
        tpu.enqueue_dma source(%88 : memref<1x128xf32, #tpu.memory_space<any>>) target(%90 : memref<1x128xf32, #tpu.memory_space<vmem>>) target_semaphore(%92 : memref<!tpu.dma_semaphore, #tpu.memory_space<semaphore_mem>>)
      } else {
      }
      %c2_i32 = arith.constant 2 : i32
      %67 = arith.cmpi sgt, %58, %c2_i32 : i32
      %68 = arith.extui %67 : i1 to i32
      %c0_i32_54 = arith.constant 0 : i32
      %69 = arith.cmpi ne, %68, %c0_i32_54 : i32
      scf.if %69 {
        %c2_i32_60 = arith.constant 2 : i32
        %85 = arith.addi %60, %c2_i32_60 : i32
        %86 = arith.index_cast %85 : i32 to index
        %87 = memref.load %arg2[%86] : memref<64xi32, #tpu.memory_space<smem>>
        %c0_i32_61 = arith.constant 0 : i32
        %88 = tpu.memref_slice %arg5[%87, %c0_i32_61] : memref<16x128xf32, #tpu.memory_space<any>> -> memref<1x128xf32, #tpu.memory_space<any>>
        %c2_i32_62 = arith.constant 2 : i32
        %c0_i32_63 = arith.constant 0 : i32
        %89 = tpu.memref_slice %arg15[%arg17, %c2_i32_62, %c0_i32_63] : memref<8x8x128xf32, #tpu.memory_space<vmem>> -> memref<1x1x128xf32, #tpu.memory_space<vmem>>
        %90 = tpu.memref_squeeze %89 : memref<1x1x128xf32, #tpu.memory_space<vmem>> -> memref<1x128xf32, #tpu.memory_space<vmem>>
        %91 = tpu.memref_slice %arg16[%c1_i32_3] : memref<2x!tpu.dma_semaphore, #tpu.memory_space<semaphore_mem>> -> memref<1x!tpu.dma_semaphore, #tpu.memory_space<semaphore_mem>>
        %92 = tpu.memref_squeeze %91 : memref<1x!tpu.dma_semaphore, #tpu.memory_space<semaphore_mem>> -> memref<!tpu.dma_semaphore, #tpu.memory_space<semaphore_mem>>
        tpu.enqueue_dma source(%88 : memref<1x128xf32, #tpu.memory_space<any>>) target(%90 : memref<1x128xf32, #tpu.memory_space<vmem>>) target_semaphore(%92 : memref<!tpu.dma_semaphore, #tpu.memory_space<semaphore_mem>>)
      } else {
      }
      %c3_i32 = arith.constant 3 : i32
      %70 = arith.cmpi sgt, %58, %c3_i32 : i32
      %71 = arith.extui %70 : i1 to i32
      %c0_i32_55 = arith.constant 0 : i32
      %72 = arith.cmpi ne, %71, %c0_i32_55 : i32
      scf.if %72 {
        %c3_i32_60 = arith.constant 3 : i32
        %85 = arith.addi %60, %c3_i32_60 : i32
        %86 = arith.index_cast %85 : i32 to index
        %87 = memref.load %arg2[%86] : memref<64xi32, #tpu.memory_space<smem>>
        %c0_i32_61 = arith.constant 0 : i32
        %88 = tpu.memref_slice %arg5[%87, %c0_i32_61] : memref<16x128xf32, #tpu.memory_space<any>> -> memref<1x128xf32, #tpu.memory_space<any>>
        %c3_i32_62 = arith.constant 3 : i32
        %c0_i32_63 = arith.constant 0 : i32
        %89 = tpu.memref_slice %arg15[%arg17, %c3_i32_62, %c0_i32_63] : memref<8x8x128xf32, #tpu.memory_space<vmem>> -> memref<1x1x128xf32, #tpu.memory_space<vmem>>
        %90 = tpu.memref_squeeze %89 : memref<1x1x128xf32, #tpu.memory_space<vmem>> -> memref<1x128xf32, #tpu.memory_space<vmem>>
        %91 = tpu.memref_slice %arg16[%c1_i32_3] : memref<2x!tpu.dma_semaphore, #tpu.memory_space<semaphore_mem>> -> memref<1x!tpu.dma_semaphore, #tpu.memory_space<semaphore_mem>>
        %92 = tpu.memref_squeeze %91 : memref<1x!tpu.dma_semaphore, #tpu.memory_space<semaphore_mem>> -> memref<!tpu.dma_semaphore, #tpu.memory_space<semaphore_mem>>
        tpu.enqueue_dma source(%88 : memref<1x128xf32, #tpu.memory_space<any>>) target(%90 : memref<1x128xf32, #tpu.memory_space<vmem>>) target_semaphore(%92 : memref<!tpu.dma_semaphore, #tpu.memory_space<semaphore_mem>>)
      } else {
      }
      %c4_i32 = arith.constant 4 : i32
      %73 = arith.cmpi sgt, %58, %c4_i32 : i32
      %74 = arith.extui %73 : i1 to i32
      %c0_i32_56 = arith.constant 0 : i32
      %75 = arith.cmpi ne, %74, %c0_i32_56 : i32
      scf.if %75 {
        %c4_i32_60 = arith.constant 4 : i32
        %85 = arith.addi %60, %c4_i32_60 : i32
        %86 = arith.index_cast %85 : i32 to index
        %87 = memref.load %arg2[%86] : memref<64xi32, #tpu.memory_space<smem>>
        %c0_i32_61 = arith.constant 0 : i32
        %88 = tpu.memref_slice %arg5[%87, %c0_i32_61] : memref<16x128xf32, #tpu.memory_space<any>> -> memref<1x128xf32, #tpu.memory_space<any>>
        %c4_i32_62 = arith.constant 4 : i32
        %c0_i32_63 = arith.constant 0 : i32
        %89 = tpu.memref_slice %arg15[%arg17, %c4_i32_62, %c0_i32_63] : memref<8x8x128xf32, #tpu.memory_space<vmem>> -> memref<1x1x128xf32, #tpu.memory_space<vmem>>
        %90 = tpu.memref_squeeze %89 : memref<1x1x128xf32, #tpu.memory_space<vmem>> -> memref<1x128xf32, #tpu.memory_space<vmem>>
        %91 = tpu.memref_slice %arg16[%c1_i32_3] : memref<2x!tpu.dma_semaphore, #tpu.memory_space<semaphore_mem>> -> memref<1x!tpu.dma_semaphore, #tpu.memory_space<semaphore_mem>>
        %92 = tpu.memref_squeeze %91 : memref<1x!tpu.dma_semaphore, #tpu.memory_space<semaphore_mem>> -> memref<!tpu.dma_semaphore, #tpu.memory_space<semaphore_mem>>
        tpu.enqueue_dma source(%88 : memref<1x128xf32, #tpu.memory_space<any>>) target(%90 : memref<1x128xf32, #tpu.memory_space<vmem>>) target_semaphore(%92 : memref<!tpu.dma_semaphore, #tpu.memory_space<semaphore_mem>>)
      } else {
      }
      %c5_i32 = arith.constant 5 : i32
      %76 = arith.cmpi sgt, %58, %c5_i32 : i32
      %77 = arith.extui %76 : i1 to i32
      %c0_i32_57 = arith.constant 0 : i32
      %78 = arith.cmpi ne, %77, %c0_i32_57 : i32
      scf.if %78 {
        %c5_i32_60 = arith.constant 5 : i32
        %85 = arith.addi %60, %c5_i32_60 : i32
        %86 = arith.index_cast %85 : i32 to index
        %87 = memref.load %arg2[%86] : memref<64xi32, #tpu.memory_space<smem>>
        %c0_i32_61 = arith.constant 0 : i32
        %88 = tpu.memref_slice %arg5[%87, %c0_i32_61] : memref<16x128xf32, #tpu.memory_space<any>> -> memref<1x128xf32, #tpu.memory_space<any>>
        %c5_i32_62 = arith.constant 5 : i32
        %c0_i32_63 = arith.constant 0 : i32
        %89 = tpu.memref_slice %arg15[%arg17, %c5_i32_62, %c0_i32_63] : memref<8x8x128xf32, #tpu.memory_space<vmem>> -> memref<1x1x128xf32, #tpu.memory_space<vmem>>
        %90 = tpu.memref_squeeze %89 : memref<1x1x128xf32, #tpu.memory_space<vmem>> -> memref<1x128xf32, #tpu.memory_space<vmem>>
        %91 = tpu.memref_slice %arg16[%c1_i32_3] : memref<2x!tpu.dma_semaphore, #tpu.memory_space<semaphore_mem>> -> memref<1x!tpu.dma_semaphore, #tpu.memory_space<semaphore_mem>>
        %92 = tpu.memref_squeeze %91 : memref<1x!tpu.dma_semaphore, #tpu.memory_space<semaphore_mem>> -> memref<!tpu.dma_semaphore, #tpu.memory_space<semaphore_mem>>
        tpu.enqueue_dma source(%88 : memref<1x128xf32, #tpu.memory_space<any>>) target(%90 : memref<1x128xf32, #tpu.memory_space<vmem>>) target_semaphore(%92 : memref<!tpu.dma_semaphore, #tpu.memory_space<semaphore_mem>>)
      } else {
      }
      %c6_i32 = arith.constant 6 : i32
      %79 = arith.cmpi sgt, %58, %c6_i32 : i32
      %80 = arith.extui %79 : i1 to i32
      %c0_i32_58 = arith.constant 0 : i32
      %81 = arith.cmpi ne, %80, %c0_i32_58 : i32
      scf.if %81 {
        %c6_i32_60 = arith.constant 6 : i32
        %85 = arith.addi %60, %c6_i32_60 : i32
        %86 = arith.index_cast %85 : i32 to index
        %87 = memref.load %arg2[%86] : memref<64xi32, #tpu.memory_space<smem>>
        %c0_i32_61 = arith.constant 0 : i32
        %88 = tpu.memref_slice %arg5[%87, %c0_i32_61] : memref<16x128xf32, #tpu.memory_space<any>> -> memref<1x128xf32, #tpu.memory_space<any>>
        %c6_i32_62 = arith.constant 6 : i32
        %c0_i32_63 = arith.constant 0 : i32
        %89 = tpu.memref_slice %arg15[%arg17, %c6_i32_62, %c0_i32_63] : memref<8x8x128xf32, #tpu.memory_space<vmem>> -> memref<1x1x128xf32, #tpu.memory_space<vmem>>
        %90 = tpu.memref_squeeze %89 : memref<1x1x128xf32, #tpu.memory_space<vmem>> -> memref<1x128xf32, #tpu.memory_space<vmem>>
        %91 = tpu.memref_slice %arg16[%c1_i32_3] : memref<2x!tpu.dma_semaphore, #tpu.memory_space<semaphore_mem>> -> memref<1x!tpu.dma_semaphore, #tpu.memory_space<semaphore_mem>>
        %92 = tpu.memref_squeeze %91 : memref<1x!tpu.dma_semaphore, #tpu.memory_space<semaphore_mem>> -> memref<!tpu.dma_semaphore, #tpu.memory_space<semaphore_mem>>
        tpu.enqueue_dma source(%88 : memref<1x128xf32, #tpu.memory_space<any>>) target(%90 : memref<1x128xf32, #tpu.memory_space<vmem>>) target_semaphore(%92 : memref<!tpu.dma_semaphore, #tpu.memory_space<semaphore_mem>>)
      } else {
      }
      %c7_i32 = arith.constant 7 : i32
      %82 = arith.cmpi sgt, %58, %c7_i32 : i32
      %83 = arith.extui %82 : i1 to i32
      %c0_i32_59 = arith.constant 0 : i32
      %84 = arith.cmpi ne, %83, %c0_i32_59 : i32
      scf.if %84 {
        %c7_i32_60 = arith.constant 7 : i32
        %85 = arith.addi %60, %c7_i32_60 : i32
        %86 = arith.index_cast %85 : i32 to index
        %87 = memref.load %arg2[%86] : memref<64xi32, #tpu.memory_space<smem>>
        %c0_i32_61 = arith.constant 0 : i32
        %88 = tpu.memref_slice %arg5[%87, %c0_i32_61] : memref<16x128xf32, #tpu.memory_space<any>> -> memref<1x128xf32, #tpu.memory_space<any>>
        %c7_i32_62 = arith.constant 7 : i32
        %c0_i32_63 = arith.constant 0 : i32
        %89 = tpu.memref_slice %arg15[%arg17, %c7_i32_62, %c0_i32_63] : memref<8x8x128xf32, #tpu.memory_space<vmem>> -> memref<1x1x128xf32, #tpu.memory_space<vmem>>
        %90 = tpu.memref_squeeze %89 : memref<1x1x128xf32, #tpu.memory_space<vmem>> -> memref<1x128xf32, #tpu.memory_space<vmem>>
        %91 = tpu.memref_slice %arg16[%c1_i32_3] : memref<2x!tpu.dma_semaphore, #tpu.memory_space<semaphore_mem>> -> memref<1x!tpu.dma_semaphore, #tpu.memory_space<semaphore_mem>>
        %92 = tpu.memref_squeeze %91 : memref<1x!tpu.dma_semaphore, #tpu.memory_space<semaphore_mem>> -> memref<!tpu.dma_semaphore, #tpu.memory_space<semaphore_mem>>
        tpu.enqueue_dma source(%88 : memref<1x128xf32, #tpu.memory_space<any>>) target(%90 : memref<1x128xf32, #tpu.memory_space<vmem>>) target_semaphore(%92 : memref<!tpu.dma_semaphore, #tpu.memory_space<semaphore_mem>>)
      } else {
      }
    }
    %c8_i32_7 = arith.constant 8 : i32
    %c0_i32_8 = arith.constant 0 : i32
    %c0_i32_9 = arith.constant 0 : i32
    %c8_i32_10 = arith.constant 8 : i32
    %3 = arith.addi %c0_i32_9, %c8_i32_10 : i32
    %c1_i32_11 = arith.constant 1 : i32
    scf.for %arg17 = %c0_i32_9 to %3 step %c1_i32_11  : i32 {
      %56 = arith.addi %0, %arg17 : i32
      %57 = arith.index_cast %56 : i32 to index
      %58 = memref.load %arg3[%57] : memref<8xi32, #tpu.memory_space<smem>>
      %c0_i32_49 = arith.constant 0 : i32
      %59 = arith.cmpi sgt, %58, %c0_i32_49 : i32
      %60 = arith.extui %59 : i1 to i32
      %c0_i32_50 = arith.constant 0 : i32
      %61 = arith.cmpi ne, %60, %c0_i32_50 : i32
      scf.if %61 {
        %c0_i32_59 = arith.constant 0 : i32
        %c0_i32_60 = arith.constant 0 : i32
        %83 = tpu.memref_slice %arg5[%c0_i32_59, %c0_i32_60] : memref<16x128xf32, #tpu.memory_space<any>> -> memref<1x128xf32, #tpu.memory_space<any>>
        %c0_i32_61 = arith.constant 0 : i32
        %c0_i32_62 = arith.constant 0 : i32
        %84 = tpu.memref_slice %arg14[%arg17, %c0_i32_61, %c0_i32_62] : memref<8x8x128xf32, #tpu.memory_space<vmem>> -> memref<1x1x128xf32, #tpu.memory_space<vmem>>
        %85 = tpu.memref_squeeze %84 : memref<1x1x128xf32, #tpu.memory_space<vmem>> -> memref<1x128xf32, #tpu.memory_space<vmem>>
        %86 = tpu.memref_slice %arg16[%c0_i32_8] : memref<2x!tpu.dma_semaphore, #tpu.memory_space<semaphore_mem>> -> memref<1x!tpu.dma_semaphore, #tpu.memory_space<semaphore_mem>>
        %87 = tpu.memref_squeeze %86 : memref<1x!tpu.dma_semaphore, #tpu.memory_space<semaphore_mem>> -> memref<!tpu.dma_semaphore, #tpu.memory_space<semaphore_mem>>
        tpu.wait_dma2 semaphore(%87 : memref<!tpu.dma_semaphore, #tpu.memory_space<semaphore_mem>>) src(%83 : memref<1x128xf32, #tpu.memory_space<any>>) dst(%85 : memref<1x128xf32, #tpu.memory_space<vmem>>)
      } else {
      }
      %c1_i32_51 = arith.constant 1 : i32
      %62 = arith.cmpi sgt, %58, %c1_i32_51 : i32
      %63 = arith.extui %62 : i1 to i32
      %c0_i32_52 = arith.constant 0 : i32
      %64 = arith.cmpi ne, %63, %c0_i32_52 : i32
      scf.if %64 {
        %c0_i32_59 = arith.constant 0 : i32
        %c0_i32_60 = arith.constant 0 : i32
        %83 = tpu.memref_slice %arg5[%c0_i32_59, %c0_i32_60] : memref<16x128xf32, #tpu.memory_space<any>> -> memref<1x128xf32, #tpu.memory_space<any>>
        %c1_i32_61 = arith.constant 1 : i32
        %c0_i32_62 = arith.constant 0 : i32
        %84 = tpu.memref_slice %arg14[%arg17, %c1_i32_61, %c0_i32_62] : memref<8x8x128xf32, #tpu.memory_space<vmem>> -> memref<1x1x128xf32, #tpu.memory_space<vmem>>
        %85 = tpu.memref_squeeze %84 : memref<1x1x128xf32, #tpu.memory_space<vmem>> -> memref<1x128xf32, #tpu.memory_space<vmem>>
        %86 = tpu.memref_slice %arg16[%c0_i32_8] : memref<2x!tpu.dma_semaphore, #tpu.memory_space<semaphore_mem>> -> memref<1x!tpu.dma_semaphore, #tpu.memory_space<semaphore_mem>>
        %87 = tpu.memref_squeeze %86 : memref<1x!tpu.dma_semaphore, #tpu.memory_space<semaphore_mem>> -> memref<!tpu.dma_semaphore, #tpu.memory_space<semaphore_mem>>
        tpu.wait_dma2 semaphore(%87 : memref<!tpu.dma_semaphore, #tpu.memory_space<semaphore_mem>>) src(%83 : memref<1x128xf32, #tpu.memory_space<any>>) dst(%85 : memref<1x128xf32, #tpu.memory_space<vmem>>)
      } else {
      }
      %c2_i32 = arith.constant 2 : i32
      %65 = arith.cmpi sgt, %58, %c2_i32 : i32
      %66 = arith.extui %65 : i1 to i32
      %c0_i32_53 = arith.constant 0 : i32
      %67 = arith.cmpi ne, %66, %c0_i32_53 : i32
      scf.if %67 {
        %c0_i32_59 = arith.constant 0 : i32
        %c0_i32_60 = arith.constant 0 : i32
        %83 = tpu.memref_slice %arg5[%c0_i32_59, %c0_i32_60] : memref<16x128xf32, #tpu.memory_space<any>> -> memref<1x128xf32, #tpu.memory_space<any>>
        %c2_i32_61 = arith.constant 2 : i32
        %c0_i32_62 = arith.constant 0 : i32
        %84 = tpu.memref_slice %arg14[%arg17, %c2_i32_61, %c0_i32_62] : memref<8x8x128xf32, #tpu.memory_space<vmem>> -> memref<1x1x128xf32, #tpu.memory_space<vmem>>
        %85 = tpu.memref_squeeze %84 : memref<1x1x128xf32, #tpu.memory_space<vmem>> -> memref<1x128xf32, #tpu.memory_space<vmem>>
        %86 = tpu.memref_slice %arg16[%c0_i32_8] : memref<2x!tpu.dma_semaphore, #tpu.memory_space<semaphore_mem>> -> memref<1x!tpu.dma_semaphore, #tpu.memory_space<semaphore_mem>>
        %87 = tpu.memref_squeeze %86 : memref<1x!tpu.dma_semaphore, #tpu.memory_space<semaphore_mem>> -> memref<!tpu.dma_semaphore, #tpu.memory_space<semaphore_mem>>
        tpu.wait_dma2 semaphore(%87 : memref<!tpu.dma_semaphore, #tpu.memory_space<semaphore_mem>>) src(%83 : memref<1x128xf32, #tpu.memory_space<any>>) dst(%85 : memref<1x128xf32, #tpu.memory_space<vmem>>)
      } else {
      }
      %c3_i32 = arith.constant 3 : i32
      %68 = arith.cmpi sgt, %58, %c3_i32 : i32
      %69 = arith.extui %68 : i1 to i32
      %c0_i32_54 = arith.constant 0 : i32
      %70 = arith.cmpi ne, %69, %c0_i32_54 : i32
      scf.if %70 {
        %c0_i32_59 = arith.constant 0 : i32
        %c0_i32_60 = arith.constant 0 : i32
        %83 = tpu.memref_slice %arg5[%c0_i32_59, %c0_i32_60] : memref<16x128xf32, #tpu.memory_space<any>> -> memref<1x128xf32, #tpu.memory_space<any>>
        %c3_i32_61 = arith.constant 3 : i32
        %c0_i32_62 = arith.constant 0 : i32
        %84 = tpu.memref_slice %arg14[%arg17, %c3_i32_61, %c0_i32_62] : memref<8x8x128xf32, #tpu.memory_space<vmem>> -> memref<1x1x128xf32, #tpu.memory_space<vmem>>
        %85 = tpu.memref_squeeze %84 : memref<1x1x128xf32, #tpu.memory_space<vmem>> -> memref<1x128xf32, #tpu.memory_space<vmem>>
        %86 = tpu.memref_slice %arg16[%c0_i32_8] : memref<2x!tpu.dma_semaphore, #tpu.memory_space<semaphore_mem>> -> memref<1x!tpu.dma_semaphore, #tpu.memory_space<semaphore_mem>>
        %87 = tpu.memref_squeeze %86 : memref<1x!tpu.dma_semaphore, #tpu.memory_space<semaphore_mem>> -> memref<!tpu.dma_semaphore, #tpu.memory_space<semaphore_mem>>
        tpu.wait_dma2 semaphore(%87 : memref<!tpu.dma_semaphore, #tpu.memory_space<semaphore_mem>>) src(%83 : memref<1x128xf32, #tpu.memory_space<any>>) dst(%85 : memref<1x128xf32, #tpu.memory_space<vmem>>)
      } else {
      }
      %c4_i32 = arith.constant 4 : i32
      %71 = arith.cmpi sgt, %58, %c4_i32 : i32
      %72 = arith.extui %71 : i1 to i32
      %c0_i32_55 = arith.constant 0 : i32
      %73 = arith.cmpi ne, %72, %c0_i32_55 : i32
      scf.if %73 {
        %c0_i32_59 = arith.constant 0 : i32
        %c0_i32_60 = arith.constant 0 : i32
        %83 = tpu.memref_slice %arg5[%c0_i32_59, %c0_i32_60] : memref<16x128xf32, #tpu.memory_space<any>> -> memref<1x128xf32, #tpu.memory_space<any>>
        %c4_i32_61 = arith.constant 4 : i32
        %c0_i32_62 = arith.constant 0 : i32
        %84 = tpu.memref_slice %arg14[%arg17, %c4_i32_61, %c0_i32_62] : memref<8x8x128xf32, #tpu.memory_space<vmem>> -> memref<1x1x128xf32, #tpu.memory_space<vmem>>
        %85 = tpu.memref_squeeze %84 : memref<1x1x128xf32, #tpu.memory_space<vmem>> -> memref<1x128xf32, #tpu.memory_space<vmem>>
        %86 = tpu.memref_slice %arg16[%c0_i32_8] : memref<2x!tpu.dma_semaphore, #tpu.memory_space<semaphore_mem>> -> memref<1x!tpu.dma_semaphore, #tpu.memory_space<semaphore_mem>>
        %87 = tpu.memref_squeeze %86 : memref<1x!tpu.dma_semaphore, #tpu.memory_space<semaphore_mem>> -> memref<!tpu.dma_semaphore, #tpu.memory_space<semaphore_mem>>
        tpu.wait_dma2 semaphore(%87 : memref<!tpu.dma_semaphore, #tpu.memory_space<semaphore_mem>>) src(%83 : memref<1x128xf32, #tpu.memory_space<any>>) dst(%85 : memref<1x128xf32, #tpu.memory_space<vmem>>)
      } else {
      }
      %c5_i32 = arith.constant 5 : i32
      %74 = arith.cmpi sgt, %58, %c5_i32 : i32
      %75 = arith.extui %74 : i1 to i32
      %c0_i32_56 = arith.constant 0 : i32
      %76 = arith.cmpi ne, %75, %c0_i32_56 : i32
      scf.if %76 {
        %c0_i32_59 = arith.constant 0 : i32
        %c0_i32_60 = arith.constant 0 : i32
        %83 = tpu.memref_slice %arg5[%c0_i32_59, %c0_i32_60] : memref<16x128xf32, #tpu.memory_space<any>> -> memref<1x128xf32, #tpu.memory_space<any>>
        %c5_i32_61 = arith.constant 5 : i32
        %c0_i32_62 = arith.constant 0 : i32
        %84 = tpu.memref_slice %arg14[%arg17, %c5_i32_61, %c0_i32_62] : memref<8x8x128xf32, #tpu.memory_space<vmem>> -> memref<1x1x128xf32, #tpu.memory_space<vmem>>
        %85 = tpu.memref_squeeze %84 : memref<1x1x128xf32, #tpu.memory_space<vmem>> -> memref<1x128xf32, #tpu.memory_space<vmem>>
        %86 = tpu.memref_slice %arg16[%c0_i32_8] : memref<2x!tpu.dma_semaphore, #tpu.memory_space<semaphore_mem>> -> memref<1x!tpu.dma_semaphore, #tpu.memory_space<semaphore_mem>>
        %87 = tpu.memref_squeeze %86 : memref<1x!tpu.dma_semaphore, #tpu.memory_space<semaphore_mem>> -> memref<!tpu.dma_semaphore, #tpu.memory_space<semaphore_mem>>
        tpu.wait_dma2 semaphore(%87 : memref<!tpu.dma_semaphore, #tpu.memory_space<semaphore_mem>>) src(%83 : memref<1x128xf32, #tpu.memory_space<any>>) dst(%85 : memref<1x128xf32, #tpu.memory_space<vmem>>)
      } else {
      }
      %c6_i32 = arith.constant 6 : i32
      %77 = arith.cmpi sgt, %58, %c6_i32 : i32
      %78 = arith.extui %77 : i1 to i32
      %c0_i32_57 = arith.constant 0 : i32
      %79 = arith.cmpi ne, %78, %c0_i32_57 : i32
      scf.if %79 {
        %c0_i32_59 = arith.constant 0 : i32
        %c0_i32_60 = arith.constant 0 : i32
        %83 = tpu.memref_slice %arg5[%c0_i32_59, %c0_i32_60] : memref<16x128xf32, #tpu.memory_space<any>> -> memref<1x128xf32, #tpu.memory_space<any>>
        %c6_i32_61 = arith.constant 6 : i32
        %c0_i32_62 = arith.constant 0 : i32
        %84 = tpu.memref_slice %arg14[%arg17, %c6_i32_61, %c0_i32_62] : memref<8x8x128xf32, #tpu.memory_space<vmem>> -> memref<1x1x128xf32, #tpu.memory_space<vmem>>
        %85 = tpu.memref_squeeze %84 : memref<1x1x128xf32, #tpu.memory_space<vmem>> -> memref<1x128xf32, #tpu.memory_space<vmem>>
        %86 = tpu.memref_slice %arg16[%c0_i32_8] : memref<2x!tpu.dma_semaphore, #tpu.memory_space<semaphore_mem>> -> memref<1x!tpu.dma_semaphore, #tpu.memory_space<semaphore_mem>>
        %87 = tpu.memref_squeeze %86 : memref<1x!tpu.dma_semaphore, #tpu.memory_space<semaphore_mem>> -> memref<!tpu.dma_semaphore, #tpu.memory_space<semaphore_mem>>
        tpu.wait_dma2 semaphore(%87 : memref<!tpu.dma_semaphore, #tpu.memory_space<semaphore_mem>>) src(%83 : memref<1x128xf32, #tpu.memory_space<any>>) dst(%85 : memref<1x128xf32, #tpu.memory_space<vmem>>)
      } else {
      }
      %c7_i32 = arith.constant 7 : i32
      %80 = arith.cmpi sgt, %58, %c7_i32 : i32
      %81 = arith.extui %80 : i1 to i32
      %c0_i32_58 = arith.constant 0 : i32
      %82 = arith.cmpi ne, %81, %c0_i32_58 : i32
      scf.if %82 {
        %c0_i32_59 = arith.constant 0 : i32
        %c0_i32_60 = arith.constant 0 : i32
        %83 = tpu.memref_slice %arg5[%c0_i32_59, %c0_i32_60] : memref<16x128xf32, #tpu.memory_space<any>> -> memref<1x128xf32, #tpu.memory_space<any>>
        %c7_i32_61 = arith.constant 7 : i32
        %c0_i32_62 = arith.constant 0 : i32
        %84 = tpu.memref_slice %arg14[%arg17, %c7_i32_61, %c0_i32_62] : memref<8x8x128xf32, #tpu.memory_space<vmem>> -> memref<1x1x128xf32, #tpu.memory_space<vmem>>
        %85 = tpu.memref_squeeze %84 : memref<1x1x128xf32, #tpu.memory_space<vmem>> -> memref<1x128xf32, #tpu.memory_space<vmem>>
        %86 = tpu.memref_slice %arg16[%c0_i32_8] : memref<2x!tpu.dma_semaphore, #tpu.memory_space<semaphore_mem>> -> memref<1x!tpu.dma_semaphore, #tpu.memory_space<semaphore_mem>>
        %87 = tpu.memref_squeeze %86 : memref<1x!tpu.dma_semaphore, #tpu.memory_space<semaphore_mem>> -> memref<!tpu.dma_semaphore, #tpu.memory_space<semaphore_mem>>
        tpu.wait_dma2 semaphore(%87 : memref<!tpu.dma_semaphore, #tpu.memory_space<semaphore_mem>>) src(%83 : memref<1x128xf32, #tpu.memory_space<any>>) dst(%85 : memref<1x128xf32, #tpu.memory_space<vmem>>)
      } else {
      }
    }
    %c8_i32_12 = arith.constant 8 : i32
    %c1_i32_13 = arith.constant 1 : i32
    %c0_i32_14 = arith.constant 0 : i32
    %c8_i32_15 = arith.constant 8 : i32
    %4 = arith.addi %c0_i32_14, %c8_i32_15 : i32
    %c1_i32_16 = arith.constant 1 : i32
    scf.for %arg17 = %c0_i32_14 to %4 step %c1_i32_16  : i32 {
      %56 = arith.addi %0, %arg17 : i32
      %57 = arith.index_cast %56 : i32 to index
      %58 = memref.load %arg4[%57] : memref<8xi32, #tpu.memory_space<smem>>
      %c0_i32_49 = arith.constant 0 : i32
      %59 = arith.cmpi sgt, %58, %c0_i32_49 : i32
      %60 = arith.extui %59 : i1 to i32
      %c0_i32_50 = arith.constant 0 : i32
      %61 = arith.cmpi ne, %60, %c0_i32_50 : i32
      scf.if %61 {
        %c0_i32_59 = arith.constant 0 : i32
        %c0_i32_60 = arith.constant 0 : i32
        %83 = tpu.memref_slice %arg5[%c0_i32_59, %c0_i32_60] : memref<16x128xf32, #tpu.memory_space<any>> -> memref<1x128xf32, #tpu.memory_space<any>>
        %c0_i32_61 = arith.constant 0 : i32
        %c0_i32_62 = arith.constant 0 : i32
        %84 = tpu.memref_slice %arg15[%arg17, %c0_i32_61, %c0_i32_62] : memref<8x8x128xf32, #tpu.memory_space<vmem>> -> memref<1x1x128xf32, #tpu.memory_space<vmem>>
        %85 = tpu.memref_squeeze %84 : memref<1x1x128xf32, #tpu.memory_space<vmem>> -> memref<1x128xf32, #tpu.memory_space<vmem>>
        %86 = tpu.memref_slice %arg16[%c1_i32_13] : memref<2x!tpu.dma_semaphore, #tpu.memory_space<semaphore_mem>> -> memref<1x!tpu.dma_semaphore, #tpu.memory_space<semaphore_mem>>
        %87 = tpu.memref_squeeze %86 : memref<1x!tpu.dma_semaphore, #tpu.memory_space<semaphore_mem>> -> memref<!tpu.dma_semaphore, #tpu.memory_space<semaphore_mem>>
        tpu.wait_dma2 semaphore(%87 : memref<!tpu.dma_semaphore, #tpu.memory_space<semaphore_mem>>) src(%83 : memref<1x128xf32, #tpu.memory_space<any>>) dst(%85 : memref<1x128xf32, #tpu.memory_space<vmem>>)
      } else {
      }
      %c1_i32_51 = arith.constant 1 : i32
      %62 = arith.cmpi sgt, %58, %c1_i32_51 : i32
      %63 = arith.extui %62 : i1 to i32
      %c0_i32_52 = arith.constant 0 : i32
      %64 = arith.cmpi ne, %63, %c0_i32_52 : i32
      scf.if %64 {
        %c0_i32_59 = arith.constant 0 : i32
        %c0_i32_60 = arith.constant 0 : i32
        %83 = tpu.memref_slice %arg5[%c0_i32_59, %c0_i32_60] : memref<16x128xf32, #tpu.memory_space<any>> -> memref<1x128xf32, #tpu.memory_space<any>>
        %c1_i32_61 = arith.constant 1 : i32
        %c0_i32_62 = arith.constant 0 : i32
        %84 = tpu.memref_slice %arg15[%arg17, %c1_i32_61, %c0_i32_62] : memref<8x8x128xf32, #tpu.memory_space<vmem>> -> memref<1x1x128xf32, #tpu.memory_space<vmem>>
        %85 = tpu.memref_squeeze %84 : memref<1x1x128xf32, #tpu.memory_space<vmem>> -> memref<1x128xf32, #tpu.memory_space<vmem>>
        %86 = tpu.memref_slice %arg16[%c1_i32_13] : memref<2x!tpu.dma_semaphore, #tpu.memory_space<semaphore_mem>> -> memref<1x!tpu.dma_semaphore, #tpu.memory_space<semaphore_mem>>
        %87 = tpu.memref_squeeze %86 : memref<1x!tpu.dma_semaphore, #tpu.memory_space<semaphore_mem>> -> memref<!tpu.dma_semaphore, #tpu.memory_space<semaphore_mem>>
        tpu.wait_dma2 semaphore(%87 : memref<!tpu.dma_semaphore, #tpu.memory_space<semaphore_mem>>) src(%83 : memref<1x128xf32, #tpu.memory_space<any>>) dst(%85 : memref<1x128xf32, #tpu.memory_space<vmem>>)
      } else {
      }
      %c2_i32 = arith.constant 2 : i32
      %65 = arith.cmpi sgt, %58, %c2_i32 : i32
      %66 = arith.extui %65 : i1 to i32
      %c0_i32_53 = arith.constant 0 : i32
      %67 = arith.cmpi ne, %66, %c0_i32_53 : i32
      scf.if %67 {
        %c0_i32_59 = arith.constant 0 : i32
        %c0_i32_60 = arith.constant 0 : i32
        %83 = tpu.memref_slice %arg5[%c0_i32_59, %c0_i32_60] : memref<16x128xf32, #tpu.memory_space<any>> -> memref<1x128xf32, #tpu.memory_space<any>>
        %c2_i32_61 = arith.constant 2 : i32
        %c0_i32_62 = arith.constant 0 : i32
        %84 = tpu.memref_slice %arg15[%arg17, %c2_i32_61, %c0_i32_62] : memref<8x8x128xf32, #tpu.memory_space<vmem>> -> memref<1x1x128xf32, #tpu.memory_space<vmem>>
        %85 = tpu.memref_squeeze %84 : memref<1x1x128xf32, #tpu.memory_space<vmem>> -> memref<1x128xf32, #tpu.memory_space<vmem>>
        %86 = tpu.memref_slice %arg16[%c1_i32_13] : memref<2x!tpu.dma_semaphore, #tpu.memory_space<semaphore_mem>> -> memref<1x!tpu.dma_semaphore, #tpu.memory_space<semaphore_mem>>
        %87 = tpu.memref_squeeze %86 : memref<1x!tpu.dma_semaphore, #tpu.memory_space<semaphore_mem>> -> memref<!tpu.dma_semaphore, #tpu.memory_space<semaphore_mem>>
        tpu.wait_dma2 semaphore(%87 : memref<!tpu.dma_semaphore, #tpu.memory_space<semaphore_mem>>) src(%83 : memref<1x128xf32, #tpu.memory_space<any>>) dst(%85 : memref<1x128xf32, #tpu.memory_space<vmem>>)
      } else {
      }
      %c3_i32 = arith.constant 3 : i32
      %68 = arith.cmpi sgt, %58, %c3_i32 : i32
      %69 = arith.extui %68 : i1 to i32
      %c0_i32_54 = arith.constant 0 : i32
      %70 = arith.cmpi ne, %69, %c0_i32_54 : i32
      scf.if %70 {
        %c0_i32_59 = arith.constant 0 : i32
        %c0_i32_60 = arith.constant 0 : i32
        %83 = tpu.memref_slice %arg5[%c0_i32_59, %c0_i32_60] : memref<16x128xf32, #tpu.memory_space<any>> -> memref<1x128xf32, #tpu.memory_space<any>>
        %c3_i32_61 = arith.constant 3 : i32
        %c0_i32_62 = arith.constant 0 : i32
        %84 = tpu.memref_slice %arg15[%arg17, %c3_i32_61, %c0_i32_62] : memref<8x8x128xf32, #tpu.memory_space<vmem>> -> memref<1x1x128xf32, #tpu.memory_space<vmem>>
        %85 = tpu.memref_squeeze %84 : memref<1x1x128xf32, #tpu.memory_space<vmem>> -> memref<1x128xf32, #tpu.memory_space<vmem>>
        %86 = tpu.memref_slice %arg16[%c1_i32_13] : memref<2x!tpu.dma_semaphore, #tpu.memory_space<semaphore_mem>> -> memref<1x!tpu.dma_semaphore, #tpu.memory_space<semaphore_mem>>
        %87 = tpu.memref_squeeze %86 : memref<1x!tpu.dma_semaphore, #tpu.memory_space<semaphore_mem>> -> memref<!tpu.dma_semaphore, #tpu.memory_space<semaphore_mem>>
        tpu.wait_dma2 semaphore(%87 : memref<!tpu.dma_semaphore, #tpu.memory_space<semaphore_mem>>) src(%83 : memref<1x128xf32, #tpu.memory_space<any>>) dst(%85 : memref<1x128xf32, #tpu.memory_space<vmem>>)
      } else {
      }
      %c4_i32 = arith.constant 4 : i32
      %71 = arith.cmpi sgt, %58, %c4_i32 : i32
      %72 = arith.extui %71 : i1 to i32
      %c0_i32_55 = arith.constant 0 : i32
      %73 = arith.cmpi ne, %72, %c0_i32_55 : i32
      scf.if %73 {
        %c0_i32_59 = arith.constant 0 : i32
        %c0_i32_60 = arith.constant 0 : i32
        %83 = tpu.memref_slice %arg5[%c0_i32_59, %c0_i32_60] : memref<16x128xf32, #tpu.memory_space<any>> -> memref<1x128xf32, #tpu.memory_space<any>>
        %c4_i32_61 = arith.constant 4 : i32
        %c0_i32_62 = arith.constant 0 : i32
        %84 = tpu.memref_slice %arg15[%arg17, %c4_i32_61, %c0_i32_62] : memref<8x8x128xf32, #tpu.memory_space<vmem>> -> memref<1x1x128xf32, #tpu.memory_space<vmem>>
        %85 = tpu.memref_squeeze %84 : memref<1x1x128xf32, #tpu.memory_space<vmem>> -> memref<1x128xf32, #tpu.memory_space<vmem>>
        %86 = tpu.memref_slice %arg16[%c1_i32_13] : memref<2x!tpu.dma_semaphore, #tpu.memory_space<semaphore_mem>> -> memref<1x!tpu.dma_semaphore, #tpu.memory_space<semaphore_mem>>
        %87 = tpu.memref_squeeze %86 : memref<1x!tpu.dma_semaphore, #tpu.memory_space<semaphore_mem>> -> memref<!tpu.dma_semaphore, #tpu.memory_space<semaphore_mem>>
        tpu.wait_dma2 semaphore(%87 : memref<!tpu.dma_semaphore, #tpu.memory_space<semaphore_mem>>) src(%83 : memref<1x128xf32, #tpu.memory_space<any>>) dst(%85 : memref<1x128xf32, #tpu.memory_space<vmem>>)
      } else {
      }
      %c5_i32 = arith.constant 5 : i32
      %74 = arith.cmpi sgt, %58, %c5_i32 : i32
      %75 = arith.extui %74 : i1 to i32
      %c0_i32_56 = arith.constant 0 : i32
      %76 = arith.cmpi ne, %75, %c0_i32_56 : i32
      scf.if %76 {
        %c0_i32_59 = arith.constant 0 : i32
        %c0_i32_60 = arith.constant 0 : i32
        %83 = tpu.memref_slice %arg5[%c0_i32_59, %c0_i32_60] : memref<16x128xf32, #tpu.memory_space<any>> -> memref<1x128xf32, #tpu.memory_space<any>>
        %c5_i32_61 = arith.constant 5 : i32
        %c0_i32_62 = arith.constant 0 : i32
        %84 = tpu.memref_slice %arg15[%arg17, %c5_i32_61, %c0_i32_62] : memref<8x8x128xf32, #tpu.memory_space<vmem>> -> memref<1x1x128xf32, #tpu.memory_space<vmem>>
        %85 = tpu.memref_squeeze %84 : memref<1x1x128xf32, #tpu.memory_space<vmem>> -> memref<1x128xf32, #tpu.memory_space<vmem>>
        %86 = tpu.memref_slice %arg16[%c1_i32_13] : memref<2x!tpu.dma_semaphore, #tpu.memory_space<semaphore_mem>> -> memref<1x!tpu.dma_semaphore, #tpu.memory_space<semaphore_mem>>
        %87 = tpu.memref_squeeze %86 : memref<1x!tpu.dma_semaphore, #tpu.memory_space<semaphore_mem>> -> memref<!tpu.dma_semaphore, #tpu.memory_space<semaphore_mem>>
        tpu.wait_dma2 semaphore(%87 : memref<!tpu.dma_semaphore, #tpu.memory_space<semaphore_mem>>) src(%83 : memref<1x128xf32, #tpu.memory_space<any>>) dst(%85 : memref<1x128xf32, #tpu.memory_space<vmem>>)
      } else {
      }
      %c6_i32 = arith.constant 6 : i32
      %77 = arith.cmpi sgt, %58, %c6_i32 : i32
      %78 = arith.extui %77 : i1 to i32
      %c0_i32_57 = arith.constant 0 : i32
      %79 = arith.cmpi ne, %78, %c0_i32_57 : i32
      scf.if %79 {
        %c0_i32_59 = arith.constant 0 : i32
        %c0_i32_60 = arith.constant 0 : i32
        %83 = tpu.memref_slice %arg5[%c0_i32_59, %c0_i32_60] : memref<16x128xf32, #tpu.memory_space<any>> -> memref<1x128xf32, #tpu.memory_space<any>>
        %c6_i32_61 = arith.constant 6 : i32
        %c0_i32_62 = arith.constant 0 : i32
        %84 = tpu.memref_slice %arg15[%arg17, %c6_i32_61, %c0_i32_62] : memref<8x8x128xf32, #tpu.memory_space<vmem>> -> memref<1x1x128xf32, #tpu.memory_space<vmem>>
        %85 = tpu.memref_squeeze %84 : memref<1x1x128xf32, #tpu.memory_space<vmem>> -> memref<1x128xf32, #tpu.memory_space<vmem>>
        %86 = tpu.memref_slice %arg16[%c1_i32_13] : memref<2x!tpu.dma_semaphore, #tpu.memory_space<semaphore_mem>> -> memref<1x!tpu.dma_semaphore, #tpu.memory_space<semaphore_mem>>
        %87 = tpu.memref_squeeze %86 : memref<1x!tpu.dma_semaphore, #tpu.memory_space<semaphore_mem>> -> memref<!tpu.dma_semaphore, #tpu.memory_space<semaphore_mem>>
        tpu.wait_dma2 semaphore(%87 : memref<!tpu.dma_semaphore, #tpu.memory_space<semaphore_mem>>) src(%83 : memref<1x128xf32, #tpu.memory_space<any>>) dst(%85 : memref<1x128xf32, #tpu.memory_space<vmem>>)
      } else {
      }
      %c7_i32 = arith.constant 7 : i32
      %80 = arith.cmpi sgt, %58, %c7_i32 : i32
      %81 = arith.extui %80 : i1 to i32
      %c0_i32_58 = arith.constant 0 : i32
      %82 = arith.cmpi ne, %81, %c0_i32_58 : i32
      scf.if %82 {
        %c0_i32_59 = arith.constant 0 : i32
        %c0_i32_60 = arith.constant 0 : i32
        %83 = tpu.memref_slice %arg5[%c0_i32_59, %c0_i32_60] : memref<16x128xf32, #tpu.memory_space<any>> -> memref<1x128xf32, #tpu.memory_space<any>>
        %c7_i32_61 = arith.constant 7 : i32
        %c0_i32_62 = arith.constant 0 : i32
        %84 = tpu.memref_slice %arg15[%arg17, %c7_i32_61, %c0_i32_62] : memref<8x8x128xf32, #tpu.memory_space<vmem>> -> memref<1x1x128xf32, #tpu.memory_space<vmem>>
        %85 = tpu.memref_squeeze %84 : memref<1x1x128xf32, #tpu.memory_space<vmem>> -> memref<1x128xf32, #tpu.memory_space<vmem>>
        %86 = tpu.memref_slice %arg16[%c1_i32_13] : memref<2x!tpu.dma_semaphore, #tpu.memory_space<semaphore_mem>> -> memref<1x!tpu.dma_semaphore, #tpu.memory_space<semaphore_mem>>
        %87 = tpu.memref_squeeze %86 : memref<1x!tpu.dma_semaphore, #tpu.memory_space<semaphore_mem>> -> memref<!tpu.dma_semaphore, #tpu.memory_space<semaphore_mem>>
        tpu.wait_dma2 semaphore(%87 : memref<!tpu.dma_semaphore, #tpu.memory_space<semaphore_mem>>) src(%83 : memref<1x128xf32, #tpu.memory_space<any>>) dst(%85 : memref<1x128xf32, #tpu.memory_space<vmem>>)
      } else {
      }
    }
    %c8_i32_17 = arith.constant 8 : i32
    %c0 = arith.constant 0 : index
    %c0_18 = arith.constant 0 : index
    %5 = vector.load %arg6[%c0, %c0_18] : memref<8x1xi32, #tpu.memory_space<vmem>>, vector<8x1xi32>
    %c0_19 = arith.constant 0 : index
    %c0_20 = arith.constant 0 : index
    %6 = vector.load %arg7[%c0_19, %c0_20] : memref<8x1xi32, #tpu.memory_space<vmem>>, vector<8x1xi32>
    %7 = tpu.iota {dimensions = array<i32: 1>} : vector<8x8x128xi32>
    %8 = vector.shape_cast %5 : vector<8x1xi32> to vector<8x1x1xi32>
    %9 = vector.broadcast %8 : vector<8x1x1xi32> to vector<8x8x128xi32>
    %10 = arith.cmpi slt, %7, %9 : vector<8x8x128xi32>
    %11 = vector.shape_cast %6 : vector<8x1xi32> to vector<8x1x1xi32>
    %12 = vector.broadcast %11 : vector<8x1x1xi32> to vector<8x8x128xi32>
    %13 = arith.cmpi slt, %7, %12 : vector<8x8x128xi32>
    %c0_21 = arith.constant 0 : index
    %c0_22 = arith.constant 0 : index
    %c0_23 = arith.constant 0 : index
    %14 = vector.load %arg14[%c0_21, %c0_22, %c0_23] : memref<8x8x128xf32, #tpu.memory_space<vmem>>, vector<8x8x128xf32>
    %c0_24 = arith.constant 0 : index
    %c0_25 = arith.constant 0 : index
    %c0_26 = arith.constant 0 : index
    %15 = vector.load %arg15[%c0_24, %c0_25, %c0_26] : memref<8x8x128xf32, #tpu.memory_space<vmem>>, vector<8x8x128xf32>
    %16 = arith.sitofp %5 : vector<8x1xi32> to vector<8x1xf32>
    %cst = arith.constant 1.000000e+00 : f32
    %17 = vector.broadcast %cst : f32 to vector<8x1xf32>
    %18 = arith.divf %17, %16 : vector<8x1xf32>
    %19 = arith.sitofp %6 : vector<8x1xi32> to vector<8x1xf32>
    %cst_27 = arith.constant 1.000000e+00 : f32
    %20 = vector.broadcast %cst_27 : f32 to vector<8x1xf32>
    %21 = arith.divf %20, %19 : vector<8x1xf32>
    %cst_28 = arith.constant 0.000000e+00 : f32
    %22 = vector.broadcast %cst_28 : f32 to vector<8x8x128xf32>
    %23 = arith.select %10, %14, %22 : vector<8x8x128xi1>, vector<8x8x128xf32>
    %cst_29 = arith.constant dense<0.000000e+00> : vector<8x128xf32>
    %24 = vector.multi_reduction <add>, %23, %cst_29 [1] : vector<8x8x128xf32> to vector<8x128xf32>
    %25 = vector.broadcast %18 : vector<8x1xf32> to vector<8x128xf32>
    %26 = arith.mulf %24, %25 : vector<8x128xf32>
    %cst_30 = arith.constant 0.000000e+00 : f32
    %27 = vector.broadcast %cst_30 : f32 to vector<8x8x128xf32>
    %28 = arith.select %13, %15, %27 : vector<8x8x128xi1>, vector<8x8x128xf32>
    %cst_31 = arith.constant dense<0.000000e+00> : vector<8x128xf32>
    %29 = vector.multi_reduction <add>, %28, %cst_31 [1] : vector<8x8x128xf32> to vector<8x128xf32>
    %30 = vector.broadcast %21 : vector<8x1xf32> to vector<8x128xf32>
    %31 = arith.mulf %29, %30 : vector<8x128xf32>
    %c0_32 = arith.constant 0 : index
    %c0_33 = arith.constant 0 : index
    %32 = vector.load %arg8[%c0_32, %c0_33] : memref<128x32xf32, #tpu.memory_space<vmem>>, vector<128x32xf32>
    %cst_34 = arith.constant dense<0.000000e+00> : vector<8x32xf32>
    %33 = tpu.matmul %26, %32, %cst_34 {dimension_numbers = #tpu.dot_dimension_numbers<[1], [0], [0], [1], [0, 0, 1, 1], [], []>} : vector<8x128xf32>, vector<128x32xf32>, vector<8x32xf32> -> vector<8x32xf32>
    %c0_35 = arith.constant 0 : index
    %c0_36 = arith.constant 0 : index
    %34 = vector.load %arg9[%c0_35, %c0_36] : memref<128x32xf32, #tpu.memory_space<vmem>>, vector<128x32xf32>
    %cst_37 = arith.constant dense<0.000000e+00> : vector<8x32xf32>
    %35 = tpu.matmul %31, %34, %cst_37 {dimension_numbers = #tpu.dot_dimension_numbers<[1], [0], [0], [1], [0, 0, 1, 1], [], []>} : vector<8x128xf32>, vector<128x32xf32>, vector<8x32xf32> -> vector<8x32xf32>
    %36 = arith.addf %33, %35 : vector<8x32xf32>
    %c0_38 = arith.constant 0 : index
    %c0_39 = arith.constant 0 : index
    %37 = vector.load %arg10[%c0_38, %c0_39] : memref<1x32xf32, #tpu.memory_space<vmem>>, vector<1x32xf32>
    %38 = vector.broadcast %37 : vector<1x32xf32> to vector<8x32xf32>
    %39 = arith.addf %36, %38 : vector<8x32xf32>
    %cst_40 = arith.constant 0.000000e+00 : f32
    %40 = vector.broadcast %cst_40 : f32 to vector<8x32xf32>
    %41 = arith.maximumf %39, %40 : vector<8x32xf32>
    %c0_41 = arith.constant 0 : index
    %c0_42 = arith.constant 0 : index
    %42 = vector.load %arg11[%c0_41, %c0_42] : memref<1x32xf32, #tpu.memory_space<vmem>>, vector<1x32xf32>
    %43 = vector.broadcast %42 : vector<1x32xf32> to vector<8x32xf32>
    %44 = arith.mulf %41, %43 : vector<8x32xf32>
    %cst_43 = arith.constant dense<0.000000e+00> : vector<8xf32>
    %45 = vector.multi_reduction <add>, %44, %cst_43 [1] : vector<8x32xf32> to vector<8xf32>
    %46 = vector.shape_cast %45 : vector<8xf32> to vector<8x1xf32>
    %c0_44 = arith.constant 0 : index
    %c0_45 = arith.constant 0 : index
    %47 = vector.load %arg12[%c0_44, %c0_45] : memref<1x1xf32, #tpu.memory_space<vmem>>, vector<1x1xf32>
    %48 = vector.broadcast %47 : vector<1x1xf32> to vector<8x1xf32>
    %49 = arith.addf %46, %48 : vector<8x1xf32>
    %50 = arith.negf %49 : vector<8x1xf32>
    %51 = math.exp %50 : vector<8x1xf32>
    %cst_46 = arith.constant 1.000000e+00 : f32
    %52 = vector.broadcast %cst_46 : f32 to vector<8x1xf32>
    %53 = arith.addf %52, %51 : vector<8x1xf32>
    %54 = arith.divf %52, %53 : vector<8x1xf32>
    %c0_47 = arith.constant 0 : index
    %c0_48 = arith.constant 0 : index
    %55 = vector.load %arg13[%c0_47, %c0_48] : memref<8x1xf32, #tpu.memory_space<vmem>>, vector<8x1xf32>
    tpu.vector_store %arg13[%c0_47, %c0_48], %54 {strides = array<i32>} : memref<8x1xf32, #tpu.memory_space<vmem>>, vector<8x1xf32>,
    return
  }
  func.func @transform_1(%arg0: i32, %arg1: memref<64xi32, #tpu.memory_space<smem>>, %arg2: memref<64xi32, #tpu.memory_space<smem>>, %arg3: memref<8xi32, #tpu.memory_space<smem>>, %arg4: memref<8xi32, #tpu.memory_space<smem>>) -> (i32, i32) {
    %c0_i32 = arith.constant 0 : i32
    %c0_i32_0 = arith.constant 0 : i32
    return %arg0, %c0_i32 : i32, i32
  }
  func.func @transform_2(%arg0: i32, %arg1: memref<64xi32, #tpu.memory_space<smem>>, %arg2: memref<64xi32, #tpu.memory_space<smem>>, %arg3: memref<8xi32, #tpu.memory_space<smem>>, %arg4: memref<8xi32, #tpu.memory_space<smem>>) -> (i32, i32) {
    %c0_i32 = arith.constant 0 : i32
    %c0_i32_0 = arith.constant 0 : i32
    return %arg0, %c0_i32 : i32, i32
  }
  func.func @transform_3(%arg0: i32, %arg1: memref<64xi32, #tpu.memory_space<smem>>, %arg2: memref<64xi32, #tpu.memory_space<smem>>, %arg3: memref<8xi32, #tpu.memory_space<smem>>, %arg4: memref<8xi32, #tpu.memory_space<smem>>) -> (i32, i32) {
    %c0_i32 = arith.constant 0 : i32
    %c0_i32_0 = arith.constant 0 : i32
    %c0_i32_1 = arith.constant 0 : i32
    return %c0_i32, %c0_i32_0 : i32, i32
  }
  func.func @transform_4(%arg0: i32, %arg1: memref<64xi32, #tpu.memory_space<smem>>, %arg2: memref<64xi32, #tpu.memory_space<smem>>, %arg3: memref<8xi32, #tpu.memory_space<smem>>, %arg4: memref<8xi32, #tpu.memory_space<smem>>) -> (i32, i32) {
    %c0_i32 = arith.constant 0 : i32
    %c0_i32_0 = arith.constant 0 : i32
    %c0_i32_1 = arith.constant 0 : i32
    return %c0_i32, %c0_i32_0 : i32, i32
  }
  func.func @transform_5(%arg0: i32, %arg1: memref<64xi32, #tpu.memory_space<smem>>, %arg2: memref<64xi32, #tpu.memory_space<smem>>, %arg3: memref<8xi32, #tpu.memory_space<smem>>, %arg4: memref<8xi32, #tpu.memory_space<smem>>) -> (i32, i32) {
    %c0_i32 = arith.constant 0 : i32
    %c0_i32_0 = arith.constant 0 : i32
    %c0_i32_1 = arith.constant 0 : i32
    return %c0_i32, %c0_i32_0 : i32, i32
  }
  func.func @transform_6(%arg0: i32, %arg1: memref<64xi32, #tpu.memory_space<smem>>, %arg2: memref<64xi32, #tpu.memory_space<smem>>, %arg3: memref<8xi32, #tpu.memory_space<smem>>, %arg4: memref<8xi32, #tpu.memory_space<smem>>) -> (i32, i32) {
    %c0_i32 = arith.constant 0 : i32
    %c0_i32_0 = arith.constant 0 : i32
    %c0_i32_1 = arith.constant 0 : i32
    return %c0_i32, %c0_i32_0 : i32, i32
  }
  func.func @transform_7(%arg0: i32, %arg1: memref<64xi32, #tpu.memory_space<smem>>, %arg2: memref<64xi32, #tpu.memory_space<smem>>, %arg3: memref<8xi32, #tpu.memory_space<smem>>, %arg4: memref<8xi32, #tpu.memory_space<smem>>) -> (i32, i32) {
    %c0_i32 = arith.constant 0 : i32
    %c0_i32_0 = arith.constant 0 : i32
    %c0_i32_1 = arith.constant 0 : i32
    return %c0_i32, %c0_i32_0 : i32, i32
  }
  func.func @transform_8(%arg0: i32, %arg1: memref<64xi32, #tpu.memory_space<smem>>, %arg2: memref<64xi32, #tpu.memory_space<smem>>, %arg3: memref<8xi32, #tpu.memory_space<smem>>, %arg4: memref<8xi32, #tpu.memory_space<smem>>) -> (i32, i32) {
    %c0_i32 = arith.constant 0 : i32
    %c0_i32_0 = arith.constant 0 : i32
    return %arg0, %c0_i32 : i32, i32
  }
}

</mosaic_0001>

<llo_original>
// kernel: tpu_custom_call.1
$region0: #{tpu_custom_call.1}
  #allocation0 [shape = 'u32[]', space=smem, size = 0x4, offset = 0x4, fixed_abs, tag = 'smem constant byte address 0x4 - core index']
  #allocation1 [shape = 'u32[72,128]{1,0:T(1,128)}', space=vmem, size = 0x9000, scoped, tag = 'internal scratch']
  #allocation2 [shape = 'f32[8,8,128]{2,1,0:T(8,128)}', space=vmem, size = 0x8000, scoped, tag = 'scratch operand']
  #allocation3 [shape = 'f32[8,8,128]{2,1,0:T(8,128)}', space=vmem, size = 0x8000, scoped, tag = 'scratch operand']
  #allocation4 [shape = 's32[2]{0}', space=sflag, size = 0x8, scoped, tag = 'scratch operand']
  #allocation5 [shape = 's32[1]{0}', space=sflag, size = 0x4, scoped, tag = 'scoped memory for tpu_custom_call.1']
  #allocation6 [shape = 'u8[512]{0}', space=smem, size = 0x200, scoped, tag = 'prefetched SMEM operand 0']
  #allocation7 [shape = 'u8[512]{0}', space=smem, size = 0x200, scoped, tag = 'prefetched SMEM operand 1']
  #allocation8 [shape = 'u8[512]{0}', space=smem, size = 0x200, scoped, tag = 'prefetched SMEM operand 2']
  #allocation9 [shape = 'u8[512]{0}', space=smem, size = 0x200, scoped, tag = 'prefetched SMEM operand 3']
  #allocation10 [shape = 'f32[1,1]{1,0:T(1,128)S(1)}', space=vmem, size = 0x200, scoped, tag = 'scoped memory for tpu_custom_call.1']
  #allocation11 [shape = 's32[]', space=sflag, size = 0x4, offset = 0, fixed_abs, tag = 'sflag constant byte address 0x0 - dummy sync flag']
  #allocation12 [shape = 's32[]', space=sflag, size = 0x4, offset = 0, fixed_abs, tag = 'sflag constant byte address 0x0 - dummy sync flag']
  #allocation13 [shape = 's32[]', space=sflag, size = 0x4, offset = 0, fixed_abs, tag = 'sflag constant byte address 0x0 - dummy sync flag']
  #allocation14 [shape = 's32[]', space=sflag, size = 0x4, offset = 0, fixed_abs, tag = 'sflag constant byte address 0x0 - dummy sync flag']
  #allocation15 [shape = 's32[]', space=sflag, size = 0x4, offset = 0, fixed_abs, tag = 'sflag constant byte address 0x0 - dummy sync flag']
  #allocation16 [shape = 's32[]', space=sflag, size = 0x4, offset = 0, fixed_abs, tag = 'sflag constant byte address 0x0 - dummy sync flag']
  #allocation17 [shape = 's32[]', space=sflag, size = 0x4, offset = 0, fixed_abs, tag = 'sflag constant byte address 0x0 - dummy sync flag']
  #allocation18 [shape = 's32[]', space=sflag, size = 0x4, offset = 0, fixed_abs, tag = 'sflag constant byte address 0x0 - dummy sync flag']
  #allocation19 [shape = 's32[]', space=sflag, size = 0x4, offset = 0, fixed_abs, tag = 'sflag constant byte address 0x0 - dummy sync flag']
  #allocation20 [shape = 's32[]', space=sflag, size = 0x4, offset = 0, fixed_abs, tag = 'sflag constant byte address 0x0 - dummy sync flag']
  #allocation21 [shape = 's32[]', space=sflag, size = 0x4, offset = 0, fixed_abs, tag = 'sflag constant byte address 0x0 - dummy sync flag']
  #allocation22 [shape = 's32[]', space=sflag, size = 0x4, offset = 0, fixed_abs, tag = 'sflag constant byte address 0x0 - dummy sync flag']
  #allocation23 [shape = 's32[]', space=sflag, size = 0x4, offset = 0, fixed_abs, tag = 'sflag constant byte address 0x0 - dummy sync flag']
  #allocation24 [shape = 's32[]', space=sflag, size = 0x4, offset = 0, fixed_abs, tag = 'sflag constant byte address 0x0 - dummy sync flag']
  #allocation25 [shape = 's32[]', space=sflag, size = 0x4, offset = 0, fixed_abs, tag = 'sflag constant byte address 0x0 - dummy sync flag']
  #allocation26 [shape = 's32[]', space=sflag, size = 0x4, offset = 0, fixed_abs, tag = 'sflag constant byte address 0x0 - dummy sync flag']
  %s0 = inlined_call_operand.vmem [shape: s32[64], index: 0, kind: input, shape index: {}]
  %s1 = inlined_call_operand.vmem [shape: s32[64], index: 1, kind: input, shape index: {}]
  %s2 = inlined_call_operand.vmem [shape: s32[8], index: 2, kind: input, shape index: {}]
  %s3 = inlined_call_operand.vmem [shape: s32[8], index: 3, kind: input, shape index: {}]
  %s4 = inlined_call_operand.vmem [shape: f32[16,128], index: 4, kind: input, shape index: {}]
  %s5 = inlined_call_operand.vmem [shape: s32[8,1], index: 5, kind: input, shape index: {}]
  %s6 = inlined_call_operand.vmem [shape: s32[8,1], index: 6, kind: input, shape index: {}]
  %s7 = inlined_call_operand.vmem [shape: f32[128,32], index: 7, kind: input, shape index: {}]
  %s8 = inlined_call_operand.vmem [shape: f32[128,32], index: 8, kind: input, shape index: {}]
  %s9 = inlined_call_operand.vmem [shape: f32[1,32], index: 9, kind: input, shape index: {}]
  %s10 = inlined_call_operand.vmem [shape: f32[1,32], index: 10, kind: input, shape index: {}]
  %s11 = inlined_call_operand.<no memory space> [shape: f32[1,1], index: 11, kind: input, shape index: {}]
  %s12 = inlined_call_operand.vmem [shape: f32[8,1], index: 12, kind: output, shape index: {}]
  %s13 = sld [smem:[#allocation0]]
  $region674: #{tpu_custom_call.1} parent=0
    _
  %s15 = ssub.s32 1, %s13
  %s16 = scalar_select 0, %s15, %s13
  %s18 = sshll.u32 %s0, 4
  %s19 = int_to_ptr.vmem [resolvable:$true] %s18
  %21 = dma.vmem_to_smem %s19, 16, [#allocation6], [#allocation5]
  %s23 = sshll.u32 %s1, 4
  %s24 = int_to_ptr.vmem [resolvable:$true] %s23
  %26 = dma.vmem_to_smem %s24, 16, [#allocation7], [#allocation5]
  %s28 = sshll.u32 %s2, 4
  %s29 = int_to_ptr.vmem [resolvable:$true] %s28
  %31 = dma.vmem_to_smem %s29, 16, [#allocation8], [#allocation5]
  %s33 = sshll.u32 %s3, 4
  %s34 = int_to_ptr.vmem [resolvable:$true] %s33
  %36 = dma.vmem_to_smem %s34, 16, [#allocation9], [#allocation5]
  %v37 = vstv %s11
  %38 = vst [vmem:[#allocation10] sm:$0x1] %v37
  %40 = dma.done [#allocation5], 64
  %41 = sfence
  // Predicated region
  $region2: #{tpu_custom_call.1} parent=0 // pred_check
    _
  $region3: #{tpu_custom_call.1} parent=0 // pred_check_branch
    %43 = sbr.rel (0) target = $region5
  $region4: #{tpu_custom_call.1} parent=0 // pred_region
    _
  $region5: #{tpu_custom_call.1} parent=0 // pred_fallthru
    _
  // Predicated region
  $region6: #{tpu_custom_call.1} parent=0 // pred_check
    _
  $region7: #{tpu_custom_call.1} parent=0 // pred_check_branch
    %45 = sbr.rel (0) target = $region9
  $region8: #{tpu_custom_call.1} parent=0 // pred_region
    _
  $region9: #{tpu_custom_call.1} parent=0 // pred_fallthru
    _
  // Predicated region
  $region10: #{tpu_custom_call.1} parent=0 // pred_check
    _
  $region11: #{tpu_custom_call.1} parent=0 // pred_check_branch
    %47 = sbr.rel (0) target = $region13
  $region12: #{tpu_custom_call.1} parent=0 // pred_region
    _
  $region13: #{tpu_custom_call.1} parent=0 // pred_fallthru
    _
  // Predicated region
  $region14: #{tpu_custom_call.1} parent=0 // pred_check
    _
  $region15: #{tpu_custom_call.1} parent=0 // pred_check_branch
    %49 = sbr.rel (0) target = $region17
  $region16: #{tpu_custom_call.1} parent=0 // pred_region
    _
  $region17: #{tpu_custom_call.1} parent=0 // pred_fallthru
    _
  // Predicated region
  $region18: #{tpu_custom_call.1} parent=0 // pred_check
    _
  $region19: #{tpu_custom_call.1} parent=0 // pred_check_branch
    %51 = sbr.rel (0) target = $region21
  $region20: #{tpu_custom_call.1} parent=0 // pred_region
    _
  $region21: #{tpu_custom_call.1} parent=0 // pred_fallthru
    _
  // Predicated region
  $region22: #{tpu_custom_call.1} parent=0 // pred_check
    _
  $region23: #{tpu_custom_call.1} parent=0 // pred_check_branch
    %53 = sbr.rel (0) target = $region25
  $region24: #{tpu_custom_call.1} parent=0 // pred_region
    _
  $region25: #{tpu_custom_call.1} parent=0 // pred_fallthru
    _
  // Predicated region
  $region26: #{tpu_custom_call.1} parent=0 // pred_check
    _
  $region27: #{tpu_custom_call.1} parent=0 // pred_check_branch
    %55 = sbr.rel (0) target = $region29
  $region28: #{tpu_custom_call.1} parent=0 // pred_region
    _
  $region29: #{tpu_custom_call.1} parent=0 // pred_fallthru
    _
  %s56 = smul.u32 0, 8
  loop: start=0, step=1, limit=8
  $region30: #{tpu_custom_call.1} parent=0 // loop_pre_header
    _
  $region31: #{tpu_custom_call.1} parent=0 // loop_header
    %s58 = sphi 0, %s62
    %p59 = scmp.ge.s32.totalorder %s58, 8
  $region32: #{tpu_custom_call.1} parent=0 // loop_header_branch
    %61 = sbr.rel (%p59) target = $region36
  $region33: #{tpu_custom_call.1} parent=0 // loop_body
    %s63 = sadd.s32 %s56, %s58
    %s64 = sld [smem:[#allocation8 + %s63]]
    %s65 = smul.u32 %s63, 8
    %p66 = scmp.gt.s32.totalorder %s64, 0
    // Predicated region
    $region37: #{tpu_custom_call.1} parent=33 // pred_check
      %p67 = pneg %p66
    $region38: #{tpu_custom_call.1} parent=33 // pred_check_branch
      %69 = sbr.rel (%p67) target = $region40
    $region39: #{tpu_custom_call.1} parent=33 // pred_region
      %s70 = sld [smem:[#allocation6 + %s65]]
      %s71 = scalar_lea.vmem %s4, %s70
      %s72 = smul.u32 %s58, 8
      %s73 = scalar_lea.vmem [#allocation2], %s72
      // Predicated region
      $region41: #{tpu_custom_call.1} parent=39 // pred_check
        _
      $region42: #{tpu_custom_call.1} parent=39 // pred_check_branch
        %75 = sbr.rel target = $region44
      $region43: #{tpu_custom_call.1} parent=39 // pred_region
        // Predicated region
        $region56: #{tpu_custom_call.1} parent=43 // pred_check
          _
        $region57: #{tpu_custom_call.1} parent=43 // pred_check_branch
          %91 = sbr.rel (0) target = $region59
        $region58: #{tpu_custom_call.1} parent=43 // pred_region
          %s93 = ssub.s32 2, 1
          loop: start=0, step=1, limit=1
          $region60: #{tpu_custom_call.1} parent=58 // loop_pre_header
            _
          $region61: #{tpu_custom_call.1} parent=58 // loop_header
            %s95 = sphi 0, %s99
            %p96 = scmp.ge.s32.totalorder %s95, 1
            %s100 = sphi %s71, %s71
            %s101 = sphi %s73, %s73
          $region62: #{tpu_custom_call.1} parent=58 // loop_header_branch
            %98 = sbr.rel (%p96) target = $region66
          $region63: #{tpu_custom_call.1} parent=58 // loop_body
            %v102 = vld [vmem:[%s100] sm:%s93]
            %103 = vst [vmem:[%s101] sm:%s93] %v102
          $region64: #{tpu_custom_call.1} parent=58 // loop_footer
            %s99 = sadd.s32 1, %s95
          $region65: #{tpu_custom_call.1} parent=58 // loop_footer_branch
            %94 = sbr.rel target = $region61
          $region66: #{tpu_custom_call.1} parent=58 // loop_exit
            _
        $region59: #{tpu_custom_call.1} parent=43 // pred_fallthru
          _
      $region44: #{tpu_custom_call.1} parent=39 // pred_fallthru
        _
      // Predicated region
      $region45: #{tpu_custom_call.1} parent=39 // pred_check
        _
      $region46: #{tpu_custom_call.1} parent=39 // pred_check_branch
        %77 = sbr.rel (0) target = $region48
      $region47: #{tpu_custom_call.1} parent=39 // pred_region
        %s79 = ssub.s32 2, 1
        loop: start=0, step=1, limit=1
        $region49: #{tpu_custom_call.1} parent=47 // loop_pre_header
          _
        $region50: #{tpu_custom_call.1} parent=47 // loop_header
          %s81 = sphi 0, %s85
          %p82 = scmp.ge.s32.totalorder %s81, 1
          %s86 = sphi %s71, %s71
          %s87 = sphi %s73, %s73
        $region51: #{tpu_custom_call.1} parent=47 // loop_header_branch
          %84 = sbr.rel (%p82) target = $region55
        $region52: #{tpu_custom_call.1} parent=47 // loop_body
          %v88 = vld [vmem:[%s86] sm:%s79]
          %89 = vst [vmem:[%s87] sm:%s79] %v88
        $region53: #{tpu_custom_call.1} parent=47 // loop_footer
          %s85 = sadd.s32 1, %s81
        $region54: #{tpu_custom_call.1} parent=47 // loop_footer_branch
          %80 = sbr.rel target = $region50
        $region55: #{tpu_custom_call.1} parent=47 // loop_exit
          _
      $region48: #{tpu_custom_call.1} parent=39 // pred_fallthru
        _
      // Predicated region
      $region67: #{tpu_custom_call.1} parent=39 // pred_check
        _
      $region68: #{tpu_custom_call.1} parent=39 // pred_check_branch
        %106 = sbr.rel (0) target = $region70
      $region69: #{tpu_custom_call.1} parent=39 // pred_region
        %107 = vsyncadd [#allocation4], 16
      $region70: #{tpu_custom_call.1} parent=39 // pred_fallthru
        _
    $region40: #{tpu_custom_call.1} parent=33 // pred_fallthru
      _
    %p108 = scmp.gt.s32.totalorder %s64, 1
    // Predicated region
    $region71: #{tpu_custom_call.1} parent=33 // pred_check
      %p109 = pneg %p108
    $region72: #{tpu_custom_call.1} parent=33 // pred_check_branch
      %111 = sbr.rel (%p109) target = $region74
    $region73: #{tpu_custom_call.1} parent=33 // pred_region
      %s112 = sadd.s32 %s65, 1
      %s113 = sld [smem:[#allocation6 + %s112]]
      %s114 = scalar_lea.vmem %s4, %s113
      %s115 = smul.u32 %s58, 8
      %s116 = sadd.s32 1, %s115
      %s117 = scalar_lea.vmem [#allocation2], %s116
      // Predicated region
      $region75: #{tpu_custom_call.1} parent=73 // pred_check
        _
      $region76: #{tpu_custom_call.1} parent=73 // pred_check_branch
        %119 = sbr.rel target = $region78
      $region77: #{tpu_custom_call.1} parent=73 // pred_region
        // Predicated region
        $region90: #{tpu_custom_call.1} parent=77 // pred_check
          _
        $region91: #{tpu_custom_call.1} parent=77 // pred_check_branch
          %135 = sbr.rel (0) target = $region93
        $region92: #{tpu_custom_call.1} parent=77 // pred_region
          %s137 = ssub.s32 2, 1
          loop: start=0, step=1, limit=1
          $region94: #{tpu_custom_call.1} parent=92 // loop_pre_header
            _
          $region95: #{tpu_custom_call.1} parent=92 // loop_header
            %s139 = sphi 0, %s143
            %p140 = scmp.ge.s32.totalorder %s139, 1
            %s144 = sphi %s114, %s114
            %s145 = sphi %s117, %s117
          $region96: #{tpu_custom_call.1} parent=92 // loop_header_branch
            %142 = sbr.rel (%p140) target = $region100
          $region97: #{tpu_custom_call.1} parent=92 // loop_body
            %v146 = vld [vmem:[%s144] sm:%s137]
            %147 = vst [vmem:[%s145] sm:%s137] %v146
          $region98: #{tpu_custom_call.1} parent=92 // loop_footer
            %s143 = sadd.s32 1, %s139
          $region99: #{tpu_custom_call.1} parent=92 // loop_footer_branch
            %138 = sbr.rel target = $region95
          $region100: #{tpu_custom_call.1} parent=92 // loop_exit
            _
        $region93: #{tpu_custom_call.1} parent=77 // pred_fallthru
          _
      $region78: #{tpu_custom_call.1} parent=73 // pred_fallthru
        _
      // Predicated region
      $region79: #{tpu_custom_call.1} parent=73 // pred_check
        _
      $region80: #{tpu_custom_call.1} parent=73 // pred_check_branch
        %121 = sbr.rel (0) target = $region82
      $region81: #{tpu_custom_call.1} parent=73 // pred_region
        %s123 = ssub.s32 2, 1
        loop: start=0, step=1, limit=1
        $region83: #{tpu_custom_call.1} parent=81 // loop_pre_header
          _
        $region84: #{tpu_custom_call.1} parent=81 // loop_header
          %s125 = sphi 0, %s129
          %p126 = scmp.ge.s32.totalorder %s125, 1
          %s130 = sphi %s114, %s114
          %s131 = sphi %s117, %s117
        $region85: #{tpu_custom_call.1} parent=81 // loop_header_branch
          %128 = sbr.rel (%p126) target = $region89
        $region86: #{tpu_custom_call.1} parent=81 // loop_body
          %v132 = vld [vmem:[%s130] sm:%s123]
          %133 = vst [vmem:[%s131] sm:%s123] %v132
        $region87: #{tpu_custom_call.1} parent=81 // loop_footer
          %s129 = sadd.s32 1, %s125
        $region88: #{tpu_custom_call.1} parent=81 // loop_footer_branch
          %124 = sbr.rel target = $region84
        $region89: #{tpu_custom_call.1} parent=81 // loop_exit
          _
      $region82: #{tpu_custom_call.1} parent=73 // pred_fallthru
        _
      // Predicated region
      $region101: #{tpu_custom_call.1} parent=73 // pred_check
        _
      $region102: #{tpu_custom_call.1} parent=73 // pred_check_branch
        %150 = sbr.rel (0) target = $region104
      $region103: #{tpu_custom_call.1} parent=73 // pred_region
        %151 = vsyncadd [#allocation4], 16
      $region104: #{tpu_custom_call.1} parent=73 // pred_fallthru
        _
    $region74: #{tpu_custom_call.1} parent=33 // pred_fallthru
      _
    %p152 = scmp.gt.s32.totalorder %s64, 2
    // Predicated region
    $region105: #{tpu_custom_call.1} parent=33 // pred_check
      %p153 = pneg %p152
    $region106: #{tpu_custom_call.1} parent=33 // pred_check_branch
      %155 = sbr.rel (%p153) target = $region108
    $region107: #{tpu_custom_call.1} parent=33 // pred_region
      %s156 = sadd.s32 %s65, 2
      %s157 = sld [smem:[#allocation6 + %s156]]
      %s158 = scalar_lea.vmem %s4, %s157
      %s159 = smul.u32 %s58, 8
      %s160 = sadd.s32 2, %s159
      %s161 = scalar_lea.vmem [#allocation2], %s160
      // Predicated region
      $region109: #{tpu_custom_call.1} parent=107 // pred_check
        _
      $region110: #{tpu_custom_call.1} parent=107 // pred_check_branch
        %163 = sbr.rel target = $region112
      $region111: #{tpu_custom_call.1} parent=107 // pred_region
        // Predicated region
        $region124: #{tpu_custom_call.1} parent=111 // pred_check
          _
        $region125: #{tpu_custom_call.1} parent=111 // pred_check_branch
          %179 = sbr.rel (0) target = $region127
        $region126: #{tpu_custom_call.1} parent=111 // pred_region
          %s181 = ssub.s32 2, 1
          loop: start=0, step=1, limit=1
          $region128: #{tpu_custom_call.1} parent=126 // loop_pre_header
            _
          $region129: #{tpu_custom_call.1} parent=126 // loop_header
            %s183 = sphi 0, %s187
            %p184 = scmp.ge.s32.totalorder %s183, 1
            %s188 = sphi %s158, %s158
            %s189 = sphi %s161, %s161
          $region130: #{tpu_custom_call.1} parent=126 // loop_header_branch
            %186 = sbr.rel (%p184) target = $region134
          $region131: #{tpu_custom_call.1} parent=126 // loop_body
            %v190 = vld [vmem:[%s188] sm:%s181]
            %191 = vst [vmem:[%s189] sm:%s181] %v190
          $region132: #{tpu_custom_call.1} parent=126 // loop_footer
            %s187 = sadd.s32 1, %s183
          $region133: #{tpu_custom_call.1} parent=126 // loop_footer_branch
            %182 = sbr.rel target = $region129
          $region134: #{tpu_custom_call.1} parent=126 // loop_exit
            _
        $region127: #{tpu_custom_call.1} parent=111 // pred_fallthru
          _
      $region112: #{tpu_custom_call.1} parent=107 // pred_fallthru
        _
      // Predicated region
      $region113: #{tpu_custom_call.1} parent=107 // pred_check
        _
      $region114: #{tpu_custom_call.1} parent=107 // pred_check_branch
        %165 = sbr.rel (0) target = $region116
      $region115: #{tpu_custom_call.1} parent=107 // pred_region
        %s167 = ssub.s32 2, 1
        loop: start=0, step=1, limit=1
        $region117: #{tpu_custom_call.1} parent=115 // loop_pre_header
          _
        $region118: #{tpu_custom_call.1} parent=115 // loop_header
          %s169 = sphi 0, %s173
          %p170 = scmp.ge.s32.totalorder %s169, 1
          %s174 = sphi %s158, %s158
          %s175 = sphi %s161, %s161
        $region119: #{tpu_custom_call.1} parent=115 // loop_header_branch
          %172 = sbr.rel (%p170) target = $region123
        $region120: #{tpu_custom_call.1} parent=115 // loop_body
          %v176 = vld [vmem:[%s174] sm:%s167]
          %177 = vst [vmem:[%s175] sm:%s167] %v176
        $region121: #{tpu_custom_call.1} parent=115 // loop_footer
          %s173 = sadd.s32 1, %s169
        $region122: #{tpu_custom_call.1} parent=115 // loop_footer_branch
          %168 = sbr.rel target = $region118
        $region123: #{tpu_custom_call.1} parent=115 // loop_exit
          _
      $region116: #{tpu_custom_call.1} parent=107 // pred_fallthru
        _
      // Predicated region
      $region135: #{tpu_custom_call.1} parent=107 // pred_check
        _
      $region136: #{tpu_custom_call.1} parent=107 // pred_check_branch
        %194 = sbr.rel (0) target = $region138
      $region137: #{tpu_custom_call.1} parent=107 // pred_region
        %195 = vsyncadd [#allocation4], 16
      $region138: #{tpu_custom_call.1} parent=107 // pred_fallthru
        _
    $region108: #{tpu_custom_call.1} parent=33 // pred_fallthru
      _
    %p196 = scmp.gt.s32.totalorder %s64, 3
    // Predicated region
    $region139: #{tpu_custom_call.1} parent=33 // pred_check
      %p197 = pneg %p196
    $region140: #{tpu_custom_call.1} parent=33 // pred_check_branch
      %199 = sbr.rel (%p197) target = $region142
    $region141: #{tpu_custom_call.1} parent=33 // pred_region
      %s200 = sadd.s32 %s65, 3
      %s201 = sld [smem:[#allocation6 + %s200]]
      %s202 = scalar_lea.vmem %s4, %s201
      %s203 = smul.u32 %s58, 8
      %s204 = sadd.s32 3, %s203
      %s205 = scalar_lea.vmem [#allocation2], %s204
      // Predicated region
      $region143: #{tpu_custom_call.1} parent=141 // pred_check
        _
      $region144: #{tpu_custom_call.1} parent=141 // pred_check_branch
        %207 = sbr.rel target = $region146
      $region145: #{tpu_custom_call.1} parent=141 // pred_region
        // Predicated region
        $region158: #{tpu_custom_call.1} parent=145 // pred_check
          _
        $region159: #{tpu_custom_call.1} parent=145 // pred_check_branch
          %223 = sbr.rel (0) target = $region161
        $region160: #{tpu_custom_call.1} parent=145 // pred_region
          %s225 = ssub.s32 2, 1
          loop: start=0, step=1, limit=1
          $region162: #{tpu_custom_call.1} parent=160 // loop_pre_header
            _
          $region163: #{tpu_custom_call.1} parent=160 // loop_header
            %s227 = sphi 0, %s231
            %p228 = scmp.ge.s32.totalorder %s227, 1
            %s232 = sphi %s202, %s202
            %s233 = sphi %s205, %s205
          $region164: #{tpu_custom_call.1} parent=160 // loop_header_branch
            %230 = sbr.rel (%p228) target = $region168
          $region165: #{tpu_custom_call.1} parent=160 // loop_body
            %v234 = vld [vmem:[%s232] sm:%s225]
            %235 = vst [vmem:[%s233] sm:%s225] %v234
          $region166: #{tpu_custom_call.1} parent=160 // loop_footer
            %s231 = sadd.s32 1, %s227
          $region167: #{tpu_custom_call.1} parent=160 // loop_footer_branch
            %226 = sbr.rel target = $region163
          $region168: #{tpu_custom_call.1} parent=160 // loop_exit
            _
        $region161: #{tpu_custom_call.1} parent=145 // pred_fallthru
          _
      $region146: #{tpu_custom_call.1} parent=141 // pred_fallthru
        _
      // Predicated region
      $region147: #{tpu_custom_call.1} parent=141 // pred_check
        _
      $region148: #{tpu_custom_call.1} parent=141 // pred_check_branch
        %209 = sbr.rel (0) target = $region150
      $region149: #{tpu_custom_call.1} parent=141 // pred_region
        %s211 = ssub.s32 2, 1
        loop: start=0, step=1, limit=1
        $region151: #{tpu_custom_call.1} parent=149 // loop_pre_header
          _
        $region152: #{tpu_custom_call.1} parent=149 // loop_header
          %s213 = sphi 0, %s217
          %p214 = scmp.ge.s32.totalorder %s213, 1
          %s218 = sphi %s202, %s202
          %s219 = sphi %s205, %s205
        $region153: #{tpu_custom_call.1} parent=149 // loop_header_branch
          %216 = sbr.rel (%p214) target = $region157
        $region154: #{tpu_custom_call.1} parent=149 // loop_body
          %v220 = vld [vmem:[%s218] sm:%s211]
          %221 = vst [vmem:[%s219] sm:%s211] %v220
        $region155: #{tpu_custom_call.1} parent=149 // loop_footer
          %s217 = sadd.s32 1, %s213
        $region156: #{tpu_custom_call.1} parent=149 // loop_footer_branch
          %212 = sbr.rel target = $region152
        $region157: #{tpu_custom_call.1} parent=149 // loop_exit
          _
      $region150: #{tpu_custom_call.1} parent=141 // pred_fallthru
        _
      // Predicated region
      $region169: #{tpu_custom_call.1} parent=141 // pred_check
        _
      $region170: #{tpu_custom_call.1} parent=141 // pred_check_branch
        %238 = sbr.rel (0) target = $region172
      $region171: #{tpu_custom_call.1} parent=141 // pred_region
        %239 = vsyncadd [#allocation4], 16
      $region172: #{tpu_custom_call.1} parent=141 // pred_fallthru
        _
    $region142: #{tpu_custom_call.1} parent=33 // pred_fallthru
      _
    %p240 = scmp.gt.s32.totalorder %s64, 4
    // Predicated region
    $region173: #{tpu_custom_call.1} parent=33 // pred_check
      %p241 = pneg %p240
    $region174: #{tpu_custom_call.1} parent=33 // pred_check_branch
      %243 = sbr.rel (%p241) target = $region176
    $region175: #{tpu_custom_call.1} parent=33 // pred_region
      %s244 = sadd.s32 %s65, 4
      %s245 = sld [smem:[#allocation6 + %s244]]
      %s246 = scalar_lea.vmem %s4, %s245
      %s247 = smul.u32 %s58, 8
      %s248 = sadd.s32 4, %s247
      %s249 = scalar_lea.vmem [#allocation2], %s248
      // Predicated region
      $region177: #{tpu_custom_call.1} parent=175 // pred_check
        _
      $region178: #{tpu_custom_call.1} parent=175 // pred_check_branch
        %251 = sbr.rel target = $region180
      $region179: #{tpu_custom_call.1} parent=175 // pred_region
        // Predicated region
        $region192: #{tpu_custom_call.1} parent=179 // pred_check
          _
        $region193: #{tpu_custom_call.1} parent=179 // pred_check_branch
          %267 = sbr.rel (0) target = $region195
        $region194: #{tpu_custom_call.1} parent=179 // pred_region
          %s269 = ssub.s32 2, 1
          loop: start=0, step=1, limit=1
          $region196: #{tpu_custom_call.1} parent=194 // loop_pre_header
            _
          $region197: #{tpu_custom_call.1} parent=194 // loop_header
            %s271 = sphi 0, %s275
            %p272 = scmp.ge.s32.totalorder %s271, 1
            %s276 = sphi %s246, %s246
            %s277 = sphi %s249, %s249
          $region198: #{tpu_custom_call.1} parent=194 // loop_header_branch
            %274 = sbr.rel (%p272) target = $region202
          $region199: #{tpu_custom_call.1} parent=194 // loop_body
            %v278 = vld [vmem:[%s276] sm:%s269]
            %279 = vst [vmem:[%s277] sm:%s269] %v278
          $region200: #{tpu_custom_call.1} parent=194 // loop_footer
            %s275 = sadd.s32 1, %s271
          $region201: #{tpu_custom_call.1} parent=194 // loop_footer_branch
            %270 = sbr.rel target = $region197
          $region202: #{tpu_custom_call.1} parent=194 // loop_exit
            _
        $region195: #{tpu_custom_call.1} parent=179 // pred_fallthru
          _
      $region180: #{tpu_custom_call.1} parent=175 // pred_fallthru
        _
      // Predicated region
      $region181: #{tpu_custom_call.1} parent=175 // pred_check
        _
      $region182: #{tpu_custom_call.1} parent=175 // pred_check_branch
        %253 = sbr.rel (0) target = $region184
      $region183: #{tpu_custom_call.1} parent=175 // pred_region
        %s255 = ssub.s32 2, 1
        loop: start=0, step=1, limit=1
        $region185: #{tpu_custom_call.1} parent=183 // loop_pre_header
          _
        $region186: #{tpu_custom_call.1} parent=183 // loop_header
          %s257 = sphi 0, %s261
          %p258 = scmp.ge.s32.totalorder %s257, 1
          %s262 = sphi %s246, %s246
          %s263 = sphi %s249, %s249
        $region187: #{tpu_custom_call.1} parent=183 // loop_header_branch
          %260 = sbr.rel (%p258) target = $region191
        $region188: #{tpu_custom_call.1} parent=183 // loop_body
          %v264 = vld [vmem:[%s262] sm:%s255]
          %265 = vst [vmem:[%s263] sm:%s255] %v264
        $region189: #{tpu_custom_call.1} parent=183 // loop_footer
          %s261 = sadd.s32 1, %s257
        $region190: #{tpu_custom_call.1} parent=183 // loop_footer_branch
          %256 = sbr.rel target = $region186
        $region191: #{tpu_custom_call.1} parent=183 // loop_exit
          _
      $region184: #{tpu_custom_call.1} parent=175 // pred_fallthru
        _
      // Predicated region
      $region203: #{tpu_custom_call.1} parent=175 // pred_check
        _
      $region204: #{tpu_custom_call.1} parent=175 // pred_check_branch
        %282 = sbr.rel (0) target = $region206
      $region205: #{tpu_custom_call.1} parent=175 // pred_region
        %283 = vsyncadd [#allocation4], 16
      $region206: #{tpu_custom_call.1} parent=175 // pred_fallthru
        _
    $region176: #{tpu_custom_call.1} parent=33 // pred_fallthru
      _
    %p284 = scmp.gt.s32.totalorder %s64, 5
    // Predicated region
    $region207: #{tpu_custom_call.1} parent=33 // pred_check
      %p285 = pneg %p284
    $region208: #{tpu_custom_call.1} parent=33 // pred_check_branch
      %287 = sbr.rel (%p285) target = $region210
    $region209: #{tpu_custom_call.1} parent=33 // pred_region
      %s288 = sadd.s32 %s65, 5
      %s289 = sld [smem:[#allocation6 + %s288]]
      %s290 = scalar_lea.vmem %s4, %s289
      %s291 = smul.u32 %s58, 8
      %s292 = sadd.s32 5, %s291
      %s293 = scalar_lea.vmem [#allocation2], %s292
      // Predicated region
      $region211: #{tpu_custom_call.1} parent=209 // pred_check
        _
      $region212: #{tpu_custom_call.1} parent=209 // pred_check_branch
        %295 = sbr.rel target = $region214
      $region213: #{tpu_custom_call.1} parent=209 // pred_region
        // Predicated region
        $region226: #{tpu_custom_call.1} parent=213 // pred_check
          _
        $region227: #{tpu_custom_call.1} parent=213 // pred_check_branch
          %311 = sbr.rel (0) target = $region229
        $region228: #{tpu_custom_call.1} parent=213 // pred_region
          %s313 = ssub.s32 2, 1
          loop: start=0, step=1, limit=1
          $region230: #{tpu_custom_call.1} parent=228 // loop_pre_header
            _
          $region231: #{tpu_custom_call.1} parent=228 // loop_header
            %s315 = sphi 0, %s319
            %p316 = scmp.ge.s32.totalorder %s315, 1
            %s320 = sphi %s290, %s290
            %s321 = sphi %s293, %s293
          $region232: #{tpu_custom_call.1} parent=228 // loop_header_branch
            %318 = sbr.rel (%p316) target = $region236
          $region233: #{tpu_custom_call.1} parent=228 // loop_body
            %v322 = vld [vmem:[%s320] sm:%s313]
            %323 = vst [vmem:[%s321] sm:%s313] %v322
          $region234: #{tpu_custom_call.1} parent=228 // loop_footer
            %s319 = sadd.s32 1, %s315
          $region235: #{tpu_custom_call.1} parent=228 // loop_footer_branch
            %314 = sbr.rel target = $region231
          $region236: #{tpu_custom_call.1} parent=228 // loop_exit
            _
        $region229: #{tpu_custom_call.1} parent=213 // pred_fallthru
          _
      $region214: #{tpu_custom_call.1} parent=209 // pred_fallthru
        _
      // Predicated region
      $region215: #{tpu_custom_call.1} parent=209 // pred_check
        _
      $region216: #{tpu_custom_call.1} parent=209 // pred_check_branch
        %297 = sbr.rel (0) target = $region218
      $region217: #{tpu_custom_call.1} parent=209 // pred_region
        %s299 = ssub.s32 2, 1
        loop: start=0, step=1, limit=1
        $region219: #{tpu_custom_call.1} parent=217 // loop_pre_header
          _
        $region220: #{tpu_custom_call.1} parent=217 // loop_header
          %s301 = sphi 0, %s305
          %p302 = scmp.ge.s32.totalorder %s301, 1
          %s306 = sphi %s290, %s290
          %s307 = sphi %s293, %s293
        $region221: #{tpu_custom_call.1} parent=217 // loop_header_branch
          %304 = sbr.rel (%p302) target = $region225
        $region222: #{tpu_custom_call.1} parent=217 // loop_body
          %v308 = vld [vmem:[%s306] sm:%s299]
          %309 = vst [vmem:[%s307] sm:%s299] %v308
        $region223: #{tpu_custom_call.1} parent=217 // loop_footer
          %s305 = sadd.s32 1, %s301
        $region224: #{tpu_custom_call.1} parent=217 // loop_footer_branch
          %300 = sbr.rel target = $region220
        $region225: #{tpu_custom_call.1} parent=217 // loop_exit
          _
      $region218: #{tpu_custom_call.1} parent=209 // pred_fallthru
        _
      // Predicated region
      $region237: #{tpu_custom_call.1} parent=209 // pred_check
        _
      $region238: #{tpu_custom_call.1} parent=209 // pred_check_branch
        %326 = sbr.rel (0) target = $region240
      $region239: #{tpu_custom_call.1} parent=209 // pred_region
        %327 = vsyncadd [#allocation4], 16
      $region240: #{tpu_custom_call.1} parent=209 // pred_fallthru
        _
    $region210: #{tpu_custom_call.1} parent=33 // pred_fallthru
      _
    %p328 = scmp.gt.s32.totalorder %s64, 6
    // Predicated region
    $region241: #{tpu_custom_call.1} parent=33 // pred_check
      %p329 = pneg %p328
    $region242: #{tpu_custom_call.1} parent=33 // pred_check_branch
      %331 = sbr.rel (%p329) target = $region244
    $region243: #{tpu_custom_call.1} parent=33 // pred_region
      %s332 = sadd.s32 %s65, 6
      %s333 = sld [smem:[#allocation6 + %s332]]
      %s334 = scalar_lea.vmem %s4, %s333
      %s335 = smul.u32 %s58, 8
      %s336 = sadd.s32 6, %s335
      %s337 = scalar_lea.vmem [#allocation2], %s336
      // Predicated region
      $region245: #{tpu_custom_call.1} parent=243 // pred_check
        _
      $region246: #{tpu_custom_call.1} parent=243 // pred_check_branch
        %339 = sbr.rel target = $region248
      $region247: #{tpu_custom_call.1} parent=243 // pred_region
        // Predicated region
        $region260: #{tpu_custom_call.1} parent=247 // pred_check
          _
        $region261: #{tpu_custom_call.1} parent=247 // pred_check_branch
          %355 = sbr.rel (0) target = $region263
        $region262: #{tpu_custom_call.1} parent=247 // pred_region
          %s357 = ssub.s32 2, 1
          loop: start=0, step=1, limit=1
          $region264: #{tpu_custom_call.1} parent=262 // loop_pre_header
            _
          $region265: #{tpu_custom_call.1} parent=262 // loop_header
            %s359 = sphi 0, %s363
            %p360 = scmp.ge.s32.totalorder %s359, 1
            %s364 = sphi %s334, %s334
            %s365 = sphi %s337, %s337
          $region266: #{tpu_custom_call.1} parent=262 // loop_header_branch
            %362 = sbr.rel (%p360) target = $region270
          $region267: #{tpu_custom_call.1} parent=262 // loop_body
            %v366 = vld [vmem:[%s364] sm:%s357]
            %367 = vst [vmem:[%s365] sm:%s357] %v366
          $region268: #{tpu_custom_call.1} parent=262 // loop_footer
            %s363 = sadd.s32 1, %s359
          $region269: #{tpu_custom_call.1} parent=262 // loop_footer_branch
            %358 = sbr.rel target = $region265
          $region270: #{tpu_custom_call.1} parent=262 // loop_exit
            _
        $region263: #{tpu_custom_call.1} parent=247 // pred_fallthru
          _
      $region248: #{tpu_custom_call.1} parent=243 // pred_fallthru
        _
      // Predicated region
      $region249: #{tpu_custom_call.1} parent=243 // pred_check
        _
      $region250: #{tpu_custom_call.1} parent=243 // pred_check_branch
        %341 = sbr.rel (0) target = $region252
      $region251: #{tpu_custom_call.1} parent=243 // pred_region
        %s343 = ssub.s32 2, 1
        loop: start=0, step=1, limit=1
        $region253: #{tpu_custom_call.1} parent=251 // loop_pre_header
          _
        $region254: #{tpu_custom_call.1} parent=251 // loop_header
          %s345 = sphi 0, %s349
          %p346 = scmp.ge.s32.totalorder %s345, 1
          %s350 = sphi %s334, %s334
          %s351 = sphi %s337, %s337
        $region255: #{tpu_custom_call.1} parent=251 // loop_header_branch
          %348 = sbr.rel (%p346) target = $region259
        $region256: #{tpu_custom_call.1} parent=251 // loop_body
          %v352 = vld [vmem:[%s350] sm:%s343]
          %353 = vst [vmem:[%s351] sm:%s343] %v352
        $region257: #{tpu_custom_call.1} parent=251 // loop_footer
          %s349 = sadd.s32 1, %s345
        $region258: #{tpu_custom_call.1} parent=251 // loop_footer_branch
          %344 = sbr.rel target = $region254
        $region259: #{tpu_custom_call.1} parent=251 // loop_exit
          _
      $region252: #{tpu_custom_call.1} parent=243 // pred_fallthru
        _
      // Predicated region
      $region271: #{tpu_custom_call.1} parent=243 // pred_check
        _
      $region272: #{tpu_custom_call.1} parent=243 // pred_check_branch
        %370 = sbr.rel (0) target = $region274
      $region273: #{tpu_custom_call.1} parent=243 // pred_region
        %371 = vsyncadd [#allocation4], 16
      $region274: #{tpu_custom_call.1} parent=243 // pred_fallthru
        _
    $region244: #{tpu_custom_call.1} parent=33 // pred_fallthru
      _
    %p372 = scmp.gt.s32.totalorder %s64, 7
    // Predicated region
    $region275: #{tpu_custom_call.1} parent=33 // pred_check
      %p373 = pneg %p372
    $region276: #{tpu_custom_call.1} parent=33 // pred_check_branch
      %375 = sbr.rel (%p373) target = $region278
    $region277: #{tpu_custom_call.1} parent=33 // pred_region
      %s376 = sadd.s32 %s65, 7
      %s377 = sld [smem:[#allocation6 + %s376]]
      %s378 = scalar_lea.vmem %s4, %s377
      %s379 = smul.u32 %s58, 8
      %s380 = sadd.s32 7, %s379
      %s381 = scalar_lea.vmem [#allocation2], %s380
      // Predicated region
      $region279: #{tpu_custom_call.1} parent=277 // pred_check
        _
      $region280: #{tpu_custom_call.1} parent=277 // pred_check_branch
        %383 = sbr.rel target = $region282
      $region281: #{tpu_custom_call.1} parent=277 // pred_region
        // Predicated region
        $region294: #{tpu_custom_call.1} parent=281 // pred_check
          _
        $region295: #{tpu_custom_call.1} parent=281 // pred_check_branch
          %399 = sbr.rel (0) target = $region297
        $region296: #{tpu_custom_call.1} parent=281 // pred_region
          %s401 = ssub.s32 2, 1
          loop: start=0, step=1, limit=1
          $region298: #{tpu_custom_call.1} parent=296 // loop_pre_header
            _
          $region299: #{tpu_custom_call.1} parent=296 // loop_header
            %s403 = sphi 0, %s407
            %p404 = scmp.ge.s32.totalorder %s403, 1
            %s408 = sphi %s378, %s378
            %s409 = sphi %s381, %s381
          $region300: #{tpu_custom_call.1} parent=296 // loop_header_branch
            %406 = sbr.rel (%p404) target = $region304
          $region301: #{tpu_custom_call.1} parent=296 // loop_body
            %v410 = vld [vmem:[%s408] sm:%s401]
            %411 = vst [vmem:[%s409] sm:%s401] %v410
          $region302: #{tpu_custom_call.1} parent=296 // loop_footer
            %s407 = sadd.s32 1, %s403
          $region303: #{tpu_custom_call.1} parent=296 // loop_footer_branch
            %402 = sbr.rel target = $region299
          $region304: #{tpu_custom_call.1} parent=296 // loop_exit
            _
        $region297: #{tpu_custom_call.1} parent=281 // pred_fallthru
          _
      $region282: #{tpu_custom_call.1} parent=277 // pred_fallthru
        _
      // Predicated region
      $region283: #{tpu_custom_call.1} parent=277 // pred_check
        _
      $region284: #{tpu_custom_call.1} parent=277 // pred_check_branch
        %385 = sbr.rel (0) target = $region286
      $region285: #{tpu_custom_call.1} parent=277 // pred_region
        %s387 = ssub.s32 2, 1
        loop: start=0, step=1, limit=1
        $region287: #{tpu_custom_call.1} parent=285 // loop_pre_header
          _
        $region288: #{tpu_custom_call.1} parent=285 // loop_header
          %s389 = sphi 0, %s393
          %p390 = scmp.ge.s32.totalorder %s389, 1
          %s394 = sphi %s378, %s378
          %s395 = sphi %s381, %s381
        $region289: #{tpu_custom_call.1} parent=285 // loop_header_branch
          %392 = sbr.rel (%p390) target = $region293
        $region290: #{tpu_custom_call.1} parent=285 // loop_body
          %v396 = vld [vmem:[%s394] sm:%s387]
          %397 = vst [vmem:[%s395] sm:%s387] %v396
        $region291: #{tpu_custom_call.1} parent=285 // loop_footer
          %s393 = sadd.s32 1, %s389
        $region292: #{tpu_custom_call.1} parent=285 // loop_footer_branch
          %388 = sbr.rel target = $region288
        $region293: #{tpu_custom_call.1} parent=285 // loop_exit
          _
      $region286: #{tpu_custom_call.1} parent=277 // pred_fallthru
        _
      // Predicated region
      $region305: #{tpu_custom_call.1} parent=277 // pred_check
        _
      $region306: #{tpu_custom_call.1} parent=277 // pred_check_branch
        %414 = sbr.rel (0) target = $region308
      $region307: #{tpu_custom_call.1} parent=277 // pred_region
        %415 = vsyncadd [#allocation4], 16
      $region308: #{tpu_custom_call.1} parent=277 // pred_fallthru
        _
    $region278: #{tpu_custom_call.1} parent=33 // pred_fallthru
      _
  $region34: #{tpu_custom_call.1} parent=0 // loop_footer
    %s62 = sadd.s32 1, %s58
  $region35: #{tpu_custom_call.1} parent=0 // loop_footer_branch
    %57 = sbr.rel target = $region31
  $region36: #{tpu_custom_call.1} parent=0 // loop_exit
    _
  loop: start=0, step=1, limit=8
  $region309: #{tpu_custom_call.1} parent=0 // loop_pre_header
    _
  $region310: #{tpu_custom_call.1} parent=0 // loop_header
    %s417 = sphi 0, %s421
    %p418 = scmp.ge.s32.totalorder %s417, 8
  $region311: #{tpu_custom_call.1} parent=0 // loop_header_branch
    %420 = sbr.rel (%p418) target = $region315
  $region312: #{tpu_custom_call.1} parent=0 // loop_body
    %s422 = sadd.s32 %s56, %s417
    %s423 = sld [smem:[#allocation9 + %s422]]
    %s424 = smul.u32 %s422, 8
    %p425 = scmp.gt.s32.totalorder %s423, 0
    // Predicated region
    $region316: #{tpu_custom_call.1} parent=312 // pred_check
      %p426 = pneg %p425
    $region317: #{tpu_custom_call.1} parent=312 // pred_check_branch
      %428 = sbr.rel (%p426) target = $region319
    $region318: #{tpu_custom_call.1} parent=312 // pred_region
      %s429 = sld [smem:[#allocation7 + %s424]]
      %s430 = scalar_lea.vmem %s4, %s429
      %s431 = smul.u32 %s417, 8
      %s432 = scalar_lea.vmem [#allocation3], %s431
      %s433 = scalar_lea.sflag [#allocation4], 1
      // Predicated region
      $region320: #{tpu_custom_call.1} parent=318 // pred_check
        _
      $region321: #{tpu_custom_call.1} parent=318 // pred_check_branch
        %435 = sbr.rel target = $region323
      $region322: #{tpu_custom_call.1} parent=318 // pred_region
        // Predicated region
        $region335: #{tpu_custom_call.1} parent=322 // pred_check
          _
        $region336: #{tpu_custom_call.1} parent=322 // pred_check_branch
          %451 = sbr.rel (0) target = $region338
        $region337: #{tpu_custom_call.1} parent=322 // pred_region
          %s453 = ssub.s32 2, 1
          loop: start=0, step=1, limit=1
          $region339: #{tpu_custom_call.1} parent=337 // loop_pre_header
            _
          $region340: #{tpu_custom_call.1} parent=337 // loop_header
            %s455 = sphi 0, %s459
            %p456 = scmp.ge.s32.totalorder %s455, 1
            %s460 = sphi %s430, %s430
            %s461 = sphi %s432, %s432
          $region341: #{tpu_custom_call.1} parent=337 // loop_header_branch
            %458 = sbr.rel (%p456) target = $region345
          $region342: #{tpu_custom_call.1} parent=337 // loop_body
            %v462 = vld [vmem:[%s460] sm:%s453]
            %463 = vst [vmem:[%s461] sm:%s453] %v462
          $region343: #{tpu_custom_call.1} parent=337 // loop_footer
            %s459 = sadd.s32 1, %s455
          $region344: #{tpu_custom_call.1} parent=337 // loop_footer_branch
            %454 = sbr.rel target = $region340
          $region345: #{tpu_custom_call.1} parent=337 // loop_exit
            _
        $region338: #{tpu_custom_call.1} parent=322 // pred_fallthru
          _
      $region323: #{tpu_custom_call.1} parent=318 // pred_fallthru
        _
      // Predicated region
      $region324: #{tpu_custom_call.1} parent=318 // pred_check
        _
      $region325: #{tpu_custom_call.1} parent=318 // pred_check_branch
        %437 = sbr.rel (0) target = $region327
      $region326: #{tpu_custom_call.1} parent=318 // pred_region
        %s439 = ssub.s32 2, 1
        loop: start=0, step=1, limit=1
        $region328: #{tpu_custom_call.1} parent=326 // loop_pre_header
          _
        $region329: #{tpu_custom_call.1} parent=326 // loop_header
          %s441 = sphi 0, %s445
          %p442 = scmp.ge.s32.totalorder %s441, 1
          %s446 = sphi %s430, %s430
          %s447 = sphi %s432, %s432
        $region330: #{tpu_custom_call.1} parent=326 // loop_header_branch
          %444 = sbr.rel (%p442) target = $region334
        $region331: #{tpu_custom_call.1} parent=326 // loop_body
          %v448 = vld [vmem:[%s446] sm:%s439]
          %449 = vst [vmem:[%s447] sm:%s439] %v448
        $region332: #{tpu_custom_call.1} parent=326 // loop_footer
          %s445 = sadd.s32 1, %s441
        $region333: #{tpu_custom_call.1} parent=326 // loop_footer_branch
          %440 = sbr.rel target = $region329
        $region334: #{tpu_custom_call.1} parent=326 // loop_exit
          _
      $region327: #{tpu_custom_call.1} parent=318 // pred_fallthru
        _
      // Predicated region
      $region346: #{tpu_custom_call.1} parent=318 // pred_check
        _
      $region347: #{tpu_custom_call.1} parent=318 // pred_check_branch
        %466 = sbr.rel (0) target = $region349
      $region348: #{tpu_custom_call.1} parent=318 // pred_region
        %467 = vsyncadd %s433, 16
      $region349: #{tpu_custom_call.1} parent=318 // pred_fallthru
        _
    $region319: #{tpu_custom_call.1} parent=312 // pred_fallthru
      _
    %p468 = scmp.gt.s32.totalorder %s423, 1
    // Predicated region
    $region350: #{tpu_custom_call.1} parent=312 // pred_check
      %p469 = pneg %p468
    $region351: #{tpu_custom_call.1} parent=312 // pred_check_branch
      %471 = sbr.rel (%p469) target = $region353
    $region352: #{tpu_custom_call.1} parent=312 // pred_region
      %s472 = sadd.s32 %s424, 1
      %s473 = sld [smem:[#allocation7 + %s472]]
      %s474 = scalar_lea.vmem %s4, %s473
      %s475 = smul.u32 %s417, 8
      %s476 = sadd.s32 1, %s475
      %s477 = scalar_lea.vmem [#allocation3], %s476
      %s478 = scalar_lea.sflag [#allocation4], 1
      // Predicated region
      $region354: #{tpu_custom_call.1} parent=352 // pred_check
        _
      $region355: #{tpu_custom_call.1} parent=352 // pred_check_branch
        %480 = sbr.rel target = $region357
      $region356: #{tpu_custom_call.1} parent=352 // pred_region
        // Predicated region
        $region369: #{tpu_custom_call.1} parent=356 // pred_check
          _
        $region370: #{tpu_custom_call.1} parent=356 // pred_check_branch
          %496 = sbr.rel (0) target = $region372
        $region371: #{tpu_custom_call.1} parent=356 // pred_region
          %s498 = ssub.s32 2, 1
          loop: start=0, step=1, limit=1
          $region373: #{tpu_custom_call.1} parent=371 // loop_pre_header
            _
          $region374: #{tpu_custom_call.1} parent=371 // loop_header
            %s500 = sphi 0, %s504
            %p501 = scmp.ge.s32.totalorder %s500, 1
            %s505 = sphi %s474, %s474
            %s506 = sphi %s477, %s477
          $region375: #{tpu_custom_call.1} parent=371 // loop_header_branch
            %503 = sbr.rel (%p501) target = $region379
          $region376: #{tpu_custom_call.1} parent=371 // loop_body
            %v507 = vld [vmem:[%s505] sm:%s498]
            %508 = vst [vmem:[%s506] sm:%s498] %v507
          $region377: #{tpu_custom_call.1} parent=371 // loop_footer
            %s504 = sadd.s32 1, %s500
          $region378: #{tpu_custom_call.1} parent=371 // loop_footer_branch
            %499 = sbr.rel target = $region374
          $region379: #{tpu_custom_call.1} parent=371 // loop_exit
            _
        $region372: #{tpu_custom_call.1} parent=356 // pred_fallthru
          _
      $region357: #{tpu_custom_call.1} parent=352 // pred_fallthru
        _
      // Predicated region
      $region358: #{tpu_custom_call.1} parent=352 // pred_check
        _
      $region359: #{tpu_custom_call.1} parent=352 // pred_check_branch
        %482 = sbr.rel (0) target = $region361
      $region360: #{tpu_custom_call.1} parent=352 // pred_region
        %s484 = ssub.s32 2, 1
        loop: start=0, step=1, limit=1
        $region362: #{tpu_custom_call.1} parent=360 // loop_pre_header
          _
        $region363: #{tpu_custom_call.1} parent=360 // loop_header
          %s486 = sphi 0, %s490
          %p487 = scmp.ge.s32.totalorder %s486, 1
          %s491 = sphi %s474, %s474
          %s492 = sphi %s477, %s477
        $region364: #{tpu_custom_call.1} parent=360 // loop_header_branch
          %489 = sbr.rel (%p487) target = $region368
        $region365: #{tpu_custom_call.1} parent=360 // loop_body
          %v493 = vld [vmem:[%s491] sm:%s484]
          %494 = vst [vmem:[%s492] sm:%s484] %v493
        $region366: #{tpu_custom_call.1} parent=360 // loop_footer
          %s490 = sadd.s32 1, %s486
        $region367: #{tpu_custom_call.1} parent=360 // loop_footer_branch
          %485 = sbr.rel target = $region363
        $region368: #{tpu_custom_call.1} parent=360 // loop_exit
          _
      $region361: #{tpu_custom_call.1} parent=352 // pred_fallthru
        _
      // Predicated region
      $region380: #{tpu_custom_call.1} parent=352 // pred_check
        _
      $region381: #{tpu_custom_call.1} parent=352 // pred_check_branch
        %511 = sbr.rel (0) target = $region383
      $region382: #{tpu_custom_call.1} parent=352 // pred_region
        %512 = vsyncadd %s478, 16
      $region383: #{tpu_custom_call.1} parent=352 // pred_fallthru
        _
    $region353: #{tpu_custom_call.1} parent=312 // pred_fallthru
      _
    %p513 = scmp.gt.s32.totalorder %s423, 2
    // Predicated region
    $region384: #{tpu_custom_call.1} parent=312 // pred_check
      %p514 = pneg %p513
    $region385: #{tpu_custom_call.1} parent=312 // pred_check_branch
      %516 = sbr.rel (%p514) target = $region387
    $region386: #{tpu_custom_call.1} parent=312 // pred_region
      %s517 = sadd.s32 %s424, 2
      %s518 = sld [smem:[#allocation7 + %s517]]
      %s519 = scalar_lea.vmem %s4, %s518
      %s520 = smul.u32 %s417, 8
      %s521 = sadd.s32 2, %s520
      %s522 = scalar_lea.vmem [#allocation3], %s521
      %s523 = scalar_lea.sflag [#allocation4], 1
      // Predicated region
      $region388: #{tpu_custom_call.1} parent=386 // pred_check
        _
      $region389: #{tpu_custom_call.1} parent=386 // pred_check_branch
        %525 = sbr.rel target = $region391
      $region390: #{tpu_custom_call.1} parent=386 // pred_region
        // Predicated region
        $region403: #{tpu_custom_call.1} parent=390 // pred_check
          _
        $region404: #{tpu_custom_call.1} parent=390 // pred_check_branch
          %541 = sbr.rel (0) target = $region406
        $region405: #{tpu_custom_call.1} parent=390 // pred_region
          %s543 = ssub.s32 2, 1
          loop: start=0, step=1, limit=1
          $region407: #{tpu_custom_call.1} parent=405 // loop_pre_header
            _
          $region408: #{tpu_custom_call.1} parent=405 // loop_header
            %s545 = sphi 0, %s549
            %p546 = scmp.ge.s32.totalorder %s545, 1
            %s550 = sphi %s519, %s519
            %s551 = sphi %s522, %s522
          $region409: #{tpu_custom_call.1} parent=405 // loop_header_branch
            %548 = sbr.rel (%p546) target = $region413
          $region410: #{tpu_custom_call.1} parent=405 // loop_body
            %v552 = vld [vmem:[%s550] sm:%s543]
            %553 = vst [vmem:[%s551] sm:%s543] %v552
          $region411: #{tpu_custom_call.1} parent=405 // loop_footer
            %s549 = sadd.s32 1, %s545
          $region412: #{tpu_custom_call.1} parent=405 // loop_footer_branch
            %544 = sbr.rel target = $region408
          $region413: #{tpu_custom_call.1} parent=405 // loop_exit
            _
        $region406: #{tpu_custom_call.1} parent=390 // pred_fallthru
          _
      $region391: #{tpu_custom_call.1} parent=386 // pred_fallthru
        _
      // Predicated region
      $region392: #{tpu_custom_call.1} parent=386 // pred_check
        _
      $region393: #{tpu_custom_call.1} parent=386 // pred_check_branch
        %527 = sbr.rel (0) target = $region395
      $region394: #{tpu_custom_call.1} parent=386 // pred_region
        %s529 = ssub.s32 2, 1
        loop: start=0, step=1, limit=1
        $region396: #{tpu_custom_call.1} parent=394 // loop_pre_header
          _
        $region397: #{tpu_custom_call.1} parent=394 // loop_header
          %s531 = sphi 0, %s535
          %p532 = scmp.ge.s32.totalorder %s531, 1
          %s536 = sphi %s519, %s519
          %s537 = sphi %s522, %s522
        $region398: #{tpu_custom_call.1} parent=394 // loop_header_branch
          %534 = sbr.rel (%p532) target = $region402
        $region399: #{tpu_custom_call.1} parent=394 // loop_body
          %v538 = vld [vmem:[%s536] sm:%s529]
          %539 = vst [vmem:[%s537] sm:%s529] %v538
        $region400: #{tpu_custom_call.1} parent=394 // loop_footer
          %s535 = sadd.s32 1, %s531
        $region401: #{tpu_custom_call.1} parent=394 // loop_footer_branch
          %530 = sbr.rel target = $region397
        $region402: #{tpu_custom_call.1} parent=394 // loop_exit
          _
      $region395: #{tpu_custom_call.1} parent=386 // pred_fallthru
        _
      // Predicated region
      $region414: #{tpu_custom_call.1} parent=386 // pred_check
        _
      $region415: #{tpu_custom_call.1} parent=386 // pred_check_branch
        %556 = sbr.rel (0) target = $region417
      $region416: #{tpu_custom_call.1} parent=386 // pred_region
        %557 = vsyncadd %s523, 16
      $region417: #{tpu_custom_call.1} parent=386 // pred_fallthru
        _
    $region387: #{tpu_custom_call.1} parent=312 // pred_fallthru
      _
    %p558 = scmp.gt.s32.totalorder %s423, 3
    // Predicated region
    $region418: #{tpu_custom_call.1} parent=312 // pred_check
      %p559 = pneg %p558
    $region419: #{tpu_custom_call.1} parent=312 // pred_check_branch
      %561 = sbr.rel (%p559) target = $region421
    $region420: #{tpu_custom_call.1} parent=312 // pred_region
      %s562 = sadd.s32 %s424, 3
      %s563 = sld [smem:[#allocation7 + %s562]]
      %s564 = scalar_lea.vmem %s4, %s563
      %s565 = smul.u32 %s417, 8
      %s566 = sadd.s32 3, %s565
      %s567 = scalar_lea.vmem [#allocation3], %s566
      %s568 = scalar_lea.sflag [#allocation4], 1
      // Predicated region
      $region422: #{tpu_custom_call.1} parent=420 // pred_check
        _
      $region423: #{tpu_custom_call.1} parent=420 // pred_check_branch
        %570 = sbr.rel target = $region425
      $region424: #{tpu_custom_call.1} parent=420 // pred_region
        // Predicated region
        $region437: #{tpu_custom_call.1} parent=424 // pred_check
          _
        $region438: #{tpu_custom_call.1} parent=424 // pred_check_branch
          %586 = sbr.rel (0) target = $region440
        $region439: #{tpu_custom_call.1} parent=424 // pred_region
          %s588 = ssub.s32 2, 1
          loop: start=0, step=1, limit=1
          $region441: #{tpu_custom_call.1} parent=439 // loop_pre_header
            _
          $region442: #{tpu_custom_call.1} parent=439 // loop_header
            %s590 = sphi 0, %s594
            %p591 = scmp.ge.s32.totalorder %s590, 1
            %s595 = sphi %s564, %s564
            %s596 = sphi %s567, %s567
          $region443: #{tpu_custom_call.1} parent=439 // loop_header_branch
            %593 = sbr.rel (%p591) target = $region447
          $region444: #{tpu_custom_call.1} parent=439 // loop_body
            %v597 = vld [vmem:[%s595] sm:%s588]
            %598 = vst [vmem:[%s596] sm:%s588] %v597
          $region445: #{tpu_custom_call.1} parent=439 // loop_footer
            %s594 = sadd.s32 1, %s590
          $region446: #{tpu_custom_call.1} parent=439 // loop_footer_branch
            %589 = sbr.rel target = $region442
          $region447: #{tpu_custom_call.1} parent=439 // loop_exit
            _
        $region440: #{tpu_custom_call.1} parent=424 // pred_fallthru
          _
      $region425: #{tpu_custom_call.1} parent=420 // pred_fallthru
        _
      // Predicated region
      $region426: #{tpu_custom_call.1} parent=420 // pred_check
        _
      $region427: #{tpu_custom_call.1} parent=420 // pred_check_branch
        %572 = sbr.rel (0) target = $region429
      $region428: #{tpu_custom_call.1} parent=420 // pred_region
        %s574 = ssub.s32 2, 1
        loop: start=0, step=1, limit=1
        $region430: #{tpu_custom_call.1} parent=428 // loop_pre_header
          _
        $region431: #{tpu_custom_call.1} parent=428 // loop_header
          %s576 = sphi 0, %s580
          %p577 = scmp.ge.s32.totalorder %s576, 1
          %s581 = sphi %s564, %s564
          %s582 = sphi %s567, %s567
        $region432: #{tpu_custom_call.1} parent=428 // loop_header_branch
          %579 = sbr.rel (%p577) target = $region436
        $region433: #{tpu_custom_call.1} parent=428 // loop_body
          %v583 = vld [vmem:[%s581] sm:%s574]
          %584 = vst [vmem:[%s582] sm:%s574] %v583
        $region434: #{tpu_custom_call.1} parent=428 // loop_footer
          %s580 = sadd.s32 1, %s576
        $region435: #{tpu_custom_call.1} parent=428 // loop_footer_branch
          %575 = sbr.rel target = $region431
        $region436: #{tpu_custom_call.1} parent=428 // loop_exit
          _
      $region429: #{tpu_custom_call.1} parent=420 // pred_fallthru
        _
      // Predicated region
      $region448: #{tpu_custom_call.1} parent=420 // pred_check
        _
      $region449: #{tpu_custom_call.1} parent=420 // pred_check_branch
        %601 = sbr.rel (0) target = $region451
      $region450: #{tpu_custom_call.1} parent=420 // pred_region
        %602 = vsyncadd %s568, 16
      $region451: #{tpu_custom_call.1} parent=420 // pred_fallthru
        _
    $region421: #{tpu_custom_call.1} parent=312 // pred_fallthru
      _
    %p603 = scmp.gt.s32.totalorder %s423, 4
    // Predicated region
    $region452: #{tpu_custom_call.1} parent=312 // pred_check
      %p604 = pneg %p603
    $region453: #{tpu_custom_call.1} parent=312 // pred_check_branch
      %606 = sbr.rel (%p604) target = $region455
    $region454: #{tpu_custom_call.1} parent=312 // pred_region
      %s607 = sadd.s32 %s424, 4
      %s608 = sld [smem:[#allocation7 + %s607]]
      %s609 = scalar_lea.vmem %s4, %s608
      %s610 = smul.u32 %s417, 8
      %s611 = sadd.s32 4, %s610
      %s612 = scalar_lea.vmem [#allocation3], %s611
      %s613 = scalar_lea.sflag [#allocation4], 1
      // Predicated region
      $region456: #{tpu_custom_call.1} parent=454 // pred_check
        _
      $region457: #{tpu_custom_call.1} parent=454 // pred_check_branch
        %615 = sbr.rel target = $region459
      $region458: #{tpu_custom_call.1} parent=454 // pred_region
        // Predicated region
        $region471: #{tpu_custom_call.1} parent=458 // pred_check
          _
        $region472: #{tpu_custom_call.1} parent=458 // pred_check_branch
          %631 = sbr.rel (0) target = $region474
        $region473: #{tpu_custom_call.1} parent=458 // pred_region
          %s633 = ssub.s32 2, 1
          loop: start=0, step=1, limit=1
          $region475: #{tpu_custom_call.1} parent=473 // loop_pre_header
            _
          $region476: #{tpu_custom_call.1} parent=473 // loop_header
            %s635 = sphi 0, %s639
            %p636 = scmp.ge.s32.totalorder %s635, 1
            %s640 = sphi %s609, %s609
            %s641 = sphi %s612, %s612
          $region477: #{tpu_custom_call.1} parent=473 // loop_header_branch
            %638 = sbr.rel (%p636) target = $region481
          $region478: #{tpu_custom_call.1} parent=473 // loop_body
            %v642 = vld [vmem:[%s640] sm:%s633]
            %643 = vst [vmem:[%s641] sm:%s633] %v642
          $region479: #{tpu_custom_call.1} parent=473 // loop_footer
            %s639 = sadd.s32 1, %s635
          $region480: #{tpu_custom_call.1} parent=473 // loop_footer_branch
            %634 = sbr.rel target = $region476
          $region481: #{tpu_custom_call.1} parent=473 // loop_exit
            _
        $region474: #{tpu_custom_call.1} parent=458 // pred_fallthru
          _
      $region459: #{tpu_custom_call.1} parent=454 // pred_fallthru
        _
      // Predicated region
      $region460: #{tpu_custom_call.1} parent=454 // pred_check
        _
      $region461: #{tpu_custom_call.1} parent=454 // pred_check_branch
        %617 = sbr.rel (0) target = $region463
      $region462: #{tpu_custom_call.1} parent=454 // pred_region
        %s619 = ssub.s32 2, 1
        loop: start=0, step=1, limit=1
        $region464: #{tpu_custom_call.1} parent=462 // loop_pre_header
          _
        $region465: #{tpu_custom_call.1} parent=462 // loop_header
          %s621 = sphi 0, %s625
          %p622 = scmp.ge.s32.totalorder %s621, 1
          %s626 = sphi %s609, %s609
          %s627 = sphi %s612, %s612
        $region466: #{tpu_custom_call.1} parent=462 // loop_header_branch
          %624 = sbr.rel (%p622) target = $region470
        $region467: #{tpu_custom_call.1} parent=462 // loop_body
          %v628 = vld [vmem:[%s626] sm:%s619]
          %629 = vst [vmem:[%s627] sm:%s619] %v628
        $region468: #{tpu_custom_call.1} parent=462 // loop_footer
          %s625 = sadd.s32 1, %s621
        $region469: #{tpu_custom_call.1} parent=462 // loop_footer_branch
          %620 = sbr.rel target = $region465
        $region470: #{tpu_custom_call.1} parent=462 // loop_exit
          _
      $region463: #{tpu_custom_call.1} parent=454 // pred_fallthru
        _
      // Predicated region
      $region482: #{tpu_custom_call.1} parent=454 // pred_check
        _
      $region483: #{tpu_custom_call.1} parent=454 // pred_check_branch
        %646 = sbr.rel (0) target = $region485
      $region484: #{tpu_custom_call.1} parent=454 // pred_region
        %647 = vsyncadd %s613, 16
      $region485: #{tpu_custom_call.1} parent=454 // pred_fallthru
        _
    $region455: #{tpu_custom_call.1} parent=312 // pred_fallthru
      _
    %p648 = scmp.gt.s32.totalorder %s423, 5
    // Predicated region
    $region486: #{tpu_custom_call.1} parent=312 // pred_check
      %p649 = pneg %p648
    $region487: #{tpu_custom_call.1} parent=312 // pred_check_branch
      %651 = sbr.rel (%p649) target = $region489
    $region488: #{tpu_custom_call.1} parent=312 // pred_region
      %s652 = sadd.s32 %s424, 5
      %s653 = sld [smem:[#allocation7 + %s652]]
      %s654 = scalar_lea.vmem %s4, %s653
      %s655 = smul.u32 %s417, 8
      %s656 = sadd.s32 5, %s655
      %s657 = scalar_lea.vmem [#allocation3], %s656
      %s658 = scalar_lea.sflag [#allocation4], 1
      // Predicated region
      $region490: #{tpu_custom_call.1} parent=488 // pred_check
        _
      $region491: #{tpu_custom_call.1} parent=488 // pred_check_branch
        %660 = sbr.rel target = $region493
      $region492: #{tpu_custom_call.1} parent=488 // pred_region
        // Predicated region
        $region505: #{tpu_custom_call.1} parent=492 // pred_check
          _
        $region506: #{tpu_custom_call.1} parent=492 // pred_check_branch
          %676 = sbr.rel (0) target = $region508
        $region507: #{tpu_custom_call.1} parent=492 // pred_region
          %s678 = ssub.s32 2, 1
          loop: start=0, step=1, limit=1
          $region509: #{tpu_custom_call.1} parent=507 // loop_pre_header
            _
          $region510: #{tpu_custom_call.1} parent=507 // loop_header
            %s680 = sphi 0, %s684
            %p681 = scmp.ge.s32.totalorder %s680, 1
            %s685 = sphi %s654, %s654
            %s686 = sphi %s657, %s657
          $region511: #{tpu_custom_call.1} parent=507 // loop_header_branch
            %683 = sbr.rel (%p681) target = $region515
          $region512: #{tpu_custom_call.1} parent=507 // loop_body
            %v687 = vld [vmem:[%s685] sm:%s678]
            %688 = vst [vmem:[%s686] sm:%s678] %v687
          $region513: #{tpu_custom_call.1} parent=507 // loop_footer
            %s684 = sadd.s32 1, %s680
          $region514: #{tpu_custom_call.1} parent=507 // loop_footer_branch
            %679 = sbr.rel target = $region510
          $region515: #{tpu_custom_call.1} parent=507 // loop_exit
            _
        $region508: #{tpu_custom_call.1} parent=492 // pred_fallthru
          _
      $region493: #{tpu_custom_call.1} parent=488 // pred_fallthru
        _
      // Predicated region
      $region494: #{tpu_custom_call.1} parent=488 // pred_check
        _
      $region495: #{tpu_custom_call.1} parent=488 // pred_check_branch
        %662 = sbr.rel (0) target = $region497
      $region496: #{tpu_custom_call.1} parent=488 // pred_region
        %s664 = ssub.s32 2, 1
        loop: start=0, step=1, limit=1
        $region498: #{tpu_custom_call.1} parent=496 // loop_pre_header
          _
        $region499: #{tpu_custom_call.1} parent=496 // loop_header
          %s666 = sphi 0, %s670
          %p667 = scmp.ge.s32.totalorder %s666, 1
          %s671 = sphi %s654, %s654
          %s672 = sphi %s657, %s657
        $region500: #{tpu_custom_call.1} parent=496 // loop_header_branch
          %669 = sbr.rel (%p667) target = $region504
        $region501: #{tpu_custom_call.1} parent=496 // loop_body
          %v673 = vld [vmem:[%s671] sm:%s664]
          %674 = vst [vmem:[%s672] sm:%s664] %v673
        $region502: #{tpu_custom_call.1} parent=496 // loop_footer
          %s670 = sadd.s32 1, %s666
        $region503: #{tpu_custom_call.1} parent=496 // loop_footer_branch
          %665 = sbr.rel target = $region499
        $region504: #{tpu_custom_call.1} parent=496 // loop_exit
          _
      $region497: #{tpu_custom_call.1} parent=488 // pred_fallthru
        _
      // Predicated region
      $region516: #{tpu_custom_call.1} parent=488 // pred_check
        _
      $region517: #{tpu_custom_call.1} parent=488 // pred_check_branch
        %691 = sbr.rel (0) target = $region519
      $region518: #{tpu_custom_call.1} parent=488 // pred_region
        %692 = vsyncadd %s658, 16
      $region519: #{tpu_custom_call.1} parent=488 // pred_fallthru
        _
    $region489: #{tpu_custom_call.1} parent=312 // pred_fallthru
      _
    %p693 = scmp.gt.s32.totalorder %s423, 6
    // Predicated region
    $region520: #{tpu_custom_call.1} parent=312 // pred_check
      %p694 = pneg %p693
    $region521: #{tpu_custom_call.1} parent=312 // pred_check_branch
      %696 = sbr.rel (%p694) target = $region523
    $region522: #{tpu_custom_call.1} parent=312 // pred_region
      %s697 = sadd.s32 %s424, 6
      %s698 = sld [smem:[#allocation7 + %s697]]
      %s699 = scalar_lea.vmem %s4, %s698
      %s700 = smul.u32 %s417, 8
      %s701 = sadd.s32 6, %s700
      %s702 = scalar_lea.vmem [#allocation3], %s701
      %s703 = scalar_lea.sflag [#allocation4], 1
      // Predicated region
      $region524: #{tpu_custom_call.1} parent=522 // pred_check
        _
      $region525: #{tpu_custom_call.1} parent=522 // pred_check_branch
        %705 = sbr.rel target = $region527
      $region526: #{tpu_custom_call.1} parent=522 // pred_region
        // Predicated region
        $region539: #{tpu_custom_call.1} parent=526 // pred_check
          _
        $region540: #{tpu_custom_call.1} parent=526 // pred_check_branch
          %721 = sbr.rel (0) target = $region542
        $region541: #{tpu_custom_call.1} parent=526 // pred_region
          %s723 = ssub.s32 2, 1
          loop: start=0, step=1, limit=1
          $region543: #{tpu_custom_call.1} parent=541 // loop_pre_header
            _
          $region544: #{tpu_custom_call.1} parent=541 // loop_header
            %s725 = sphi 0, %s729
            %p726 = scmp.ge.s32.totalorder %s725, 1
            %s730 = sphi %s699, %s699
            %s731 = sphi %s702, %s702
          $region545: #{tpu_custom_call.1} parent=541 // loop_header_branch
            %728 = sbr.rel (%p726) target = $region549
          $region546: #{tpu_custom_call.1} parent=541 // loop_body
            %v732 = vld [vmem:[%s730] sm:%s723]
            %733 = vst [vmem:[%s731] sm:%s723] %v732
          $region547: #{tpu_custom_call.1} parent=541 // loop_footer
            %s729 = sadd.s32 1, %s725
          $region548: #{tpu_custom_call.1} parent=541 // loop_footer_branch
            %724 = sbr.rel target = $region544
          $region549: #{tpu_custom_call.1} parent=541 // loop_exit
            _
        $region542: #{tpu_custom_call.1} parent=526 // pred_fallthru
          _
      $region527: #{tpu_custom_call.1} parent=522 // pred_fallthru
        _
      // Predicated region
      $region528: #{tpu_custom_call.1} parent=522 // pred_check
        _
      $region529: #{tpu_custom_call.1} parent=522 // pred_check_branch
        %707 = sbr.rel (0) target = $region531
      $region530: #{tpu_custom_call.1} parent=522 // pred_region
        %s709 = ssub.s32 2, 1
        loop: start=0, step=1, limit=1
        $region532: #{tpu_custom_call.1} parent=530 // loop_pre_header
          _
        $region533: #{tpu_custom_call.1} parent=530 // loop_header
          %s711 = sphi 0, %s715
          %p712 = scmp.ge.s32.totalorder %s711, 1
          %s716 = sphi %s699, %s699
          %s717 = sphi %s702, %s702
        $region534: #{tpu_custom_call.1} parent=530 // loop_header_branch
          %714 = sbr.rel (%p712) target = $region538
        $region535: #{tpu_custom_call.1} parent=530 // loop_body
          %v718 = vld [vmem:[%s716] sm:%s709]
          %719 = vst [vmem:[%s717] sm:%s709] %v718
        $region536: #{tpu_custom_call.1} parent=530 // loop_footer
          %s715 = sadd.s32 1, %s711
        $region537: #{tpu_custom_call.1} parent=530 // loop_footer_branch
          %710 = sbr.rel target = $region533
        $region538: #{tpu_custom_call.1} parent=530 // loop_exit
          _
      $region531: #{tpu_custom_call.1} parent=522 // pred_fallthru
        _
      // Predicated region
      $region550: #{tpu_custom_call.1} parent=522 // pred_check
        _
      $region551: #{tpu_custom_call.1} parent=522 // pred_check_branch
        %736 = sbr.rel (0) target = $region553
      $region552: #{tpu_custom_call.1} parent=522 // pred_region
        %737 = vsyncadd %s703, 16
      $region553: #{tpu_custom_call.1} parent=522 // pred_fallthru
        _
    $region523: #{tpu_custom_call.1} parent=312 // pred_fallthru
      _
    %p738 = scmp.gt.s32.totalorder %s423, 7
    // Predicated region
    $region554: #{tpu_custom_call.1} parent=312 // pred_check
      %p739 = pneg %p738
    $region555: #{tpu_custom_call.1} parent=312 // pred_check_branch
      %741 = sbr.rel (%p739) target = $region557
    $region556: #{tpu_custom_call.1} parent=312 // pred_region
      %s742 = sadd.s32 %s424, 7
      %s743 = sld [smem:[#allocation7 + %s742]]
      %s744 = scalar_lea.vmem %s4, %s743
      %s745 = smul.u32 %s417, 8
      %s746 = sadd.s32 7, %s745
      %s747 = scalar_lea.vmem [#allocation3], %s746
      %s748 = scalar_lea.sflag [#allocation4], 1
      // Predicated region
      $region558: #{tpu_custom_call.1} parent=556 // pred_check
        _
      $region559: #{tpu_custom_call.1} parent=556 // pred_check_branch
        %750 = sbr.rel target = $region561
      $region560: #{tpu_custom_call.1} parent=556 // pred_region
        // Predicated region
        $region573: #{tpu_custom_call.1} parent=560 // pred_check
          _
        $region574: #{tpu_custom_call.1} parent=560 // pred_check_branch
          %766 = sbr.rel (0) target = $region576
        $region575: #{tpu_custom_call.1} parent=560 // pred_region
          %s768 = ssub.s32 2, 1
          loop: start=0, step=1, limit=1
          $region577: #{tpu_custom_call.1} parent=575 // loop_pre_header
            _
          $region578: #{tpu_custom_call.1} parent=575 // loop_header
            %s770 = sphi 0, %s774
            %p771 = scmp.ge.s32.totalorder %s770, 1
            %s775 = sphi %s744, %s744
            %s776 = sphi %s747, %s747
          $region579: #{tpu_custom_call.1} parent=575 // loop_header_branch
            %773 = sbr.rel (%p771) target = $region583
          $region580: #{tpu_custom_call.1} parent=575 // loop_body
            %v777 = vld [vmem:[%s775] sm:%s768]
            %778 = vst [vmem:[%s776] sm:%s768] %v777
          $region581: #{tpu_custom_call.1} parent=575 // loop_footer
            %s774 = sadd.s32 1, %s770
          $region582: #{tpu_custom_call.1} parent=575 // loop_footer_branch
            %769 = sbr.rel target = $region578
          $region583: #{tpu_custom_call.1} parent=575 // loop_exit
            _
        $region576: #{tpu_custom_call.1} parent=560 // pred_fallthru
          _
      $region561: #{tpu_custom_call.1} parent=556 // pred_fallthru
        _
      // Predicated region
      $region562: #{tpu_custom_call.1} parent=556 // pred_check
        _
      $region563: #{tpu_custom_call.1} parent=556 // pred_check_branch
        %752 = sbr.rel (0) target = $region565
      $region564: #{tpu_custom_call.1} parent=556 // pred_region
        %s754 = ssub.s32 2, 1
        loop: start=0, step=1, limit=1
        $region566: #{tpu_custom_call.1} parent=564 // loop_pre_header
          _
        $region567: #{tpu_custom_call.1} parent=564 // loop_header
          %s756 = sphi 0, %s760
          %p757 = scmp.ge.s32.totalorder %s756, 1
          %s761 = sphi %s744, %s744
          %s762 = sphi %s747, %s747
        $region568: #{tpu_custom_call.1} parent=564 // loop_header_branch
          %759 = sbr.rel (%p757) target = $region572
        $region569: #{tpu_custom_call.1} parent=564 // loop_body
          %v763 = vld [vmem:[%s761] sm:%s754]
          %764 = vst [vmem:[%s762] sm:%s754] %v763
        $region570: #{tpu_custom_call.1} parent=564 // loop_footer
          %s760 = sadd.s32 1, %s756
        $region571: #{tpu_custom_call.1} parent=564 // loop_footer_branch
          %755 = sbr.rel target = $region567
        $region572: #{tpu_custom_call.1} parent=564 // loop_exit
          _
      $region565: #{tpu_custom_call.1} parent=556 // pred_fallthru
        _
      // Predicated region
      $region584: #{tpu_custom_call.1} parent=556 // pred_check
        _
      $region585: #{tpu_custom_call.1} parent=556 // pred_check_branch
        %781 = sbr.rel (0) target = $region587
      $region586: #{tpu_custom_call.1} parent=556 // pred_region
        %782 = vsyncadd %s748, 16
      $region587: #{tpu_custom_call.1} parent=556 // pred_fallthru
        _
    $region557: #{tpu_custom_call.1} parent=312 // pred_fallthru
      _
  $region313: #{tpu_custom_call.1} parent=0 // loop_footer
    %s421 = sadd.s32 1, %s417
  $region314: #{tpu_custom_call.1} parent=0 // loop_footer_branch
    %416 = sbr.rel target = $region310
  $region315: #{tpu_custom_call.1} parent=0 // loop_exit
    _
  loop: start=0, step=1, limit=8
  $region588: #{tpu_custom_call.1} parent=0 // loop_pre_header
    _
  $region589: #{tpu_custom_call.1} parent=0 // loop_header
    %s784 = sphi 0, %s788
    %p785 = scmp.ge.s32.totalorder %s784, 8
  $region590: #{tpu_custom_call.1} parent=0 // loop_header_branch
    %787 = sbr.rel (%p785) target = $region594
  $region591: #{tpu_custom_call.1} parent=0 // loop_body
    %s789 = sadd.s32 %s56, %s784
    %s790 = sld [smem:[#allocation8 + %s789]]
    %p791 = scmp.gt.s32.totalorder %s790, 0
    // Predicated region
    $region595: #{tpu_custom_call.1} parent=591 // pred_check
      %p792 = pneg %p791
    $region596: #{tpu_custom_call.1} parent=591 // pred_check_branch
      %794 = sbr.rel (%p792) target = $region598
    $region597: #{tpu_custom_call.1} parent=591 // pred_region
      %s795 = smul.u32 1, 1
      %s796 = sshll.u32 %s795, 4
      %797 = dma.done [#allocation4], %s796
    $region598: #{tpu_custom_call.1} parent=591 // pred_fallthru
      _
    %p798 = scmp.gt.s32.totalorder %s790, 1
    // Predicated region
    $region599: #{tpu_custom_call.1} parent=591 // pred_check
      %p799 = pneg %p798
    $region600: #{tpu_custom_call.1} parent=591 // pred_check_branch
      %801 = sbr.rel (%p799) target = $region602
    $region601: #{tpu_custom_call.1} parent=591 // pred_region
      %s802 = smul.u32 1, 1
      %s803 = sshll.u32 %s802, 4
      %804 = dma.done [#allocation4], %s803
    $region602: #{tpu_custom_call.1} parent=591 // pred_fallthru
      _
    %p805 = scmp.gt.s32.totalorder %s790, 2
    // Predicated region
    $region603: #{tpu_custom_call.1} parent=591 // pred_check
      %p806 = pneg %p805
    $region604: #{tpu_custom_call.1} parent=591 // pred_check_branch
      %808 = sbr.rel (%p806) target = $region606
    $region605: #{tpu_custom_call.1} parent=591 // pred_region
      %s809 = smul.u32 1, 1
      %s810 = sshll.u32 %s809, 4
      %811 = dma.done [#allocation4], %s810
    $region606: #{tpu_custom_call.1} parent=591 // pred_fallthru
      _
    %p812 = scmp.gt.s32.totalorder %s790, 3
    // Predicated region
    $region607: #{tpu_custom_call.1} parent=591 // pred_check
      %p813 = pneg %p812
    $region608: #{tpu_custom_call.1} parent=591 // pred_check_branch
      %815 = sbr.rel (%p813) target = $region610
    $region609: #{tpu_custom_call.1} parent=591 // pred_region
      %s816 = smul.u32 1, 1
      %s817 = sshll.u32 %s816, 4
      %818 = dma.done [#allocation4], %s817
    $region610: #{tpu_custom_call.1} parent=591 // pred_fallthru
      _
    %p819 = scmp.gt.s32.totalorder %s790, 4
    // Predicated region
    $region611: #{tpu_custom_call.1} parent=591 // pred_check
      %p820 = pneg %p819
    $region612: #{tpu_custom_call.1} parent=591 // pred_check_branch
      %822 = sbr.rel (%p820) target = $region614
    $region613: #{tpu_custom_call.1} parent=591 // pred_region
      %s823 = smul.u32 1, 1
      %s824 = sshll.u32 %s823, 4
      %825 = dma.done [#allocation4], %s824
    $region614: #{tpu_custom_call.1} parent=591 // pred_fallthru
      _
    %p826 = scmp.gt.s32.totalorder %s790, 5
    // Predicated region
    $region615: #{tpu_custom_call.1} parent=591 // pred_check
      %p827 = pneg %p826
    $region616: #{tpu_custom_call.1} parent=591 // pred_check_branch
      %829 = sbr.rel (%p827) target = $region618
    $region617: #{tpu_custom_call.1} parent=591 // pred_region
      %s830 = smul.u32 1, 1
      %s831 = sshll.u32 %s830, 4
      %832 = dma.done [#allocation4], %s831
    $region618: #{tpu_custom_call.1} parent=591 // pred_fallthru
      _
    %p833 = scmp.gt.s32.totalorder %s790, 6
    // Predicated region
    $region619: #{tpu_custom_call.1} parent=591 // pred_check
      %p834 = pneg %p833
    $region620: #{tpu_custom_call.1} parent=591 // pred_check_branch
      %836 = sbr.rel (%p834) target = $region622
    $region621: #{tpu_custom_call.1} parent=591 // pred_region
      %s837 = smul.u32 1, 1
      %s838 = sshll.u32 %s837, 4
      %839 = dma.done [#allocation4], %s838
    $region622: #{tpu_custom_call.1} parent=591 // pred_fallthru
      _
    %p840 = scmp.gt.s32.totalorder %s790, 7
    // Predicated region
    $region623: #{tpu_custom_call.1} parent=591 // pred_check
      %p841 = pneg %p840
    $region624: #{tpu_custom_call.1} parent=591 // pred_check_branch
      %843 = sbr.rel (%p841) target = $region626
    $region625: #{tpu_custom_call.1} parent=591 // pred_region
      %s844 = smul.u32 1, 1
      %s845 = sshll.u32 %s844, 4
      %846 = dma.done [#allocation4], %s845
    $region626: #{tpu_custom_call.1} parent=591 // pred_fallthru
      _
  $region592: #{tpu_custom_call.1} parent=0 // loop_footer
    %s788 = sadd.s32 1, %s784
  $region593: #{tpu_custom_call.1} parent=0 // loop_footer_branch
    %783 = sbr.rel target = $region589
  $region594: #{tpu_custom_call.1} parent=0 // loop_exit
    _
  loop: start=0, step=1, limit=8
  $region627: #{tpu_custom_call.1} parent=0 // loop_pre_header
    _
  $region628: #{tpu_custom_call.1} parent=0 // loop_header
    %s848 = sphi 0, %s852
    %p849 = scmp.ge.s32.totalorder %s848, 8
  $region629: #{tpu_custom_call.1} parent=0 // loop_header_branch
    %851 = sbr.rel (%p849) target = $region633
  $region630: #{tpu_custom_call.1} parent=0 // loop_body
    %s853 = sadd.s32 %s56, %s848
    %s854 = sld [smem:[#allocation9 + %s853]]
    %p855 = scmp.gt.s32.totalorder %s854, 0
    // Predicated region
    $region634: #{tpu_custom_call.1} parent=630 // pred_check
      %p856 = pneg %p855
    $region635: #{tpu_custom_call.1} parent=630 // pred_check_branch
      %858 = sbr.rel (%p856) target = $region637
    $region636: #{tpu_custom_call.1} parent=630 // pred_region
      %s859 = scalar_lea.sflag [#allocation4], 1
      %s860 = smul.u32 1, 1
      %s861 = sshll.u32 %s860, 4
      %862 = dma.done %s859, %s861
    $region637: #{tpu_custom_call.1} parent=630 // pred_fallthru
      _
    %p863 = scmp.gt.s32.totalorder %s854, 1
    // Predicated region
    $region638: #{tpu_custom_call.1} parent=630 // pred_check
      %p864 = pneg %p863
    $region639: #{tpu_custom_call.1} parent=630 // pred_check_branch
      %866 = sbr.rel (%p864) target = $region641
    $region640: #{tpu_custom_call.1} parent=630 // pred_region
      %s867 = scalar_lea.sflag [#allocation4], 1
      %s868 = smul.u32 1, 1
      %s869 = sshll.u32 %s868, 4
      %870 = dma.done %s867, %s869
    $region641: #{tpu_custom_call.1} parent=630 // pred_fallthru
      _
    %p871 = scmp.gt.s32.totalorder %s854, 2
    // Predicated region
    $region642: #{tpu_custom_call.1} parent=630 // pred_check
      %p872 = pneg %p871
    $region643: #{tpu_custom_call.1} parent=630 // pred_check_branch
      %874 = sbr.rel (%p872) target = $region645
    $region644: #{tpu_custom_call.1} parent=630 // pred_region
      %s875 = scalar_lea.sflag [#allocation4], 1
      %s876 = smul.u32 1, 1
      %s877 = sshll.u32 %s876, 4
      %878 = dma.done %s875, %s877
    $region645: #{tpu_custom_call.1} parent=630 // pred_fallthru
      _
    %p879 = scmp.gt.s32.totalorder %s854, 3
    // Predicated region
    $region646: #{tpu_custom_call.1} parent=630 // pred_check
      %p880 = pneg %p879
    $region647: #{tpu_custom_call.1} parent=630 // pred_check_branch
      %882 = sbr.rel (%p880) target = $region649
    $region648: #{tpu_custom_call.1} parent=630 // pred_region
      %s883 = scalar_lea.sflag [#allocation4], 1
      %s884 = smul.u32 1, 1
      %s885 = sshll.u32 %s884, 4
      %886 = dma.done %s883, %s885
    $region649: #{tpu_custom_call.1} parent=630 // pred_fallthru
      _
    %p887 = scmp.gt.s32.totalorder %s854, 4
    // Predicated region
    $region650: #{tpu_custom_call.1} parent=630 // pred_check
      %p888 = pneg %p887
    $region651: #{tpu_custom_call.1} parent=630 // pred_check_branch
      %890 = sbr.rel (%p888) target = $region653
    $region652: #{tpu_custom_call.1} parent=630 // pred_region
      %s891 = scalar_lea.sflag [#allocation4], 1
      %s892 = smul.u32 1, 1
      %s893 = sshll.u32 %s892, 4
      %894 = dma.done %s891, %s893
    $region653: #{tpu_custom_call.1} parent=630 // pred_fallthru
      _
    %p895 = scmp.gt.s32.totalorder %s854, 5
    // Predicated region
    $region654: #{tpu_custom_call.1} parent=630 // pred_check
      %p896 = pneg %p895
    $region655: #{tpu_custom_call.1} parent=630 // pred_check_branch
      %898 = sbr.rel (%p896) target = $region657
    $region656: #{tpu_custom_call.1} parent=630 // pred_region
      %s899 = scalar_lea.sflag [#allocation4], 1
      %s900 = smul.u32 1, 1
      %s901 = sshll.u32 %s900, 4
      %902 = dma.done %s899, %s901
    $region657: #{tpu_custom_call.1} parent=630 // pred_fallthru
      _
    %p903 = scmp.gt.s32.totalorder %s854, 6
    // Predicated region
    $region658: #{tpu_custom_call.1} parent=630 // pred_check
      %p904 = pneg %p903
    $region659: #{tpu_custom_call.1} parent=630 // pred_check_branch
      %906 = sbr.rel (%p904) target = $region661
    $region660: #{tpu_custom_call.1} parent=630 // pred_region
      %s907 = scalar_lea.sflag [#allocation4], 1
      %s908 = smul.u32 1, 1
      %s909 = sshll.u32 %s908, 4
      %910 = dma.done %s907, %s909
    $region661: #{tpu_custom_call.1} parent=630 // pred_fallthru
      _
    %p911 = scmp.gt.s32.totalorder %s854, 7
    // Predicated region
    $region662: #{tpu_custom_call.1} parent=630 // pred_check
      %p912 = pneg %p911
    $region663: #{tpu_custom_call.1} parent=630 // pred_check_branch
      %914 = sbr.rel (%p912) target = $region665
    $region664: #{tpu_custom_call.1} parent=630 // pred_region
      %s915 = scalar_lea.sflag [#allocation4], 1
      %s916 = smul.u32 1, 1
      %s917 = sshll.u32 %s916, 4
      %918 = dma.done %s915, %s917
    $region665: #{tpu_custom_call.1} parent=630 // pred_fallthru
      _
  $region631: #{tpu_custom_call.1} parent=0 // loop_footer
    %s852 = sadd.s32 1, %s848
  $region632: #{tpu_custom_call.1} parent=0 // loop_footer_branch
    %847 = sbr.rel target = $region628
  $region633: #{tpu_custom_call.1} parent=0 // loop_exit
    _
  %v919 = vld [vmem:[%s5] sm:$0xff]
  %v920 = vld [vmem:[%s6] sm:$0xff]
  %v921 = vlaneseq
  %v922 = vshrl.u32 %v921, 7
  %v923 = vrot.slane %v919, 1
  %v924 = vrot.slane %v919, 2
  %v925 = vrot.slane %v919, 3
  %v926 = vrot.slane %v919, 4
  %v927 = vrot.slane %v919, 5
  %v928 = vrot.slane %v919, 6
  %v929 = vrot.slane %v919, 7
  %v930 = vperm.slane %v919, 0
  %v931 = vperm.slane %v923, 0
  %v932 = vperm.slane %v924, 0
  %v933 = vperm.slane %v925, 0
  %v934 = vperm.slane %v926, 0
  %v935 = vperm.slane %v927, 0
  %v936 = vperm.slane %v928, 0
  %v937 = vperm.slane %v929, 0
  %938 = vset.pattern.permute.xlu0 0
  %939 = vperm.xlu0 %938, %v930
  %v940 = vpop.permute.xlu0 %939
  %941 = vset.pattern.permute.xlu0 0
  %942 = vperm.xlu0 %941, %v931
  %v943 = vpop.permute.xlu0 %942
  %944 = vset.pattern.permute.xlu0 0
  %945 = vperm.xlu0 %944, %v932
  %v946 = vpop.permute.xlu0 %945
  %947 = vset.pattern.permute.xlu0 0
  %948 = vperm.xlu0 %947, %v933
  %v949 = vpop.permute.xlu0 %948
  %950 = vset.pattern.permute.xlu0 0
  %951 = vperm.xlu0 %950, %v934
  %v952 = vpop.permute.xlu0 %951
  %953 = vset.pattern.permute.xlu0 0
  %954 = vperm.xlu0 %953, %v935
  %v955 = vpop.permute.xlu0 %954
  %956 = vset.pattern.permute.xlu0 0
  %957 = vperm.xlu0 %956, %v936
  %v958 = vpop.permute.xlu0 %957
  %959 = vset.pattern.permute.xlu0 0
  %960 = vperm.xlu0 %959, %v937
  %v961 = vpop.permute.xlu0 %960
  %vm962 = vcmp.lt.s32.totalorder %v922, %v940
  %vm963 = vcmp.lt.s32.totalorder %v922, %v943
  %vm964 = vcmp.lt.s32.totalorder %v922, %v946
  %vm965 = vcmp.lt.s32.totalorder %v922, %v949
  %vm966 = vcmp.lt.s32.totalorder %v922, %v952
  %vm967 = vcmp.lt.s32.totalorder %v922, %v955
  %vm968 = vcmp.lt.s32.totalorder %v922, %v958
  %vm969 = vcmp.lt.s32.totalorder %v922, %v961
  %v970 = vrot.slane %v920, 1
  %v971 = vrot.slane %v920, 2
  %v972 = vrot.slane %v920, 3
  %v973 = vrot.slane %v920, 4
  %v974 = vrot.slane %v920, 5
  %v975 = vrot.slane %v920, 6
  %v976 = vrot.slane %v920, 7
  %v977 = vperm.slane %v920, 0
  %v978 = vperm.slane %v970, 0
  %v979 = vperm.slane %v971, 0
  %v980 = vperm.slane %v972, 0
  %v981 = vperm.slane %v973, 0
  %v982 = vperm.slane %v974, 0
  %v983 = vperm.slane %v975, 0
  %v984 = vperm.slane %v976, 0
  %985 = vset.pattern.permute.xlu0 0
  %986 = vperm.xlu0 %985, %v977
  %v987 = vpop.permute.xlu0 %986
  %988 = vset.pattern.permute.xlu0 0
  %989 = vperm.xlu0 %988, %v978
  %v990 = vpop.permute.xlu0 %989
  %991 = vset.pattern.permute.xlu0 0
  %992 = vperm.xlu0 %991, %v979
  %v993 = vpop.permute.xlu0 %992
  %994 = vset.pattern.permute.xlu0 0
  %995 = vperm.xlu0 %994, %v980
  %v996 = vpop.permute.xlu0 %995
  %997 = vset.pattern.permute.xlu0 0
  %998 = vperm.xlu0 %997, %v981
  %v999 = vpop.permute.xlu0 %998
  %1000 = vset.pattern.permute.xlu0 0
  %1001 = vperm.xlu0 %1000, %v982
  %v1002 = vpop.permute.xlu0 %1001
  %1003 = vset.pattern.permute.xlu0 0
  %1004 = vperm.xlu0 %1003, %v983
  %v1005 = vpop.permute.xlu0 %1004
  %1006 = vset.pattern.permute.xlu0 0
  %1007 = vperm.xlu0 %1006, %v984
  %v1008 = vpop.permute.xlu0 %1007
  %vm1009 = vcmp.lt.s32.totalorder %v922, %v987
  %vm1010 = vcmp.lt.s32.totalorder %v922, %v990
  %vm1011 = vcmp.lt.s32.totalorder %v922, %v993
  %vm1012 = vcmp.lt.s32.totalorder %v922, %v996
  %vm1013 = vcmp.lt.s32.totalorder %v922, %v999
  %vm1014 = vcmp.lt.s32.totalorder %v922, %v1002
  %vm1015 = vcmp.lt.s32.totalorder %v922, %v1005
  %vm1016 = vcmp.lt.s32.totalorder %v922, %v1008
  %v1017 = vld [vmem:[#allocation2] sm:$0xff]
  %v1018 = vld [vmem:[#allocation2 + $0x8] sm:$0xff]
  %v1019 = vld [vmem:[#allocation2 + $0x10] sm:$0xff]
  %v1020 = vld [vmem:[#allocation2 + $0x18] sm:$0xff]
  %v1021 = vld [vmem:[#allocation2 + $0x20] sm:$0xff]
  %v1022 = vld [vmem:[#allocation2 + $0x28] sm:$0xff]
  %v1023 = vld [vmem:[#allocation2 + $0x30] sm:$0xff]
  %v1024 = vld [vmem:[#allocation2 + $0x38] sm:$0xff]
  %v1025 = vld [vmem:[#allocation3] sm:$0xff]
  %v1026 = vld [vmem:[#allocation3 + $0x8] sm:$0xff]
  %v1027 = vld [vmem:[#allocation3 + $0x10] sm:$0xff]
  %v1028 = vld [vmem:[#allocation3 + $0x18] sm:$0xff]
  %v1029 = vld [vmem:[#allocation3 + $0x20] sm:$0xff]
  %v1030 = vld [vmem:[#allocation3 + $0x28] sm:$0xff]
  %v1031 = vld [vmem:[#allocation3 + $0x30] sm:$0xff]
  %v1032 = vld [vmem:[#allocation3 + $0x38] sm:$0xff]
  %v1033 = vcvt.s32.f32 %v919
  %v1034 = vrcp.pop %v1033
  %v1035 = vmul.f32 %v1033, %v1034
  %v1036 = vsub.f32 1.0, %v1035
  %v1037 = vmul.f32 %v1034, %v1036
  %v1038 = vadd.f32 %v1034, %v1037
  %vm1039 = vweird.f32 %v1033
  %vm1040 = vweird.f32 %v1034
  %vm1041 = vmor %vm1039, %vm1040
  %v1042 = vsel %vm1041, %v1034, %v1038
  %v1043 = vand.u32 2147483647, %v1033
  %vm1044 = vcmp.eq.f32.partialorder %v1043, 8.507059e+37
  %v1045 = vand.u32 %v1033, 2147483648
  %v1046 = vor.u32 1.1754944e-38, %v1045
  %v1047 = vsel %vm1044, %v1046, %v1042
  %v1048 = vmul.f32 1.0, %v1047
  %v1049 = vcvt.s32.f32 %v920
  %v1050 = vrcp.pop %v1049
  %v1051 = vmul.f32 %v1049, %v1050
  %v1052 = vsub.f32 1.0, %v1051
  %v1053 = vmul.f32 %v1050, %v1052
  %v1054 = vadd.f32 %v1050, %v1053
  %vm1055 = vweird.f32 %v1049
  %vm1056 = vweird.f32 %v1050
  %vm1057 = vmor %vm1055, %vm1056
  %v1058 = vsel %vm1057, %v1050, %v1054
  %v1059 = vand.u32 2147483647, %v1049
  %vm1060 = vcmp.eq.f32.partialorder %v1059, 8.507059e+37
  %v1061 = vand.u32 %v1049, 2147483648
  %v1062 = vor.u32 1.1754944e-38, %v1061
  %v1063 = vsel %vm1060, %v1062, %v1058
  %v1064 = vmul.f32 1.0, %v1063
  %v1065 = vsel %vm962, %v1017, 0.0
  %v1066 = vsel %vm963, %v1018, 0.0
  %v1067 = vsel %vm964, %v1019, 0.0
  %v1068 = vsel %vm965, %v1020, 0.0
  %v1069 = vsel %vm966, %v1021, 0.0
  %v1070 = vsel %vm967, %v1022, 0.0
  %v1071 = vsel %vm968, %v1023, 0.0
  %v1072 = vsel %vm969, %v1024, 0.0
  %v1073 = vrot.slane %v1065, 4
  %v1074 = vadd.f32 %v1065, %v1073
  %v1075 = vrot.slane %v1074, 2
  %v1076 = vadd.f32 %v1074, %v1075
  %v1077 = vrot.slane %v1076, 1
  %v1078 = vadd.f32 %v1076, %v1077
  %v1079 = vrot.slane %v1066, 4
  %v1080 = vadd.f32 %v1066, %v1079
  %v1081 = vrot.slane %v1080, 2
  %v1082 = vadd.f32 %v1080, %v1081
  %v1083 = vrot.slane %v1082, 1
  %v1084 = vadd.f32 %v1082, %v1083
  %v1085 = vrot.slane %v1067, 4
  %v1086 = vadd.f32 %v1067, %v1085
  %v1087 = vrot.slane %v1086, 2
  %v1088 = vadd.f32 %v1086, %v1087
  %v1089 = vrot.slane %v1088, 1
  %v1090 = vadd.f32 %v1088, %v1089
  %v1091 = vrot.slane %v1068, 4
  %v1092 = vadd.f32 %v1068, %v1091
  %v1093 = vrot.slane %v1092, 2
  %v1094 = vadd.f32 %v1092, %v1093
  %v1095 = vrot.slane %v1094, 1
  %v1096 = vadd.f32 %v1094, %v1095
  %v1097 = vrot.slane %v1069, 4
  %v1098 = vadd.f32 %v1069, %v1097
  %v1099 = vrot.slane %v1098, 2
  %v1100 = vadd.f32 %v1098, %v1099
  %v1101 = vrot.slane %v1100, 1
  %v1102 = vadd.f32 %v1100, %v1101
  %v1103 = vrot.slane %v1070, 4
  %v1104 = vadd.f32 %v1070, %v1103
  %v1105 = vrot.slane %v1104, 2
  %v1106 = vadd.f32 %v1104, %v1105
  %v1107 = vrot.slane %v1106, 1
  %v1108 = vadd.f32 %v1106, %v1107
  %v1109 = vrot.slane %v1071, 4
  %v1110 = vadd.f32 %v1071, %v1109
  %v1111 = vrot.slane %v1110, 2
  %v1112 = vadd.f32 %v1110, %v1111
  %v1113 = vrot.slane %v1112, 1
  %v1114 = vadd.f32 %v1112, %v1113
  %v1115 = vrot.slane %v1072, 4
  %v1116 = vadd.f32 %v1072, %v1115
  %v1117 = vrot.slane %v1116, 2
  %v1118 = vadd.f32 %v1116, %v1117
  %v1119 = vrot.slane %v1118, 1
  %v1120 = vadd.f32 %v1118, %v1119
  %1122 = vset.pattern.permute.xlu0 0
  %1123 = vperm.xlu0 %1122, %v1048
  %v1124 = vpop.permute.xlu0 %1123
  %v1125 = vrot.slane %v1124, 1
  %v1126 = vrot.slane %v1124, 2
  %v1127 = vrot.slane %v1124, 3
  %v1128 = vrot.slane %v1124, 4
  %v1129 = vrot.slane %v1124, 5
  %v1130 = vrot.slane %v1124, 6
  %v1131 = vrot.slane %v1124, 7
  %v1140 = vmul.f32 %v1078, %v1124
  %v1141 = vmul.f32 %v1084, %v1125
  %v1142 = vmul.f32 %v1090, %v1126
  %v1143 = vmul.f32 %v1096, %v1127
  %v1144 = vmul.f32 %v1102, %v1128
  %v1145 = vmul.f32 %v1108, %v1129
  %v1146 = vmul.f32 %v1114, %v1130
  %v1147 = vmul.f32 %v1120, %v1131
  %v1148 = vsel %vm1009, %v1025, 0.0
  %v1149 = vsel %vm1010, %v1026, 0.0
  %v1150 = vsel %vm1011, %v1027, 0.0
  %v1151 = vsel %vm1012, %v1028, 0.0
  %v1152 = vsel %vm1013, %v1029, 0.0
  %v1153 = vsel %vm1014, %v1030, 0.0
  %v1154 = vsel %vm1015, %v1031, 0.0
  %v1155 = vsel %vm1016, %v1032, 0.0
  %v1156 = vrot.slane %v1148, 4
  %v1157 = vadd.f32 %v1148, %v1156
  %v1158 = vrot.slane %v1157, 2
  %v1159 = vadd.f32 %v1157, %v1158
  %v1160 = vrot.slane %v1159, 1
  %v1161 = vadd.f32 %v1159, %v1160
  %v1162 = vrot.slane %v1149, 4
  %v1163 = vadd.f32 %v1149, %v1162
  %v1164 = vrot.slane %v1163, 2
  %v1165 = vadd.f32 %v1163, %v1164
  %v1166 = vrot.slane %v1165, 1
  %v1167 = vadd.f32 %v1165, %v1166
  %v1168 = vrot.slane %v1150, 4
  %v1169 = vadd.f32 %v1150, %v1168
  %v1170 = vrot.slane %v1169, 2
  %v1171 = vadd.f32 %v1169, %v1170
  %v1172 = vrot.slane %v1171, 1
  %v1173 = vadd.f32 %v1171, %v1172
  %v1174 = vrot.slane %v1151, 4
  %v1175 = vadd.f32 %v1151, %v1174
  %v1176 = vrot.slane %v1175, 2
  %v1177 = vadd.f32 %v1175, %v1176
  %v1178 = vrot.slane %v1177, 1
  %v1179 = vadd.f32 %v1177, %v1178
  %v1180 = vrot.slane %v1152, 4
  %v1181 = vadd.f32 %v1152, %v1180
  %v1182 = vrot.slane %v1181, 2
  %v1183 = vadd.f32 %v1181, %v1182
  %v1184 = vrot.slane %v1183, 1
  %v1185 = vadd.f32 %v1183, %v1184
  %v1186 = vrot.slane %v1153, 4
  %v1187 = vadd.f32 %v1153, %v1186
  %v1188 = vrot.slane %v1187, 2
  %v1189 = vadd.f32 %v1187, %v1188
  %v1190 = vrot.slane %v1189, 1
  %v1191 = vadd.f32 %v1189, %v1190
  %v1192 = vrot.slane %v1154, 4
  %v1193 = vadd.f32 %v1154, %v1192
  %v1194 = vrot.slane %v1193, 2
  %v1195 = vadd.f32 %v1193, %v1194
  %v1196 = vrot.slane %v1195, 1
  %v1197 = vadd.f32 %v1195, %v1196
  %v1198 = vrot.slane %v1155, 4
  %v1199 = vadd.f32 %v1155, %v1198
  %v1200 = vrot.slane %v1199, 2
  %v1201 = vadd.f32 %v1199, %v1200
  %v1202 = vrot.slane %v1201, 1
  %v1203 = vadd.f32 %v1201, %v1202
  %1205 = vset.pattern.permute.xlu0 0
  %1206 = vperm.xlu0 %1205, %v1064
  %v1207 = vpop.permute.xlu0 %1206
  %v1208 = vrot.slane %v1207, 1
  %v1209 = vrot.slane %v1207, 2
  %v1210 = vrot.slane %v1207, 3
  %v1211 = vrot.slane %v1207, 4
  %v1212 = vrot.slane %v1207, 5
  %v1213 = vrot.slane %v1207, 6
  %v1214 = vrot.slane %v1207, 7
  %v1223 = vmul.f32 %v1161, %v1207
  %v1224 = vmul.f32 %v1167, %v1208
  %v1225 = vmul.f32 %v1173, %v1209
  %v1226 = vmul.f32 %v1179, %v1210
  %v1227 = vmul.f32 %v1185, %v1211
  %v1228 = vmul.f32 %v1191, %v1212
  %v1229 = vmul.f32 %v1197, %v1213
  %v1230 = vmul.f32 %v1203, %v1214
  %v1231 = vld [vmem:[%s7] sm:$0xff]
  %v1232 = vld [vmem:[%s7 + $0x8] sm:$0xff]
  %v1233 = vld [vmem:[%s7 + $0x10] sm:$0xff]
  %v1234 = vld [vmem:[%s7 + $0x18] sm:$0xff]
  %v1235 = vld [vmem:[%s7 + $0x20] sm:$0xff]
  %v1236 = vld [vmem:[%s7 + $0x28] sm:$0xff]
  %v1237 = vld [vmem:[%s7 + $0x30] sm:$0xff]
  %v1238 = vld [vmem:[%s7 + $0x38] sm:$0xff]
  %v1239 = vld [vmem:[%s7 + $0x40] sm:$0xff]
  %v1240 = vld [vmem:[%s7 + $0x48] sm:$0xff]
  %v1241 = vld [vmem:[%s7 + $0x50] sm:$0xff]
  %v1242 = vld [vmem:[%s7 + $0x58] sm:$0xff]
  %v1243 = vld [vmem:[%s7 + $0x60] sm:$0xff]
  %v1244 = vld [vmem:[%s7 + $0x68] sm:$0xff]
  %v1245 = vld [vmem:[%s7 + $0x70] sm:$0xff]
  %v1246 = vld [vmem:[%s7 + $0x78] sm:$0xff]
  %v1247 = vld [vmem:[%s8] sm:$0xff]
  %v1248 = vld [vmem:[%s8 + $0x8] sm:$0xff]
  %v1249 = vld [vmem:[%s8 + $0x10] sm:$0xff]
  %v1250 = vld [vmem:[%s8 + $0x18] sm:$0xff]
  %v1251 = vld [vmem:[%s8 + $0x20] sm:$0xff]
  %v1252 = vld [vmem:[%s8 + $0x28] sm:$0xff]
  %v1253 = vld [vmem:[%s8 + $0x30] sm:$0xff]
  %v1254 = vld [vmem:[%s8 + $0x38] sm:$0xff]
  %v1255 = vld [vmem:[%s8 + $0x40] sm:$0xff]
  %v1256 = vld [vmem:[%s8 + $0x48] sm:$0xff]
  %v1257 = vld [vmem:[%s8 + $0x50] sm:$0xff]
  %v1258 = vld [vmem:[%s8 + $0x58] sm:$0xff]
  %v1259 = vld [vmem:[%s8 + $0x60] sm:$0xff]
  %v1260 = vld [vmem:[%s8 + $0x68] sm:$0xff]
  %v1261 = vld [vmem:[%s8 + $0x70] sm:$0xff]
  %v1262 = vld [vmem:[%s8 + $0x78] sm:$0xff]
  %v1271 = vrot.slane %v1224, 7
  %vm1272 = vcmask 1041409
  %v1273 = vsel %vm1272, %v1271, %v1223
  %v1274 = vrot.slane %v1225, 6
  %vm1275 = vcmask 1042434
  %v1276 = vsel %vm1275, %v1274, %v1273
  %v1277 = vrot.slane %v1226, 5
  %vm1278 = vcmask 1043459
  %v1279 = vsel %vm1278, %v1277, %v1276
  %v1280 = vrot.slane %v1227, 4
  %vm1281 = vcmask 1044484
  %v1282 = vsel %vm1281, %v1280, %v1279
  %v1283 = vrot.slane %v1228, 3
  %vm1284 = vcmask 1045509
  %v1285 = vsel %vm1284, %v1283, %v1282
  %v1286 = vrot.slane %v1229, 2
  %vm1287 = vcmask 1046534
  %v1288 = vsel %vm1287, %v1286, %v1285
  %v1289 = vrot.slane %v1230, 1
  %vm1290 = vcmask 1047559
  %v1291 = vsel %vm1290, %v1289, %v1288
  %1293 = vmatpush.msra.mxu0 %v1262
  %1294 = vmatpush.msra.mxu0 %v1261
  %1295 = vmatpush.msra.mxu0 %v1260
  %1296 = vmatpush.msra.mxu0 %v1259
  %1297 = vmatpush.msra.mxu0 %v1258
  %1298 = vmatpush.msra.mxu0 %v1257
  %1299 = vmatpush.msra.mxu0 %v1256
  %1300 = vmatpush.msra.mxu0 %v1255
  %1301 = vmatpush.msra.mxu0 %v1254
  %1302 = vmatpush.msra.mxu0 %v1253
  %1303 = vmatpush.msra.mxu0 %v1252
  %1304 = vmatpush.msra.mxu0 %v1251
  %1305 = vmatpush.msra.mxu0 %v1250
  %1306 = vmatpush.msra.mxu0 %v1249
  %1307 = vmatpush.msra.mxu0 %v1248
  %1308 = vmatpush.msra.mxu0 %v1247
  %1309 = vmatmul.f32.gmra.mxu0 %v1291
  %v1310 = vpop.f32.mrf.mxu0
  %v1311 = vadd.f32 0.0, %v1310
  %1312 = vdwg.mxu0
  %v1321 = vrot.slane %v1141, 7
  %v1322 = vsel %vm1272, %v1321, %v1140
  %v1323 = vrot.slane %v1142, 6
  %v1324 = vsel %vm1275, %v1323, %v1322
  %v1325 = vrot.slane %v1143, 5
  %v1326 = vsel %vm1278, %v1325, %v1324
  %v1327 = vrot.slane %v1144, 4
  %v1328 = vsel %vm1281, %v1327, %v1326
  %v1329 = vrot.slane %v1145, 3
  %v1330 = vsel %vm1284, %v1329, %v1328
  %v1331 = vrot.slane %v1146, 2
  %v1332 = vsel %vm1287, %v1331, %v1330
  %v1333 = vrot.slane %v1147, 1
  %v1334 = vsel %vm1290, %v1333, %v1332
  %1336 = vmatpush.msra.mxu0 %v1246
  %1337 = vmatpush.msra.mxu0 %v1245
  %1338 = vmatpush.msra.mxu0 %v1244
  %1339 = vmatpush.msra.mxu0 %v1243
  %1340 = vmatpush.msra.mxu0 %v1242
  %1341 = vmatpush.msra.mxu0 %v1241
  %1342 = vmatpush.msra.mxu0 %v1240
  %1343 = vmatpush.msra.mxu0 %v1239
  %1344 = vmatpush.msra.mxu0 %v1238
  %1345 = vmatpush.msra.mxu0 %v1237
  %1346 = vmatpush.msra.mxu0 %v1236
  %1347 = vmatpush.msra.mxu0 %v1235
  %1348 = vmatpush.msra.mxu0 %v1234
  %1349 = vmatpush.msra.mxu0 %v1233
  %1350 = vmatpush.msra.mxu0 %v1232
  %1351 = vmatpush.msra.mxu0 %v1231
  %1352 = vmatmul.f32.gmra.mxu0 %v1334
  %v1353 = vpop.f32.mrf.mxu0
  %v1354 = vadd.f32 %v1311, %v1353
  %1355 = vdwg.mxu0
  %v1356 = vld [vmem:[%s9] sm:$0x1]
  %v1358 = vperm.slane %v1356, 0
  %v1360 = vadd.f32 %v1354, %v1358
  %v1361 = vmax.f32 %v1360, 0.0
  %v1362 = vld [vmem:[%s10] sm:$0x1]
  %v1364 = vperm.slane %v1362, 0
  %v1366 = vmul.f32 %v1361, %v1364
  %vm1367 = vcmask 261120
  %v1368 = vsel %vm1367, %v1366, 0.0
  %1369 = vadd.xlane.f32.xlu0 %v1368
  %v1370 = vpop.xlane.xlu0 %1369
  %v1371 = vld [vmem:[#allocation10] sm:$0x1]
  %v1373 = vperm.slane %v1371, 0
  %v1375 = vadd.f32 %v1370, %v1373
  %v1376 = vxor.u32 %v1375, 2147483648
  %v1377 = vmul.f32 %v1376, 1.442695
  %v1378 = vpow.pop %v1377
  %v1379 = vadd.f32 %v1378, 1.0
  %v1380 = vrcp.pop %v1379
  %v1381 = vmul.f32 %v1379, %v1380
  %v1382 = vsub.f32 1.0, %v1381
  %v1383 = vmul.f32 %v1380, %v1382
  %v1384 = vadd.f32 %v1380, %v1383
  %vm1385 = vweird.f32 %v1379
  %vm1386 = vweird.f32 %v1380
  %vm1387 = vmor %vm1385, %vm1386
  %v1388 = vsel %vm1387, %v1380, %v1384
  %v1389 = vand.u32 2147483647, %v1379
  %vm1390 = vcmp.eq.f32.partialorder %v1389, 8.507059e+37
  %v1391 = vand.u32 %v1379, 2147483648
  %v1392 = vor.u32 1.1754944e-38, %v1391
  %v1393 = vsel %vm1390, %v1392, %v1388
  %v1394 = vmul.f32 1.0, %v1393
  %vm1395 = vcmask 7168
  %1396 = vst.msk [vmem:[%s12] sm:$0xff] %vm1395, %v1394
  // Predicated region
  $region666: #{tpu_custom_call.1} parent=0 // pred_check
    _
  $region667: #{tpu_custom_call.1} parent=0 // pred_check_branch
    %1398 = sbr.rel (0) target = $region669
  $region668: #{tpu_custom_call.1} parent=0 // pred_region
    _
  $region669: #{tpu_custom_call.1} parent=0 // pred_fallthru
    _
  // Predicated region
  $region670: #{tpu_custom_call.1} parent=0 // pred_check
    _
  $region671: #{tpu_custom_call.1} parent=0 // pred_check_branch
    %1400 = sbr.rel (0) target = $region673
  $region672: #{tpu_custom_call.1} parent=0 // pred_region
    _
  $region673: #{tpu_custom_call.1} parent=0 // pred_fallthru
    _
  %1401 = vsyncmov [#allocation4]
  %s1402 = vpop.sfrf %1401
  %p1403 = scmp.eq.s32.totalorder %s1402, 0
  %p1404 = pneg %p1403
  %1406 = shalt.err (%p1404)
  %s1407 = scalar_lea.sflag [#allocation4], 1
  %1408 = vsyncmov %s1407
  %s1409 = vpop.sfrf %1408
  %p1410 = scmp.eq.s32.totalorder %s1409, 0
  %p1411 = pneg %p1410
  %1413 = shalt.err (%p1411)

</llo_original>
